<compile_context>
chip_gen: v5e
topology: v5e:2x2
jax: 0.10.0
libtpu: 0.0.40
codegen_flags: <defaults>
</compile_context>

<pallas_src>
import functools

import jax
import jax.numpy as jnp
from jax import lax
from jax.experimental import pallas as pl
from jax.experimental.pallas import tpu as pltpu


# --------------------------------------------------------------------------
# Static geometry implied by the PyTorch module (view(-1, 64*32) pins L=138):
#   conv1: L1 = floor(138/2)+1 = 70 ; conv2: floor((70-8)/2)+1 = 32
#   dc1:   (32-1)*2+8 = 70          ; dc2:  (70-1)*2+2 = 140
# --------------------------------------------------------------------------
L_IN = 138     # encoder input length
L1 = 70        # conv1 / ConvTranspose1 output length
L1H = 35       # half of L1 (even / odd phase length)
L2 = 32        # conv2 output length == decoder "view" length
C1 = 32        # conv1 / dc1 / BatchNorm channels
C2 = 64        # conv2 / decoder "view" channels
K1 = 4         # conv1 kernel size
K2 = 8         # conv2 kernel size
KT1 = 8        # dc1 kernel size
PAD1 = 3       # zero positions on each side of the dc1 input (= KT1//2 - 1)
QPH = 36       # length of each mod-4 phase of the padded (144) encoder input
L_OUT = 140    # dc2 output length
BN_EPS = 1e-5


# --------------------------------------------------------------------------
# The fused kernel: encoder -> reparameterize -> decoder, all in VMEM.
# Activation row layout is (phase, position, batch) for the convs so that every
# conv / transposed-conv tap window is a contiguous slice; the FC middle uses
# (batch, features) built by lane-concatenation of those position blocks.
# --------------------------------------------------------------------------
def _vae_kernel(
    x4_ref, eps_ref,
    w1_ref, b1_ref, g1_ref, be1_ref,          # conv1 + BN1
    w2_ref, b2_ref,                           # conv2
    wf1_ref, bf1_ref,                         # encoder fc1
    wab_ref, bab_ref,                         # fused fc1a / fc1b
    wd1_ref, bd1_ref,                         # decoder fc1
    wd2_ref, bd2_ref,                         # decoder fc2
    wt1_ref, bt1_ref, g2_ref, be2_ref,        # dc1 + BN2
    wt2_ref, bt2_ref,                         # dc2
    zz_ref, dec_ref,                          # outputs
    *, B, z_dim,
):
    f32 = jnp.float32
    bf16 = jnp.bfloat16
    inv_n = 1.0 / float(B * L1)               # both BNs normalize over B*70

    x4 = x4_ref[...]                          # (4*QPH*B, nF) bf16, rows (q, m, b)

    # ---------------- Encoder: conv1 as ONE (140, 16) x (16, 32) GEMM ------
    # Output rows (r, j, b) with position p = 2j + r (phase-major for conv2).
    # Padded input position 4j + 2r + k lives in mod-4 phase q=(2r+k)%4 at
    # index j + (2r+k)//4, so every tap is a contiguous 70-row slice of x4.
    r_blocks = []
    for r in range(2):
        taps = []
        for k in range(K1):
            q = (2 * r + k) % 4
            off = (2 * r + k) // 4
            start = (q * QPH + off) * B
            taps.append(x4[start:start + L1H * B, :])          # (70, nF)
        r_blocks.append(jnp.concatenate(taps, axis=1))          # (70, nF*K1)
    patches = jnp.concatenate(r_blocks, axis=0)                  # (140, nF*K1)

    h1 = jnp.dot(patches, w1_ref[...], preferred_element_type=f32)
    h1 = jnp.maximum(h1 + b1_ref[...], 0.0)                      # (140, 32)
    mu1 = jnp.sum(h1, axis=0, keepdims=True) * inv_n
    xc1 = h1 - mu1
    var1 = jnp.sum(xc1 * xc1, axis=0, keepdims=True) * inv_n
    h1 = (g1_ref[...] * xc1 * lax.rsqrt(var1 + BN_EPS)
          + be1_ref[...]).astype(bf16)                           # bf16 for reuse

    # ---------------- Encoder: conv2 as ONE (64, 256) x (256, 64) GEMM -----
    # Output rows (l, b); tap jj reads h1 phase jj%2 at offset jj//2.
    cols = []
    for jj in range(K2):
        start = ((jj % 2) * L1H + jj // 2) * B
        cols.append(h1[start:start + L2 * B, :])                 # (64, 32)
    slab2 = jnp.concatenate(cols, axis=1)                         # (64, 256)
    h2 = jnp.dot(slab2, w2_ref[...], preferred_element_type=f32)
    h2 = jnp.maximum(h2 + b2_ref[...], 0.0).astype(bf16)          # (64, 64)

    # ---------------- Encoder: fc1 as ONE (B, 2048) x (2048, 128) GEMM -----
    # Lane-concat the 32 per-position (B, 64) blocks -> (B, L2*C2).
    enc_in = jnp.concatenate(
        [h2[l * B:(l + 1) * B, :] for l in range(L2)], axis=1)    # (B, 2048)
    enc = jnp.dot(enc_in, wf1_ref[...], preferred_element_type=f32)
    enc = jnp.maximum(enc + bf1_ref[...], 0.0)                    # (B, 128)

    # ---------------- fc1a / fc1b fused into one (128, 2*z_dim) GEMM -------
    zz = jnp.dot(enc.astype(bf16), wab_ref[...],
                 preferred_element_type=f32) + bab_ref[...]       # (B, 2z)
    zz_ref[...] = zz
    z_loc = zz[:, :z_dim]
    z_scale = zz[:, z_dim:]

    # ---------------- Reparameterize (exp on the EUP, fused epilogue) ------
    z = z_loc + jnp.exp(0.5 * z_scale) * eps_ref[...]             # (B, z_dim)

    # ---------------- Decoder: fc1 + ReLU -----------------------------------
    dh = jnp.dot(z.astype(bf16), wd1_ref[...], preferred_element_type=f32)
    dh = jnp.maximum(dh + bd1_ref[...], 0.0)                      # (B, 128)

    # ---------------- Decoder: fc2 as ONE (B, 128) x (128, 2048) GEMM ------
    # Weight columns pre-permuted to (l, c2) order so each position block is a
    # contiguous 64-lane slice.
    d2 = jnp.dot(dh.astype(bf16), wd2_ref[...], preferred_element_type=f32)
    d2 = jnp.maximum(d2 + bd2_ref[...], 0.0).astype(bf16)         # (B, 2048)

    # Zero-padded ConvTranspose1 input, rows (pp, b), lanes c2; only the
    # 2*PAD1*B pad rows are zero-filled.
    zpad = jnp.zeros((PAD1 * B, C2), bf16)
    zp = jnp.concatenate(
        [zpad] + [d2[:, l * C2:(l + 1) * C2] for l in range(L2)] + [zpad],
        axis=0)                                                   # (76, 64)

    # ---------------- Decoder: dc1 as ONE (70, 256) x (256, 64) GEMM -------
    # 4 shifted windows packed along lanes; even/odd tap weights concatenated
    # along N, so a single GEMM produces both output phases.
    taps1 = []
    for u in range(KT1 // 2):
        start = (PAD1 - u) * B
        taps1.append(zp[start:start + L1H * B, :])                # (70, 64)
    slab3 = jnp.concatenate(taps1, axis=1)                         # (70, 256)
    t1 = jnp.dot(slab3, wt1_ref[...], preferred_element_type=f32)
    t1 = jnp.maximum(t1 + bt1_ref[...], 0.0)                       # (70, 64)

    # ---------------- BatchNorm1d(32) over both phases (ReLU first) --------
    s = jnp.sum(t1, axis=0, keepdims=True)                         # (1, 64)
    mu2 = (s[:, :C1] + s[:, C1:]) * inv_n                          # (1, 32)
    ce = t1[:, :C1] - mu2
    co_ = t1[:, C1:] - mu2
    var2 = (jnp.sum(ce * ce, axis=0, keepdims=True) +
            jnp.sum(co_ * co_, axis=0, keepdims=True)) * inv_n
    inv2 = lax.rsqrt(var2 + BN_EPS)
    he = (g2_ref[...] * ce * inv2 + be2_ref[...]).astype(bf16)     # q = 2m
    ho = (g2_ref[...] * co_ * inv2 + be2_ref[...]).astype(bf16)    # q = 2m+1

    # ---------------- Decoder: dc2 as ONE (140, 32) x (32, 2*nF) GEMM ------
    # stride == kernel -> no overlap; rows = (parity, m, b), lanes = (k, co).
    lhs = jnp.concatenate([he, ho], axis=0)                        # (140, 32)
    dec_ref[...] = (jnp.dot(lhs, wt2_ref[...], preferred_element_type=f32)
                    + bt2_ref[...])                                # (140, 2*nF)


# --------------------------------------------------------------------------
# One-time parameter repacking (OUTSIDE the per-call jitted path): permute the
# PyTorch-layout weights into the kernel's slab layouts and cast GEMM operands
# to bf16 (biases / BN params stay f32).
# --------------------------------------------------------------------------
def pack_params(params):
    f32, bf16 = jnp.float32, jnp.bfloat16
    nF = params["e_conv1_w"].shape[1]
    p = {}
    # conv1: patch lanes = (k, ci)
    p["w1"] = params["e_conv1_w"].transpose(2, 1, 0).reshape(K1 * nF, C1).astype(bf16)
    p["b1"] = params["e_conv1_b"].reshape(1, C1).astype(f32)
    p["g1"] = params["e_bn_g"].reshape(1, C1).astype(f32)
    p["be1"] = params["e_bn_b"].reshape(1, C1).astype(f32)
    # conv2: slab lanes = (jj, ci)
    p["w2"] = params["e_conv2_w"].transpose(2, 1, 0).reshape(K2 * C1, C2).astype(bf16)
    p["b2"] = params["e_conv2_b"].reshape(1, C2).astype(f32)
    # fc1: torch flatten index c*32+l  ->  kernel lane l*64+c
    p["wf1"] = (params["e_fc1_w"].reshape(C2, L2, 128)
                .transpose(1, 0, 2).reshape(L2 * C2, 128).astype(bf16))
    p["bf1"] = params["e_fc1_b"].reshape(1, 128).astype(f32)
    p["wab"] = jnp.concatenate([params["e_fc1a_w"], params["e_fc1b_w"]],
                               axis=1).astype(bf16)                       # (128, 2z)
    p["bab"] = jnp.concatenate([params["e_fc1a_b"], params["e_fc1b_b"]]
                               ).reshape(1, -1).astype(f32)
    p["wd1"] = params["d_fc1_w"].astype(bf16)                             # (z, 128)
    p["bd1"] = params["d_fc1_b"].reshape(1, 128).astype(f32)
    # decoder fc2: torch view index c2*32+l -> kernel lane l*64+c2
    p["wd2"] = (params["d_fc2_w"].reshape(128, C2, L2)
                .transpose(0, 2, 1).reshape(128, L2 * C2).astype(bf16))
    p["bd2"] = (params["d_fc2_b"].reshape(C2, L2)
                .transpose(1, 0).reshape(1, L2 * C2).astype(f32))
    # dc1: slab lanes = (u, cin); N = [even outs | odd outs]
    w = params["d_dc1_w"]                                                 # (64, 32, 8)
    even = w[:, :, 0::2].transpose(2, 0, 1).reshape((KT1 // 2) * C2, C1)
    odd = w[:, :, 1::2].transpose(2, 0, 1).reshape((KT1 // 2) * C2, C1)
    p["wt1"] = jnp.concatenate([even, odd], axis=1).astype(bf16)          # (256, 64)
    bt1 = params["d_dc1_b"]
    p["bt1"] = jnp.concatenate([bt1, bt1]).reshape(1, 2 * C1).astype(f32)
    p["g2"] = params["d_bn_g"].reshape(1, C1).astype(f32)
    p["be2"] = params["d_bn_b"].reshape(1, C1).astype(f32)
    # dc2: output lanes = (k, co)
    p["wt2"] = params["d_dc2_w"].transpose(0, 2, 1).reshape(C1, 2 * nF).astype(bf16)
    bt2 = params["d_dc2_b"]
    p["bt2"] = jnp.concatenate([bt2, bt2]).reshape(1, 2 * nF).astype(f32)
    return p


# --------------------------------------------------------------------------
# Forward pass: one fused pallas_call plus two thin layout-plumbing transposes.
# `packed` must come from pack_params() (done once at setup).
# --------------------------------------------------------------------------
def vae_forward(packed, x, eps_key):
    B, nF, L = x.shape
    assert L == L_IN, "view(-1, 64*32) in the reference module requires L == 138"
    z_dim = packed["wab"].shape[1] // 2

    epsilon = jax.random.normal(eps_key, (B, z_dim), jnp.float32)

    # Mod-4 phase-split padded input slab, rows (q, m, b): padded position
    # 4m + q.  (pad 2 left per the module, 4 right so each phase has 36 slots;
    # the two extra slots are never read by any conv window.)
    xpad = jnp.pad(x.astype(jnp.float32), ((0, 0), (0, 0), (2, 4)))   # (B, nF, 144)
    x4 = (xpad.reshape(B, nF, QPH, 4)
          .transpose(3, 2, 0, 1)
          .reshape(4 * QPH * B, nF)
          .astype(jnp.bfloat16))

    out_shapes = (
        jax.ShapeDtypeStruct((B, 2 * z_dim), jnp.float32),        # [z_loc | z_scale]
        jax.ShapeDtypeStruct((2 * L1H * B, 2 * nF), jnp.float32),  # dc2 phases
    )
    kernel = functools.partial(_vae_kernel, B=B, z_dim=z_dim)
    zz, dec = pl.pallas_call(
        kernel,
        out_shape=out_shapes,
        compiler_params=pltpu.CompilerParams(
            vmem_limit_bytes=16 * 1024 * 1024),
    )(
        x4, epsilon,
        packed["w1"], packed["b1"], packed["g1"], packed["be1"],
        packed["w2"], packed["b2"],
        packed["wf1"], packed["bf1"],
        packed["wab"], packed["bab"],
        packed["wd1"], packed["bd1"],
        packed["wd2"], packed["bd2"],
        packed["wt1"], packed["bt1"], packed["g2"], packed["be2"],
        packed["wt2"], packed["bt2"],
    )

    z_loc = zz[:, :z_dim]
    z_scale = zz[:, z_dim:]
    # dec[parity*70 + m*B + b, k*nF + co] -> decoded[b, co, 4m + 2*parity + k]
    decoded = (dec.reshape(2, L1H, B, 2, nF)
               .transpose(2, 4, 1, 0, 3)
               .reshape(B, nF, L_OUT))
    return z_loc, z_scale, decoded


# --------------------------------------------------------------------------
# Deterministic parameter init (same shapes/layout conventions as the PyTorch
# module: Conv1d (out,in,k), ConvTranspose1d (in,out,k), Linear as (in,out)).
# --------------------------------------------------------------------------
def init_params(key, nFeatures, z_dim):
    keys = jax.random.split(key, 20)
    n = lambda k, shp, s=0.05: (jax.random.normal(k, shp, jnp.float32) * s)
    return {
        # Encoder
        "e_conv1_w": n(keys[0], (32, nFeatures, 4)),
        "e_conv1_b": n(keys[1], (32,)),
        "e_bn_g": jnp.ones((32,), jnp.float32),
        "e_bn_b": jnp.zeros((32,), jnp.float32),
        "e_conv2_w": n(keys[2], (64, 32, 8)),
        "e_conv2_b": n(keys[3], (64,)),
        "e_fc1_w": n(keys[4], (64 * 32, 128)),
        "e_fc1_b": n(keys[5], (128,)),
        "e_fc1a_w": n(keys[6], (128, z_dim)),
        "e_fc1a_b": n(keys[7], (z_dim,)),
        "e_fc1b_w": n(keys[8], (128, z_dim)),
        "e_fc1b_b": n(keys[9], (z_dim,)),
        # Decoder
        "d_fc1_w": n(keys[10], (z_dim, 128)),
        "d_fc1_b": n(keys[11], (128,)),
        "d_fc2_w": n(keys[12], (128, 64 * 32)),
        "d_fc2_b": n(keys[13], (64 * 32,)),
        "d_dc1_w": n(keys[14], (64, 32, 8)),     # ConvTranspose1d: (Cin, Cout, K)
        "d_dc1_b": n(keys[15], (32,)),
        "d_bn_g": jnp.ones((32,), jnp.float32),
        "d_bn_b": jnp.zeros((32,), jnp.float32),
        "d_dc2_w": n(keys[16], (32, nFeatures, 2)),
        "d_dc2_b": n(keys[17], (nFeatures,)),
    }


if __name__ == "__main__":
    B, nFeatures, L, z_dim = 2, 4, 138, 8

    root = jax.random.PRNGKey(0)
    k_param, k_x, k_eps = jax.random.split(root, 3)
    params = init_params(k_param, nFeatures, z_dim)
    x = jax.random.normal(k_x, (B, nFeatures, L), jnp.float32)

    # Repack weights ONCE at setup time (hoisted out of the per-call path).
    packed = pack_params(params)
    jax.block_until_ready(packed)

    fwd = jax.jit(vae_forward)
    z_loc, z_scale, decoded = fwd(packed, x, k_eps)
    jax.block_until_ready((z_loc, z_scale, decoded))

    assert z_loc.shape == (B, z_dim)
    assert z_scale.shape == (B, z_dim)
    assert decoded.shape == (B, nFeatures, L_OUT)    # (32-1)*2+8=70 ; (70-1)*2+2=140
    assert bool(jnp.all(jnp.isfinite(decoded)))
    assert bool(jnp.all(jnp.isfinite(z_loc))) and bool(jnp.all(jnp.isfinite(z_scale)))
    print("KERNEL_OK")
</pallas_src>

<mosaic_0001>
module attributes {stable_mosaic.version = 11 : i64} {
  func.func @_vae_kernel(%arg0: memref<288x4xbf16, #tpu.memory_space<vmem>>, %arg1: memref<2x8xf32, #tpu.memory_space<vmem>>, %arg2: memref<16x32xbf16, #tpu.memory_space<vmem>>, %arg3: memref<1x32xf32, #tpu.memory_space<vmem>>, %arg4: memref<1x32xf32, #tpu.memory_space<vmem>>, %arg5: memref<1x32xf32, #tpu.memory_space<vmem>>, %arg6: memref<256x64xbf16, #tpu.memory_space<vmem>>, %arg7: memref<1x64xf32, #tpu.memory_space<vmem>>, %arg8: memref<2048x128xbf16, #tpu.memory_space<vmem>>, %arg9: memref<1x128xf32, #tpu.memory_space<vmem>>, %arg10: memref<128x16xbf16, #tpu.memory_space<vmem>>, %arg11: memref<1x16xf32, #tpu.memory_space<vmem>>, %arg12: memref<8x128xbf16, #tpu.memory_space<vmem>>, %arg13: memref<1x128xf32, #tpu.memory_space<vmem>>, %arg14: memref<128x2048xbf16, #tpu.memory_space<vmem>>, %arg15: memref<1x2048xf32, #tpu.memory_space<vmem>>, %arg16: memref<256x64xbf16, #tpu.memory_space<vmem>>, %arg17: memref<1x64xf32, #tpu.memory_space<vmem>>, %arg18: memref<1x32xf32, #tpu.memory_space<vmem>>, %arg19: memref<1x32xf32, #tpu.memory_space<vmem>>, %arg20: memref<32x8xbf16, #tpu.memory_space<vmem>>, %arg21: memref<1x8xf32, #tpu.memory_space<vmem>>, %arg22: memref<2x16xf32, #tpu.memory_space<vmem>>, %arg23: memref<140x8xf32, #tpu.memory_space<vmem>>) attributes {dimension_semantics = [], scalar_prefetch = 0 : i64, scratch_operands = 0 : i64, tpu.core_type = #tpu.core_type<tc>} {
    %c0 = arith.constant 0 : index
    %c0_0 = arith.constant 0 : index
    %0 = vector.load %arg0[%c0, %c0_0] : memref<288x4xbf16, #tpu.memory_space<vmem>>, vector<288x4xbf16>
    %1 = vector.extract_strided_slice %0 {offsets = [0, 0], sizes = [70, 4], strides = [1, 1]} : vector<288x4xbf16> to vector<70x4xbf16>
    %2 = vector.extract_strided_slice %0 {offsets = [72, 0], sizes = [70, 4], strides = [1, 1]} : vector<288x4xbf16> to vector<70x4xbf16>
    %3 = vector.extract_strided_slice %0 {offsets = [144, 0], sizes = [70, 4], strides = [1, 1]} : vector<288x4xbf16> to vector<70x4xbf16>
    %4 = vector.extract_strided_slice %0 {offsets = [216, 0], sizes = [70, 4], strides = [1, 1]} : vector<288x4xbf16> to vector<70x4xbf16>
    %5 = tpu.concatenate %1, %2, %3, %4 in 1 : vector<70x4xbf16>, vector<70x4xbf16>, vector<70x4xbf16>, vector<70x4xbf16> -> vector<70x16xbf16>
    %6 = vector.extract_strided_slice %0 {offsets = [144, 0], sizes = [70, 4], strides = [1, 1]} : vector<288x4xbf16> to vector<70x4xbf16>
    %7 = vector.extract_strided_slice %0 {offsets = [216, 0], sizes = [70, 4], strides = [1, 1]} : vector<288x4xbf16> to vector<70x4xbf16>
    %8 = vector.extract_strided_slice %0 {offsets = [2, 0], sizes = [70, 4], strides = [1, 1]} : vector<288x4xbf16> to vector<70x4xbf16>
    %9 = vector.extract_strided_slice %0 {offsets = [74, 0], sizes = [70, 4], strides = [1, 1]} : vector<288x4xbf16> to vector<70x4xbf16>
    %10 = tpu.concatenate %6, %7, %8, %9 in 1 : vector<70x4xbf16>, vector<70x4xbf16>, vector<70x4xbf16>, vector<70x4xbf16> -> vector<70x16xbf16>
    %11 = tpu.concatenate %5, %10 in 0 : vector<70x16xbf16>, vector<70x16xbf16> -> vector<140x16xbf16>
    %c0_1 = arith.constant 0 : index
    %c0_2 = arith.constant 0 : index
    %12 = vector.load %arg2[%c0_1, %c0_2] : memref<16x32xbf16, #tpu.memory_space<vmem>>, vector<16x32xbf16>
    %cst = arith.constant dense<0.000000e+00> : vector<140x32xf32>
    %13 = tpu.matmul %11, %12, %cst {dimension_numbers = #tpu.dot_dimension_numbers<[1], [0], [0], [1], [0, 0, 1, 1], [], []>} : vector<140x16xbf16>, vector<16x32xbf16>, vector<140x32xf32> -> vector<140x32xf32>
    %c0_3 = arith.constant 0 : index
    %c0_4 = arith.constant 0 : index
    %14 = vector.load %arg3[%c0_3, %c0_4] : memref<1x32xf32, #tpu.memory_space<vmem>>, vector<1x32xf32>
    %15 = vector.broadcast %14 : vector<1x32xf32> to vector<140x32xf32>
    %16 = arith.addf %13, %15 : vector<140x32xf32>
    %cst_5 = arith.constant 0.000000e+00 : f32
    %17 = vector.broadcast %cst_5 : f32 to vector<140x32xf32>
    %18 = arith.maximumf %16, %17 : vector<140x32xf32>
    %cst_6 = arith.constant dense<0.000000e+00> : vector<32xf32>
    %19 = vector.multi_reduction <add>, %18, %cst_6 [0] : vector<140x32xf32> to vector<32xf32>
    %20 = vector.shape_cast %19 : vector<32xf32> to vector<1x32xf32>
    %cst_7 = arith.constant 0.00714285718 : f32
    %21 = vector.broadcast %cst_7 : f32 to vector<1x32xf32>
    %22 = arith.mulf %20, %21 : vector<1x32xf32>
    %23 = vector.broadcast %22 : vector<1x32xf32> to vector<140x32xf32>
    %24 = arith.subf %18, %23 : vector<140x32xf32>
    %25 = arith.mulf %24, %24 : vector<140x32xf32>
    %cst_8 = arith.constant dense<0.000000e+00> : vector<32xf32>
    %26 = vector.multi_reduction <add>, %25, %cst_8 [0] : vector<140x32xf32> to vector<32xf32>
    %27 = vector.shape_cast %26 : vector<32xf32> to vector<1x32xf32>
    %cst_9 = arith.constant 0.00714285718 : f32
    %28 = vector.broadcast %cst_9 : f32 to vector<1x32xf32>
    %29 = arith.mulf %27, %28 : vector<1x32xf32>
    %c0_10 = arith.constant 0 : index
    %c0_11 = arith.constant 0 : index
    %30 = vector.load %arg4[%c0_10, %c0_11] : memref<1x32xf32, #tpu.memory_space<vmem>>, vector<1x32xf32>
    %31 = vector.broadcast %30 : vector<1x32xf32> to vector<140x32xf32>
    %32 = arith.mulf %31, %24 : vector<140x32xf32>
    %cst_12 = arith.constant 9.99999974E-6 : f32
    %33 = vector.broadcast %cst_12 : f32 to vector<1x32xf32>
    %34 = arith.addf %29, %33 : vector<1x32xf32>
    %35 = math.rsqrt %34 : vector<1x32xf32>
    %36 = vector.broadcast %35 : vector<1x32xf32> to vector<140x32xf32>
    %37 = arith.mulf %32, %36 : vector<140x32xf32>
    %c0_13 = arith.constant 0 : index
    %c0_14 = arith.constant 0 : index
    %38 = vector.load %arg5[%c0_13, %c0_14] : memref<1x32xf32, #tpu.memory_space<vmem>>, vector<1x32xf32>
    %39 = vector.broadcast %38 : vector<1x32xf32> to vector<140x32xf32>
    %40 = arith.addf %37, %39 : vector<140x32xf32>
    %41 = arith.truncf %40 : vector<140x32xf32> to vector<140x32xbf16>
    %42 = vector.extract_strided_slice %41 {offsets = [0, 0], sizes = [64, 32], strides = [1, 1]} : vector<140x32xbf16> to vector<64x32xbf16>
    %43 = vector.extract_strided_slice %41 {offsets = [70, 0], sizes = [64, 32], strides = [1, 1]} : vector<140x32xbf16> to vector<64x32xbf16>
    %44 = vector.extract_strided_slice %41 {offsets = [2, 0], sizes = [64, 32], strides = [1, 1]} : vector<140x32xbf16> to vector<64x32xbf16>
    %45 = vector.extract_strided_slice %41 {offsets = [72, 0], sizes = [64, 32], strides = [1, 1]} : vector<140x32xbf16> to vector<64x32xbf16>
    %46 = vector.extract_strided_slice %41 {offsets = [4, 0], sizes = [64, 32], strides = [1, 1]} : vector<140x32xbf16> to vector<64x32xbf16>
    %47 = vector.extract_strided_slice %41 {offsets = [74, 0], sizes = [64, 32], strides = [1, 1]} : vector<140x32xbf16> to vector<64x32xbf16>
    %48 = vector.extract_strided_slice %41 {offsets = [6, 0], sizes = [64, 32], strides = [1, 1]} : vector<140x32xbf16> to vector<64x32xbf16>
    %49 = vector.extract_strided_slice %41 {offsets = [76, 0], sizes = [64, 32], strides = [1, 1]} : vector<140x32xbf16> to vector<64x32xbf16>
    %50 = tpu.concatenate %42, %43, %44, %45, %46, %47, %48, %49 in 1 : vector<64x32xbf16>, vector<64x32xbf16>, vector<64x32xbf16>, vector<64x32xbf16>, vector<64x32xbf16>, vector<64x32xbf16>, vector<64x32xbf16>, vector<64x32xbf16> -> vector<64x256xbf16>
    %c0_15 = arith.constant 0 : index
    %c0_16 = arith.constant 0 : index
    %51 = vector.load %arg6[%c0_15, %c0_16] : memref<256x64xbf16, #tpu.memory_space<vmem>>, vector<256x64xbf16>
    %cst_17 = arith.constant dense<0.000000e+00> : vector<64x64xf32>
    %52 = tpu.matmul %50, %51, %cst_17 {dimension_numbers = #tpu.dot_dimension_numbers<[1], [0], [0], [1], [0, 0, 1, 1], [], []>} : vector<64x256xbf16>, vector<256x64xbf16>, vector<64x64xf32> -> vector<64x64xf32>
    %c0_18 = arith.constant 0 : index
    %c0_19 = arith.constant 0 : index
    %53 = vector.load %arg7[%c0_18, %c0_19] : memref<1x64xf32, #tpu.memory_space<vmem>>, vector<1x64xf32>
    %54 = vector.broadcast %53 : vector<1x64xf32> to vector<64x64xf32>
    %55 = arith.addf %52, %54 : vector<64x64xf32>
    %cst_20 = arith.constant 0.000000e+00 : f32
    %56 = vector.broadcast %cst_20 : f32 to vector<64x64xf32>
    %57 = arith.maximumf %55, %56 : vector<64x64xf32>
    %58 = arith.truncf %57 : vector<64x64xf32> to vector<64x64xbf16>
    %59 = vector.extract_strided_slice %58 {offsets = [0, 0], sizes = [2, 64], strides = [1, 1]} : vector<64x64xbf16> to vector<2x64xbf16>
    %60 = vector.extract_strided_slice %58 {offsets = [2, 0], sizes = [2, 64], strides = [1, 1]} : vector<64x64xbf16> to vector<2x64xbf16>
    %61 = vector.extract_strided_slice %58 {offsets = [4, 0], sizes = [2, 64], strides = [1, 1]} : vector<64x64xbf16> to vector<2x64xbf16>
    %62 = vector.extract_strided_slice %58 {offsets = [6, 0], sizes = [2, 64], strides = [1, 1]} : vector<64x64xbf16> to vector<2x64xbf16>
    %63 = vector.extract_strided_slice %58 {offsets = [8, 0], sizes = [2, 64], strides = [1, 1]} : vector<64x64xbf16> to vector<2x64xbf16>
    %64 = vector.extract_strided_slice %58 {offsets = [10, 0], sizes = [2, 64], strides = [1, 1]} : vector<64x64xbf16> to vector<2x64xbf16>
    %65 = vector.extract_strided_slice %58 {offsets = [12, 0], sizes = [2, 64], strides = [1, 1]} : vector<64x64xbf16> to vector<2x64xbf16>
    %66 = vector.extract_strided_slice %58 {offsets = [14, 0], sizes = [2, 64], strides = [1, 1]} : vector<64x64xbf16> to vector<2x64xbf16>
    %67 = vector.extract_strided_slice %58 {offsets = [16, 0], sizes = [2, 64], strides = [1, 1]} : vector<64x64xbf16> to vector<2x64xbf16>
    %68 = vector.extract_strided_slice %58 {offsets = [18, 0], sizes = [2, 64], strides = [1, 1]} : vector<64x64xbf16> to vector<2x64xbf16>
    %69 = vector.extract_strided_slice %58 {offsets = [20, 0], sizes = [2, 64], strides = [1, 1]} : vector<64x64xbf16> to vector<2x64xbf16>
    %70 = vector.extract_strided_slice %58 {offsets = [22, 0], sizes = [2, 64], strides = [1, 1]} : vector<64x64xbf16> to vector<2x64xbf16>
    %71 = vector.extract_strided_slice %58 {offsets = [24, 0], sizes = [2, 64], strides = [1, 1]} : vector<64x64xbf16> to vector<2x64xbf16>
    %72 = vector.extract_strided_slice %58 {offsets = [26, 0], sizes = [2, 64], strides = [1, 1]} : vector<64x64xbf16> to vector<2x64xbf16>
    %73 = vector.extract_strided_slice %58 {offsets = [28, 0], sizes = [2, 64], strides = [1, 1]} : vector<64x64xbf16> to vector<2x64xbf16>
    %74 = vector.extract_strided_slice %58 {offsets = [30, 0], sizes = [2, 64], strides = [1, 1]} : vector<64x64xbf16> to vector<2x64xbf16>
    %75 = vector.extract_strided_slice %58 {offsets = [32, 0], sizes = [2, 64], strides = [1, 1]} : vector<64x64xbf16> to vector<2x64xbf16>
    %76 = vector.extract_strided_slice %58 {offsets = [34, 0], sizes = [2, 64], strides = [1, 1]} : vector<64x64xbf16> to vector<2x64xbf16>
    %77 = vector.extract_strided_slice %58 {offsets = [36, 0], sizes = [2, 64], strides = [1, 1]} : vector<64x64xbf16> to vector<2x64xbf16>
    %78 = vector.extract_strided_slice %58 {offsets = [38, 0], sizes = [2, 64], strides = [1, 1]} : vector<64x64xbf16> to vector<2x64xbf16>
    %79 = vector.extract_strided_slice %58 {offsets = [40, 0], sizes = [2, 64], strides = [1, 1]} : vector<64x64xbf16> to vector<2x64xbf16>
    %80 = vector.extract_strided_slice %58 {offsets = [42, 0], sizes = [2, 64], strides = [1, 1]} : vector<64x64xbf16> to vector<2x64xbf16>
    %81 = vector.extract_strided_slice %58 {offsets = [44, 0], sizes = [2, 64], strides = [1, 1]} : vector<64x64xbf16> to vector<2x64xbf16>
    %82 = vector.extract_strided_slice %58 {offsets = [46, 0], sizes = [2, 64], strides = [1, 1]} : vector<64x64xbf16> to vector<2x64xbf16>
    %83 = vector.extract_strided_slice %58 {offsets = [48, 0], sizes = [2, 64], strides = [1, 1]} : vector<64x64xbf16> to vector<2x64xbf16>
    %84 = vector.extract_strided_slice %58 {offsets = [50, 0], sizes = [2, 64], strides = [1, 1]} : vector<64x64xbf16> to vector<2x64xbf16>
    %85 = vector.extract_strided_slice %58 {offsets = [52, 0], sizes = [2, 64], strides = [1, 1]} : vector<64x64xbf16> to vector<2x64xbf16>
    %86 = vector.extract_strided_slice %58 {offsets = [54, 0], sizes = [2, 64], strides = [1, 1]} : vector<64x64xbf16> to vector<2x64xbf16>
    %87 = vector.extract_strided_slice %58 {offsets = [56, 0], sizes = [2, 64], strides = [1, 1]} : vector<64x64xbf16> to vector<2x64xbf16>
    %88 = vector.extract_strided_slice %58 {offsets = [58, 0], sizes = [2, 64], strides = [1, 1]} : vector<64x64xbf16> to vector<2x64xbf16>
    %89 = vector.extract_strided_slice %58 {offsets = [60, 0], sizes = [2, 64], strides = [1, 1]} : vector<64x64xbf16> to vector<2x64xbf16>
    %90 = vector.extract_strided_slice %58 {offsets = [62, 0], sizes = [2, 64], strides = [1, 1]} : vector<64x64xbf16> to vector<2x64xbf16>
    %91 = tpu.concatenate %59, %60, %61, %62, %63, %64, %65, %66, %67, %68, %69, %70, %71, %72, %73, %74 in 1 : vector<2x64xbf16>, vector<2x64xbf16>, vector<2x64xbf16>, vector<2x64xbf16>, vector<2x64xbf16>, vector<2x64xbf16>, vector<2x64xbf16>, vector<2x64xbf16>, vector<2x64xbf16>, vector<2x64xbf16>, vector<2x64xbf16>, vector<2x64xbf16>, vector<2x64xbf16>, vector<2x64xbf16>, vector<2x64xbf16>, vector<2x64xbf16> -> vector<2x1024xbf16>
    %92 = tpu.concatenate %75, %76, %77, %78, %79, %80, %81, %82, %83, %84, %85, %86, %87, %88, %89, %90 in 1 : vector<2x64xbf16>, vector<2x64xbf16>, vector<2x64xbf16>, vector<2x64xbf16>, vector<2x64xbf16>, vector<2x64xbf16>, vector<2x64xbf16>, vector<2x64xbf16>, vector<2x64xbf16>, vector<2x64xbf16>, vector<2x64xbf16>, vector<2x64xbf16>, vector<2x64xbf16>, vector<2x64xbf16>, vector<2x64xbf16>, vector<2x64xbf16> -> vector<2x1024xbf16>
    %93 = tpu.concatenate %91, %92 in 1 : vector<2x1024xbf16>, vector<2x1024xbf16> -> vector<2x2048xbf16>
    %c0_21 = arith.constant 0 : index
    %c0_22 = arith.constant 0 : index
    %94 = vector.load %arg8[%c0_21, %c0_22] : memref<2048x128xbf16, #tpu.memory_space<vmem>>, vector<2048x128xbf16>
    %cst_23 = arith.constant dense<0.000000e+00> : vector<2x128xf32>
    %95 = tpu.matmul %93, %94, %cst_23 {dimension_numbers = #tpu.dot_dimension_numbers<[1], [0], [0], [1], [0, 0, 1, 1], [], []>} : vector<2x2048xbf16>, vector<2048x128xbf16>, vector<2x128xf32> -> vector<2x128xf32>
    %c0_24 = arith.constant 0 : index
    %c0_25 = arith.constant 0 : index
    %96 = vector.load %arg9[%c0_24, %c0_25] : memref<1x128xf32, #tpu.memory_space<vmem>>, vector<1x128xf32>
    %97 = vector.broadcast %96 : vector<1x128xf32> to vector<2x128xf32>
    %98 = arith.addf %95, %97 : vector<2x128xf32>
    %cst_26 = arith.constant 0.000000e+00 : f32
    %99 = vector.broadcast %cst_26 : f32 to vector<2x128xf32>
    %100 = arith.maximumf %98, %99 : vector<2x128xf32>
    %101 = arith.truncf %100 : vector<2x128xf32> to vector<2x128xbf16>
    %c0_27 = arith.constant 0 : index
    %c0_28 = arith.constant 0 : index
    %102 = vector.load %arg10[%c0_27, %c0_28] : memref<128x16xbf16, #tpu.memory_space<vmem>>, vector<128x16xbf16>
    %cst_29 = arith.constant dense<0.000000e+00> : vector<2x16xf32>
    %103 = tpu.matmul %101, %102, %cst_29 {dimension_numbers = #tpu.dot_dimension_numbers<[1], [0], [0], [1], [0, 0, 1, 1], [], []>} : vector<2x128xbf16>, vector<128x16xbf16>, vector<2x16xf32> -> vector<2x16xf32>
    %c0_30 = arith.constant 0 : index
    %c0_31 = arith.constant 0 : index
    %104 = vector.load %arg11[%c0_30, %c0_31] : memref<1x16xf32, #tpu.memory_space<vmem>>, vector<1x16xf32>
    %105 = vector.broadcast %104 : vector<1x16xf32> to vector<2x16xf32>
    %106 = arith.addf %103, %105 : vector<2x16xf32>
    %c0_32 = arith.constant 0 : index
    %c0_33 = arith.constant 0 : index
    %107 = vector.load %arg22[%c0_32, %c0_33] : memref<2x16xf32, #tpu.memory_space<vmem>>, vector<2x16xf32>
    tpu.vector_store %arg22[%c0_32, %c0_33], %106 {strides = array<i32>} : memref<2x16xf32, #tpu.memory_space<vmem>>, vector<2x16xf32>,
    %108 = vector.extract_strided_slice %106 {offsets = [0, 0], sizes = [2, 8], strides = [1, 1]} : vector<2x16xf32> to vector<2x8xf32>
    %109 = vector.extract_strided_slice %106 {offsets = [0, 8], sizes = [2, 8], strides = [1, 1]} : vector<2x16xf32> to vector<2x8xf32>
    %cst_34 = arith.constant 5.000000e-01 : f32
    %110 = vector.broadcast %cst_34 : f32 to vector<2x8xf32>
    %111 = arith.mulf %110, %109 : vector<2x8xf32>
    %112 = math.exp %111 : vector<2x8xf32>
    %c0_35 = arith.constant 0 : index
    %c0_36 = arith.constant 0 : index
    %113 = vector.load %arg1[%c0_35, %c0_36] : memref<2x8xf32, #tpu.memory_space<vmem>>, vector<2x8xf32>
    %114 = arith.mulf %112, %113 : vector<2x8xf32>
    %115 = arith.addf %108, %114 : vector<2x8xf32>
    %116 = arith.truncf %115 : vector<2x8xf32> to vector<2x8xbf16>
    %c0_37 = arith.constant 0 : index
    %c0_38 = arith.constant 0 : index
    %117 = vector.load %arg12[%c0_37, %c0_38] : memref<8x128xbf16, #tpu.memory_space<vmem>>, vector<8x128xbf16>
    %cst_39 = arith.constant dense<0.000000e+00> : vector<2x128xf32>
    %118 = tpu.matmul %116, %117, %cst_39 {dimension_numbers = #tpu.dot_dimension_numbers<[1], [0], [0], [1], [0, 0, 1, 1], [], []>} : vector<2x8xbf16>, vector<8x128xbf16>, vector<2x128xf32> -> vector<2x128xf32>
    %c0_40 = arith.constant 0 : index
    %c0_41 = arith.constant 0 : index
    %119 = vector.load %arg13[%c0_40, %c0_41] : memref<1x128xf32, #tpu.memory_space<vmem>>, vector<1x128xf32>
    %120 = vector.broadcast %119 : vector<1x128xf32> to vector<2x128xf32>
    %121 = arith.addf %118, %120 : vector<2x128xf32>
    %cst_42 = arith.constant 0.000000e+00 : f32
    %122 = vector.broadcast %cst_42 : f32 to vector<2x128xf32>
    %123 = arith.maximumf %121, %122 : vector<2x128xf32>
    %124 = arith.truncf %123 : vector<2x128xf32> to vector<2x128xbf16>
    %c0_43 = arith.constant 0 : index
    %c0_44 = arith.constant 0 : index
    %125 = vector.load %arg14[%c0_43, %c0_44] : memref<128x2048xbf16, #tpu.memory_space<vmem>>, vector<128x2048xbf16>
    %cst_45 = arith.constant dense<0.000000e+00> : vector<2x2048xf32>
    %126 = tpu.matmul %124, %125, %cst_45 {dimension_numbers = #tpu.dot_dimension_numbers<[1], [0], [0], [1], [0, 0, 1, 1], [], []>} : vector<2x128xbf16>, vector<128x2048xbf16>, vector<2x2048xf32> -> vector<2x2048xf32>
    %c0_46 = arith.constant 0 : index
    %c0_47 = arith.constant 0 : index
    %127 = vector.load %arg15[%c0_46, %c0_47] : memref<1x2048xf32, #tpu.memory_space<vmem>>, vector<1x2048xf32>
    %128 = vector.broadcast %127 : vector<1x2048xf32> to vector<2x2048xf32>
    %129 = arith.addf %126, %128 : vector<2x2048xf32>
    %cst_48 = arith.constant 0.000000e+00 : f32
    %130 = vector.broadcast %cst_48 : f32 to vector<2x2048xf32>
    %131 = arith.maximumf %129, %130 : vector<2x2048xf32>
    %132 = arith.truncf %131 : vector<2x2048xf32> to vector<2x2048xbf16>
    %cst_49 = arith.constant 0.000000e+00 : bf16
    %133 = vector.broadcast %cst_49 : bf16 to vector<6x64xbf16>
    %134 = vector.extract_strided_slice %132 {offsets = [0, 0], sizes = [2, 64], strides = [1, 1]} : vector<2x2048xbf16> to vector<2x64xbf16>
    %135 = vector.extract_strided_slice %132 {offsets = [0, 64], sizes = [2, 64], strides = [1, 1]} : vector<2x2048xbf16> to vector<2x64xbf16>
    %136 = vector.extract_strided_slice %132 {offsets = [0, 128], sizes = [2, 64], strides = [1, 1]} : vector<2x2048xbf16> to vector<2x64xbf16>
    %137 = vector.extract_strided_slice %132 {offsets = [0, 192], sizes = [2, 64], strides = [1, 1]} : vector<2x2048xbf16> to vector<2x64xbf16>
    %138 = vector.extract_strided_slice %132 {offsets = [0, 256], sizes = [2, 64], strides = [1, 1]} : vector<2x2048xbf16> to vector<2x64xbf16>
    %139 = vector.extract_strided_slice %132 {offsets = [0, 320], sizes = [2, 64], strides = [1, 1]} : vector<2x2048xbf16> to vector<2x64xbf16>
    %140 = vector.extract_strided_slice %132 {offsets = [0, 384], sizes = [2, 64], strides = [1, 1]} : vector<2x2048xbf16> to vector<2x64xbf16>
    %141 = vector.extract_strided_slice %132 {offsets = [0, 448], sizes = [2, 64], strides = [1, 1]} : vector<2x2048xbf16> to vector<2x64xbf16>
    %142 = vector.extract_strided_slice %132 {offsets = [0, 512], sizes = [2, 64], strides = [1, 1]} : vector<2x2048xbf16> to vector<2x64xbf16>
    %143 = vector.extract_strided_slice %132 {offsets = [0, 576], sizes = [2, 64], strides = [1, 1]} : vector<2x2048xbf16> to vector<2x64xbf16>
    %144 = vector.extract_strided_slice %132 {offsets = [0, 640], sizes = [2, 64], strides = [1, 1]} : vector<2x2048xbf16> to vector<2x64xbf16>
    %145 = vector.extract_strided_slice %132 {offsets = [0, 704], sizes = [2, 64], strides = [1, 1]} : vector<2x2048xbf16> to vector<2x64xbf16>
    %146 = vector.extract_strided_slice %132 {offsets = [0, 768], sizes = [2, 64], strides = [1, 1]} : vector<2x2048xbf16> to vector<2x64xbf16>
    %147 = vector.extract_strided_slice %132 {offsets = [0, 832], sizes = [2, 64], strides = [1, 1]} : vector<2x2048xbf16> to vector<2x64xbf16>
    %148 = vector.extract_strided_slice %132 {offsets = [0, 896], sizes = [2, 64], strides = [1, 1]} : vector<2x2048xbf16> to vector<2x64xbf16>
    %149 = vector.extract_strided_slice %132 {offsets = [0, 960], sizes = [2, 64], strides = [1, 1]} : vector<2x2048xbf16> to vector<2x64xbf16>
    %150 = vector.extract_strided_slice %132 {offsets = [0, 1024], sizes = [2, 64], strides = [1, 1]} : vector<2x2048xbf16> to vector<2x64xbf16>
    %151 = vector.extract_strided_slice %132 {offsets = [0, 1088], sizes = [2, 64], strides = [1, 1]} : vector<2x2048xbf16> to vector<2x64xbf16>
    %152 = vector.extract_strided_slice %132 {offsets = [0, 1152], sizes = [2, 64], strides = [1, 1]} : vector<2x2048xbf16> to vector<2x64xbf16>
    %153 = vector.extract_strided_slice %132 {offsets = [0, 1216], sizes = [2, 64], strides = [1, 1]} : vector<2x2048xbf16> to vector<2x64xbf16>
    %154 = vector.extract_strided_slice %132 {offsets = [0, 1280], sizes = [2, 64], strides = [1, 1]} : vector<2x2048xbf16> to vector<2x64xbf16>
    %155 = vector.extract_strided_slice %132 {offsets = [0, 1344], sizes = [2, 64], strides = [1, 1]} : vector<2x2048xbf16> to vector<2x64xbf16>
    %156 = vector.extract_strided_slice %132 {offsets = [0, 1408], sizes = [2, 64], strides = [1, 1]} : vector<2x2048xbf16> to vector<2x64xbf16>
    %157 = vector.extract_strided_slice %132 {offsets = [0, 1472], sizes = [2, 64], strides = [1, 1]} : vector<2x2048xbf16> to vector<2x64xbf16>
    %158 = vector.extract_strided_slice %132 {offsets = [0, 1536], sizes = [2, 64], strides = [1, 1]} : vector<2x2048xbf16> to vector<2x64xbf16>
    %159 = vector.extract_strided_slice %132 {offsets = [0, 1600], sizes = [2, 64], strides = [1, 1]} : vector<2x2048xbf16> to vector<2x64xbf16>
    %160 = vector.extract_strided_slice %132 {offsets = [0, 1664], sizes = [2, 64], strides = [1, 1]} : vector<2x2048xbf16> to vector<2x64xbf16>
    %161 = vector.extract_strided_slice %132 {offsets = [0, 1728], sizes = [2, 64], strides = [1, 1]} : vector<2x2048xbf16> to vector<2x64xbf16>
    %162 = vector.extract_strided_slice %132 {offsets = [0, 1792], sizes = [2, 64], strides = [1, 1]} : vector<2x2048xbf16> to vector<2x64xbf16>
    %163 = vector.extract_strided_slice %132 {offsets = [0, 1856], sizes = [2, 64], strides = [1, 1]} : vector<2x2048xbf16> to vector<2x64xbf16>
    %164 = vector.extract_strided_slice %132 {offsets = [0, 1920], sizes = [2, 64], strides = [1, 1]} : vector<2x2048xbf16> to vector<2x64xbf16>
    %165 = vector.extract_strided_slice %132 {offsets = [0, 1984], sizes = [2, 64], strides = [1, 1]} : vector<2x2048xbf16> to vector<2x64xbf16>
    %166 = tpu.concatenate %133, %134, %135, %136, %137, %138, %139, %140, %141, %142, %143, %144, %145, %146, %147, %148 in 0 : vector<6x64xbf16>, vector<2x64xbf16>, vector<2x64xbf16>, vector<2x64xbf16>, vector<2x64xbf16>, vector<2x64xbf16>, vector<2x64xbf16>, vector<2x64xbf16>, vector<2x64xbf16>, vector<2x64xbf16>, vector<2x64xbf16>, vector<2x64xbf16>, vector<2x64xbf16>, vector<2x64xbf16>, vector<2x64xbf16>, vector<2x64xbf16> -> vector<36x64xbf16>
    %167 = tpu.concatenate %149, %150, %151, %152, %153, %154, %155, %156, %157, %158, %159, %160, %161, %162, %163, %164 in 0 : vector<2x64xbf16>, vector<2x64xbf16>, vector<2x64xbf16>, vector<2x64xbf16>, vector<2x64xbf16>, vector<2x64xbf16>, vector<2x64xbf16>, vector<2x64xbf16>, vector<2x64xbf16>, vector<2x64xbf16>, vector<2x64xbf16>, vector<2x64xbf16>, vector<2x64xbf16>, vector<2x64xbf16>, vector<2x64xbf16>, vector<2x64xbf16> -> vector<32x64xbf16>
    %168 = tpu.concatenate %165, %133 in 0 : vector<2x64xbf16>, vector<6x64xbf16> -> vector<8x64xbf16>
    %169 = tpu.concatenate %166, %167, %168 in 0 : vector<36x64xbf16>, vector<32x64xbf16>, vector<8x64xbf16> -> vector<76x64xbf16>
    %170 = vector.extract_strided_slice %169 {offsets = [6, 0], sizes = [70, 64], strides = [1, 1]} : vector<76x64xbf16> to vector<70x64xbf16>
    %171 = vector.extract_strided_slice %169 {offsets = [4, 0], sizes = [70, 64], strides = [1, 1]} : vector<76x64xbf16> to vector<70x64xbf16>
    %172 = vector.extract_strided_slice %169 {offsets = [2, 0], sizes = [70, 64], strides = [1, 1]} : vector<76x64xbf16> to vector<70x64xbf16>
    %173 = vector.extract_strided_slice %169 {offsets = [0, 0], sizes = [70, 64], strides = [1, 1]} : vector<76x64xbf16> to vector<70x64xbf16>
    %174 = tpu.concatenate %170, %171, %172, %173 in 1 : vector<70x64xbf16>, vector<70x64xbf16>, vector<70x64xbf16>, vector<70x64xbf16> -> vector<70x256xbf16>
    %c0_50 = arith.constant 0 : index
    %c0_51 = arith.constant 0 : index
    %175 = vector.load %arg16[%c0_50, %c0_51] : memref<256x64xbf16, #tpu.memory_space<vmem>>, vector<256x64xbf16>
    %cst_52 = arith.constant dense<0.000000e+00> : vector<70x64xf32>
    %176 = tpu.matmul %174, %175, %cst_52 {dimension_numbers = #tpu.dot_dimension_numbers<[1], [0], [0], [1], [0, 0, 1, 1], [], []>} : vector<70x256xbf16>, vector<256x64xbf16>, vector<70x64xf32> -> vector<70x64xf32>
    %c0_53 = arith.constant 0 : index
    %c0_54 = arith.constant 0 : index
    %177 = vector.load %arg17[%c0_53, %c0_54] : memref<1x64xf32, #tpu.memory_space<vmem>>, vector<1x64xf32>
    %178 = vector.broadcast %177 : vector<1x64xf32> to vector<70x64xf32>
    %179 = arith.addf %176, %178 : vector<70x64xf32>
    %cst_55 = arith.constant 0.000000e+00 : f32
    %180 = vector.broadcast %cst_55 : f32 to vector<70x64xf32>
    %181 = arith.maximumf %179, %180 : vector<70x64xf32>
    %cst_56 = arith.constant dense<0.000000e+00> : vector<64xf32>
    %182 = vector.multi_reduction <add>, %181, %cst_56 [0] : vector<70x64xf32> to vector<64xf32>
    %183 = vector.shape_cast %182 : vector<64xf32> to vector<1x64xf32>
    %184 = vector.extract_strided_slice %183 {offsets = [0, 0], sizes = [1, 32], strides = [1, 1]} : vector<1x64xf32> to vector<1x32xf32>
    %185 = vector.extract_strided_slice %183 {offsets = [0, 32], sizes = [1, 32], strides = [1, 1]} : vector<1x64xf32> to vector<1x32xf32>
    %186 = arith.addf %184, %185 : vector<1x32xf32>
    %cst_57 = arith.constant 0.00714285718 : f32
    %187 = vector.broadcast %cst_57 : f32 to vector<1x32xf32>
    %188 = arith.mulf %186, %187 : vector<1x32xf32>
    %189 = vector.extract_strided_slice %181 {offsets = [0, 0], sizes = [70, 32], strides = [1, 1]} : vector<70x64xf32> to vector<70x32xf32>
    %190 = vector.broadcast %188 : vector<1x32xf32> to vector<70x32xf32>
    %191 = arith.subf %189, %190 : vector<70x32xf32>
    %192 = vector.extract_strided_slice %181 {offsets = [0, 32], sizes = [70, 32], strides = [1, 1]} : vector<70x64xf32> to vector<70x32xf32>
    %193 = vector.broadcast %188 : vector<1x32xf32> to vector<70x32xf32>
    %194 = arith.subf %192, %193 : vector<70x32xf32>
    %195 = arith.mulf %191, %191 : vector<70x32xf32>
    %cst_58 = arith.constant dense<0.000000e+00> : vector<32xf32>
    %196 = vector.multi_reduction <add>, %195, %cst_58 [0] : vector<70x32xf32> to vector<32xf32>
    %197 = vector.shape_cast %196 : vector<32xf32> to vector<1x32xf32>
    %198 = arith.mulf %194, %194 : vector<70x32xf32>
    %cst_59 = arith.constant dense<0.000000e+00> : vector<32xf32>
    %199 = vector.multi_reduction <add>, %198, %cst_59 [0] : vector<70x32xf32> to vector<32xf32>
    %200 = vector.shape_cast %199 : vector<32xf32> to vector<1x32xf32>
    %201 = arith.addf %197, %200 : vector<1x32xf32>
    %cst_60 = arith.constant 0.00714285718 : f32
    %202 = vector.broadcast %cst_60 : f32 to vector<1x32xf32>
    %203 = arith.mulf %201, %202 : vector<1x32xf32>
    %cst_61 = arith.constant 9.99999974E-6 : f32
    %204 = vector.broadcast %cst_61 : f32 to vector<1x32xf32>
    %205 = arith.addf %203, %204 : vector<1x32xf32>
    %206 = math.rsqrt %205 : vector<1x32xf32>
    %c0_62 = arith.constant 0 : index
    %c0_63 = arith.constant 0 : index
    %207 = vector.load %arg18[%c0_62, %c0_63] : memref<1x32xf32, #tpu.memory_space<vmem>>, vector<1x32xf32>
    %208 = vector.broadcast %207 : vector<1x32xf32> to vector<70x32xf32>
    %209 = arith.mulf %208, %191 : vector<70x32xf32>
    %210 = vector.broadcast %206 : vector<1x32xf32> to vector<70x32xf32>
    %211 = arith.mulf %209, %210 : vector<70x32xf32>
    %c0_64 = arith.constant 0 : index
    %c0_65 = arith.constant 0 : index
    %212 = vector.load %arg19[%c0_64, %c0_65] : memref<1x32xf32, #tpu.memory_space<vmem>>, vector<1x32xf32>
    %213 = vector.broadcast %212 : vector<1x32xf32> to vector<70x32xf32>
    %214 = arith.addf %211, %213 : vector<70x32xf32>
    %215 = arith.truncf %214 : vector<70x32xf32> to vector<70x32xbf16>
    %c0_66 = arith.constant 0 : index
    %c0_67 = arith.constant 0 : index
    %216 = vector.load %arg18[%c0_66, %c0_67] : memref<1x32xf32, #tpu.memory_space<vmem>>, vector<1x32xf32>
    %217 = vector.broadcast %216 : vector<1x32xf32> to vector<70x32xf32>
    %218 = arith.mulf %217, %194 : vector<70x32xf32>
    %219 = vector.broadcast %206 : vector<1x32xf32> to vector<70x32xf32>
    %220 = arith.mulf %218, %219 : vector<70x32xf32>
    %c0_68 = arith.constant 0 : index
    %c0_69 = arith.constant 0 : index
    %221 = vector.load %arg19[%c0_68, %c0_69] : memref<1x32xf32, #tpu.memory_space<vmem>>, vector<1x32xf32>
    %222 = vector.broadcast %221 : vector<1x32xf32> to vector<70x32xf32>
    %223 = arith.addf %220, %222 : vector<70x32xf32>
    %224 = arith.truncf %223 : vector<70x32xf32> to vector<70x32xbf16>
    %225 = tpu.concatenate %215, %224 in 0 : vector<70x32xbf16>, vector<70x32xbf16> -> vector<140x32xbf16>
    %c0_70 = arith.constant 0 : index
    %c0_71 = arith.constant 0 : index
    %226 = vector.load %arg20[%c0_70, %c0_71] : memref<32x8xbf16, #tpu.memory_space<vmem>>, vector<32x8xbf16>
    %cst_72 = arith.constant dense<0.000000e+00> : vector<140x8xf32>
    %227 = tpu.matmul %225, %226, %cst_72 {dimension_numbers = #tpu.dot_dimension_numbers<[1], [0], [0], [1], [0, 0, 1, 1], [], []>} : vector<140x32xbf16>, vector<32x8xbf16>, vector<140x8xf32> -> vector<140x8xf32>
    %c0_73 = arith.constant 0 : index
    %c0_74 = arith.constant 0 : index
    %228 = vector.load %arg21[%c0_73, %c0_74] : memref<1x8xf32, #tpu.memory_space<vmem>>, vector<1x8xf32>
    %229 = vector.broadcast %228 : vector<1x8xf32> to vector<140x8xf32>
    %230 = arith.addf %227, %229 : vector<140x8xf32>
    %c0_75 = arith.constant 0 : index
    %c0_76 = arith.constant 0 : index
    %231 = vector.load %arg23[%c0_75, %c0_76] : memref<140x8xf32, #tpu.memory_space<vmem>>, vector<140x8xf32>
    tpu.vector_store %arg23[%c0_75, %c0_76], %230 {strides = array<i32>} : memref<140x8xf32, #tpu.memory_space<vmem>>, vector<140x8xf32>,
    return
  }
}

</mosaic_0001>

<llo_original>
// kernel: vae_forward.1
$region0: #{vae_forward.1}
  #allocation0 [shape = 'u32[]', space=smem, size = 0x4, offset = 0x4, fixed_abs, tag = 'smem constant byte address 0x4 - core index']
  #allocation1 [shape = 'u32[72,128]{1,0:T(1,128)}', space=vmem, size = 0x9000, scoped, tag = 'internal scratch']
  %s0 = inlined_call_operand.vmem [shape: bf16[288,4], index: 0, kind: input, shape index: {}]
  %s1 = inlined_call_operand.vmem [shape: f32[2,8], index: 1, kind: input, shape index: {}]
  %s2 = inlined_call_operand.vmem [shape: bf16[16,32], index: 2, kind: input, shape index: {}]
  %s3 = inlined_call_operand.vmem [shape: f32[1,32], index: 3, kind: input, shape index: {}]
  %s4 = inlined_call_operand.vmem [shape: f32[1,32], index: 4, kind: input, shape index: {}]
  %s5 = inlined_call_operand.vmem [shape: f32[1,32], index: 5, kind: input, shape index: {}]
  %s6 = inlined_call_operand.vmem [shape: bf16[256,64], index: 6, kind: input, shape index: {}]
  %s7 = inlined_call_operand.vmem [shape: f32[1,64], index: 7, kind: input, shape index: {}]
  %s8 = inlined_call_operand.hbm [shape: bf16[2048,128], index: 8, kind: input, shape index: {}]
  %s9 = inlined_call_operand.vmem [shape: f32[1,128], index: 9, kind: input, shape index: {}]
  %s10 = inlined_call_operand.vmem [shape: bf16[128,16], index: 10, kind: input, shape index: {}]
  %s11 = inlined_call_operand.vmem [shape: f32[1,16], index: 11, kind: input, shape index: {}]
  %s12 = inlined_call_operand.vmem [shape: bf16[8,128], index: 12, kind: input, shape index: {}]
  %s13 = inlined_call_operand.vmem [shape: f32[1,128], index: 13, kind: input, shape index: {}]
  %s14 = inlined_call_operand.hbm [shape: bf16[128,2048], index: 14, kind: input, shape index: {}]
  %s15 = inlined_call_operand.vmem [shape: f32[1,2048], index: 15, kind: input, shape index: {}]
  %s16 = inlined_call_operand.vmem [shape: bf16[256,64], index: 16, kind: input, shape index: {}]
  %s17 = inlined_call_operand.vmem [shape: f32[1,64], index: 17, kind: input, shape index: {}]
  %s18 = inlined_call_operand.vmem [shape: f32[1,32], index: 18, kind: input, shape index: {}]
  %s19 = inlined_call_operand.vmem [shape: f32[1,32], index: 19, kind: input, shape index: {}]
  %s20 = inlined_call_operand.vmem [shape: bf16[32,8], index: 20, kind: input, shape index: {}]
  %s21 = inlined_call_operand.vmem [shape: f32[1,8], index: 21, kind: input, shape index: {}]
  %s22 = inlined_call_operand.vmem [shape: f32[2,16], index: 22, kind: output, shape index: {0}]
  %s23 = inlined_call_operand.vmem [shape: f32[140,8], index: 23, kind: output, shape index: {1}]
  %24 = xla_tuple %s22, %s23
  %s25 = sld [smem:[#allocation0]]
  $region114: #{vae_forward.1} parent=0
    _
  %s27 = ssub.s32 1, %s25
  %s28 = scalar_select 0, %s27, %s25
  $region1: #{vae_forward.1} parent=0
    #allocation2 [shape = 'u8[524288]{0}', space=vmem, size = 0x80000, scoped, tag = 'input window, operand 8, single buffered']
    #allocation3 [shape = 's32[1]{0}', space=sflag, size = 0x4, scoped, tag = 'scoped memory for vae_forward.1']
    #allocation4 [shape = 'u8[524288]{0}', space=vmem, size = 0x80000, scoped, tag = 'input window, operand 14, single buffered']
    #allocation5 [shape = 's32[1]{0}', space=sflag, size = 0x4, scoped, tag = 'scoped memory for vae_forward.1']
    %29 = vsyncpa [#allocation3], 0
    %30 = vsyncpa [#allocation5], 0
    // Predicated region
    $region2: #{vae_forward.1} parent=1 // pred_check
      _
    $region3: #{vae_forward.1} parent=1 // pred_check_branch
      %32 = sbr.rel (0) target = $region5
    $region4: #{vae_forward.1} parent=1 // pred_region
      _
    $region5: #{vae_forward.1} parent=1 // pred_fallthru
      _
    // Predicated region
    $region6: #{vae_forward.1} parent=1 // pred_check
      _
    $region7: #{vae_forward.1} parent=1 // pred_check_branch
      %34 = sbr.rel (0) target = $region9
    $region8: #{vae_forward.1} parent=1 // pred_region
      _
    $region9: #{vae_forward.1} parent=1 // pred_fallthru
      _
    // Predicated region
    $region10: #{vae_forward.1} parent=1 // pred_check
      _
    $region11: #{vae_forward.1} parent=1 // pred_check_branch
      %36 = sbr.rel (0) target = $region13
    $region12: #{vae_forward.1} parent=1 // pred_region
      _
    $region13: #{vae_forward.1} parent=1 // pred_fallthru
      _
    // Predicated region
    $region14: #{vae_forward.1} parent=1 // pred_check
      _
    $region15: #{vae_forward.1} parent=1 // pred_check_branch
      %38 = sbr.rel (0) target = $region17
    $region16: #{vae_forward.1} parent=1 // pred_region
      _
    $region17: #{vae_forward.1} parent=1 // pred_fallthru
      _
    // Predicated region
    $region18: #{vae_forward.1} parent=1 // pred_check
      _
    $region19: #{vae_forward.1} parent=1 // pred_check_branch
      %40 = sbr.rel (0) target = $region21
    $region20: #{vae_forward.1} parent=1 // pred_region
      _
    $region21: #{vae_forward.1} parent=1 // pred_fallthru
      _
    // Predicated region
    $region22: #{vae_forward.1} parent=1 // pred_check
      _
    $region23: #{vae_forward.1} parent=1 // pred_check_branch
      %42 = sbr.rel (0) target = $region25
    $region24: #{vae_forward.1} parent=1 // pred_region
      _
    $region25: #{vae_forward.1} parent=1 // pred_fallthru
      _
    // Predicated region
    $region26: #{vae_forward.1} parent=1 // pred_check
      _
    $region27: #{vae_forward.1} parent=1 // pred_check_branch
      %44 = sbr.rel (0) target = $region29
    $region28: #{vae_forward.1} parent=1 // pred_region
      _
    $region29: #{vae_forward.1} parent=1 // pred_fallthru
      _
    // Predicated region
    $region30: #{vae_forward.1} parent=1 // pred_check
      _
    $region31: #{vae_forward.1} parent=1 // pred_check_branch
      %46 = sbr.rel (0) target = $region33
    $region32: #{vae_forward.1} parent=1 // pred_region
      _
    $region33: #{vae_forward.1} parent=1 // pred_fallthru
      _
    // Predicated region
    $region34: #{vae_forward.1} parent=1 // pred_check
      _
    $region35: #{vae_forward.1} parent=1 // pred_check_branch
      %48 = sbr.rel (0) target = $region37
    $region36: #{vae_forward.1} parent=1 // pred_region
      %50 = vsyncadd [#allocation3], 0
      %s51 = sshll.u32 %s8, 4
      %s52 = int_to_ptr.hbm [resolvable:$true] %s51
      %s53 = sshll.u32 [#allocation2], 4
      %s54 = int_to_ptr.vmem [resolvable:$true] %s53
      %59 = dma.hbm_to_vmem [thread:$0]  %s52, 16384, %s54, [#allocation3], 64, 64, 4
    $region37: #{vae_forward.1} parent=1 // pred_fallthru
      _
    // Predicated region
    $region38: #{vae_forward.1} parent=1 // pred_check
      _
    $region39: #{vae_forward.1} parent=1 // pred_check_branch
      %61 = sbr.rel (0) target = $region41
    $region40: #{vae_forward.1} parent=1 // pred_region
      _
    $region41: #{vae_forward.1} parent=1 // pred_fallthru
      _
    // Predicated region
    $region42: #{vae_forward.1} parent=1 // pred_check
      _
    $region43: #{vae_forward.1} parent=1 // pred_check_branch
      %63 = sbr.rel (0) target = $region45
    $region44: #{vae_forward.1} parent=1 // pred_region
      _
    $region45: #{vae_forward.1} parent=1 // pred_fallthru
      _
    // Predicated region
    $region46: #{vae_forward.1} parent=1 // pred_check
      _
    $region47: #{vae_forward.1} parent=1 // pred_check_branch
      %65 = sbr.rel (0) target = $region49
    $region48: #{vae_forward.1} parent=1 // pred_region
      _
    $region49: #{vae_forward.1} parent=1 // pred_fallthru
      _
    // Predicated region
    $region50: #{vae_forward.1} parent=1 // pred_check
      _
    $region51: #{vae_forward.1} parent=1 // pred_check_branch
      %67 = sbr.rel (0) target = $region53
    $region52: #{vae_forward.1} parent=1 // pred_region
      _
    $region53: #{vae_forward.1} parent=1 // pred_fallthru
      _
    // Predicated region
    $region54: #{vae_forward.1} parent=1 // pred_check
      _
    $region55: #{vae_forward.1} parent=1 // pred_check_branch
      %69 = sbr.rel (0) target = $region57
    $region56: #{vae_forward.1} parent=1 // pred_region
      _
    $region57: #{vae_forward.1} parent=1 // pred_fallthru
      _
    // Predicated region
    $region58: #{vae_forward.1} parent=1 // pred_check
      _
    $region59: #{vae_forward.1} parent=1 // pred_check_branch
      %71 = sbr.rel (0) target = $region61
    $region60: #{vae_forward.1} parent=1 // pred_region
      %73 = vsyncadd [#allocation5], 0
      %s74 = sshll.u32 %s14, 4
      %s75 = int_to_ptr.hbm [resolvable:$true] %s74
      %s76 = sshll.u32 [#allocation4], 4
      %s77 = int_to_ptr.vmem [resolvable:$true] %s76
      %82 = dma.hbm_to_vmem [thread:$0]  %s75, 16384, %s77, [#allocation5], 1024, 1024, 64
    $region61: #{vae_forward.1} parent=1 // pred_fallthru
      _
    // Predicated region
    $region62: #{vae_forward.1} parent=1 // pred_check
      _
    $region63: #{vae_forward.1} parent=1 // pred_check_branch
      %84 = sbr.rel (0) target = $region65
    $region64: #{vae_forward.1} parent=1 // pred_region
      _
    $region65: #{vae_forward.1} parent=1 // pred_fallthru
      _
    // Predicated region
    $region66: #{vae_forward.1} parent=1 // pred_check
      _
    $region67: #{vae_forward.1} parent=1 // pred_check_branch
      %86 = sbr.rel (0) target = $region69
    $region68: #{vae_forward.1} parent=1 // pred_region
      _
    $region69: #{vae_forward.1} parent=1 // pred_fallthru
      _
    // Predicated region
    $region70: #{vae_forward.1} parent=1 // pred_check
      _
    $region71: #{vae_forward.1} parent=1 // pred_check_branch
      %88 = sbr.rel (0) target = $region73
    $region72: #{vae_forward.1} parent=1 // pred_region
      _
    $region73: #{vae_forward.1} parent=1 // pred_fallthru
      _
    // Predicated region
    $region74: #{vae_forward.1} parent=1 // pred_check
      _
    $region75: #{vae_forward.1} parent=1 // pred_check_branch
      %90 = sbr.rel (0) target = $region77
    $region76: #{vae_forward.1} parent=1 // pred_region
      _
    $region77: #{vae_forward.1} parent=1 // pred_fallthru
      _
    // Predicated region
    $region78: #{vae_forward.1} parent=1 // pred_check
      _
    $region79: #{vae_forward.1} parent=1 // pred_check_branch
      %92 = sbr.rel (0) target = $region81
    $region80: #{vae_forward.1} parent=1 // pred_region
      _
    $region81: #{vae_forward.1} parent=1 // pred_fallthru
      _
    // Predicated region
    $region82: #{vae_forward.1} parent=1 // pred_check
      _
    $region83: #{vae_forward.1} parent=1 // pred_check_branch
      %94 = sbr.rel (0) target = $region85
    $region84: #{vae_forward.1} parent=1 // pred_region
      _
    $region85: #{vae_forward.1} parent=1 // pred_fallthru
      _
    // Predicated region
    $region86: #{vae_forward.1} parent=1 // pred_check
      _
    $region87: #{vae_forward.1} parent=1 // pred_check_branch
      %96 = sbr.rel (0) target = $region89
    $region88: #{vae_forward.1} parent=1 // pred_region
      _
    $region89: #{vae_forward.1} parent=1 // pred_fallthru
      _
    // Predicated region
    $region90: #{vae_forward.1} parent=1 // pred_check
      _
    $region91: #{vae_forward.1} parent=1 // pred_check_branch
      %98 = sbr.rel (0) target = $region93
    $region92: #{vae_forward.1} parent=1 // pred_region
      %100 = dma.done [#allocation3], 16384
    $region93: #{vae_forward.1} parent=1 // pred_fallthru
      _
    // Predicated region
    $region94: #{vae_forward.1} parent=1 // pred_check
      _
    $region95: #{vae_forward.1} parent=1 // pred_check_branch
      %102 = sbr.rel (0) target = $region97
    $region96: #{vae_forward.1} parent=1 // pred_region
      %104 = dma.done [#allocation5], 16384
    $region97: #{vae_forward.1} parent=1 // pred_fallthru
      _
    %v106 = vld [vmem:[%s0] sm:$0xf]
    %v107 = vld [vmem:[%s0 + $0x4] sm:$0xf]
    %v108 = vld [vmem:[%s0 + $0x8] sm:$0xf]
    %v109 = vld [vmem:[%s0 + $0xc] sm:$0xf]
    %v110 = vld [vmem:[%s0 + $0x10] sm:$0xf]
    %v111 = vld [vmem:[%s0 + $0x14] sm:$0xf]
    %v112 = vld [vmem:[%s0 + $0x18] sm:$0xf]
    %v113 = vld [vmem:[%s0 + $0x1c] sm:$0xf]
    %v114 = vld [vmem:[%s0 + $0x20] sm:$0xf]
    %v115 = vld [vmem:[%s0 + $0x24] sm:$0xf]
    %v116 = vld [vmem:[%s0 + $0x28] sm:$0xf]
    %v117 = vld [vmem:[%s0 + $0x2c] sm:$0xf]
    %v118 = vld [vmem:[%s0 + $0x30] sm:$0xf]
    %v119 = vld [vmem:[%s0 + $0x34] sm:$0xf]
    %v120 = vld [vmem:[%s0 + $0x38] sm:$0xf]
    %v121 = vld [vmem:[%s0 + $0x3c] sm:$0xf]
    %v122 = vld [vmem:[%s0 + $0x40] sm:$0xf]
    %v123 = vld [vmem:[%s0 + $0x44] sm:$0xf]
    %v124 = vld [vmem:[%s0 + $0x48] sm:$0xf]
    %v125 = vld [vmem:[%s0 + $0x4c] sm:$0xf]
    %v126 = vld [vmem:[%s0 + $0x50] sm:$0xf]
    %v127 = vld [vmem:[%s0 + $0x54] sm:$0xf]
    %v128 = vld [vmem:[%s0 + $0x58] sm:$0xf]
    %v129 = vld [vmem:[%s0 + $0x5c] sm:$0xf]
    %v130 = vld [vmem:[%s0 + $0x60] sm:$0xf]
    %v131 = vld [vmem:[%s0 + $0x64] sm:$0xf]
    %v132 = vld [vmem:[%s0 + $0x68] sm:$0xf]
    %v133 = vld [vmem:[%s0 + $0x6c] sm:$0xf]
    %v134 = vld [vmem:[%s0 + $0x70] sm:$0xf]
    %v135 = vld [vmem:[%s0 + $0x74] sm:$0xf]
    %v136 = vld [vmem:[%s0 + $0x78] sm:$0xf]
    %v137 = vld [vmem:[%s0 + $0x7c] sm:$0xf]
    %v138 = vld [vmem:[%s0 + $0x80] sm:$0xf]
    %v139 = vld [vmem:[%s0 + $0x84] sm:$0xf]
    %v140 = vld [vmem:[%s0 + $0x88] sm:$0xf]
    %v141 = vld [vmem:[%s0 + $0x8c] sm:$0xf]
    %v151 = vunpack.c.l.b16 %v106
    %v152 = vunpack.c.l.b16 %v107
    %v153 = vunpack.c.l.b16 %v108
    %v154 = vunpack.c.l.b16 %v109
    %v155 = vunpack.c.l.b16 %v110
    %v156 = vunpack.c.l.b16 %v111
    %v157 = vunpack.c.l.b16 %v112
    %v158 = vunpack.c.l.b16 %v113
    %v159 = vunpack.c.l.b16 %v114
    %v160 = vpack.c.b16 %v152, %v151
    %v161 = vpack.c.b16 %v154, %v153
    %v162 = vpack.c.b16 %v156, %v155
    %v163 = vpack.c.b16 %v158, %v157
    %v164 = vpack.c.b16 %v159, %v159
    %v174 = vunpack.c.l.b16 %v115
    %v175 = vunpack.c.l.b16 %v116
    %v176 = vunpack.c.l.b16 %v117
    %v177 = vunpack.c.l.b16 %v118
    %v178 = vunpack.c.l.b16 %v119
    %v179 = vunpack.c.l.b16 %v120
    %v180 = vunpack.c.l.b16 %v121
    %v181 = vunpack.c.l.b16 %v122
    %v182 = vunpack.c.l.b16 %v123
    %v183 = vpack.c.b16 %v175, %v174
    %v184 = vpack.c.b16 %v177, %v176
    %v185 = vpack.c.b16 %v179, %v178
    %v186 = vpack.c.b16 %v181, %v180
    %v187 = vpack.c.b16 %v182, %v182
    %188 = vrot.lane.b32.xlu0 %v183, 4
    %v189 = vpop.permute.xlu0 %188
    %190 = vrot.lane.b32.xlu0 %v184, 4
    %v191 = vpop.permute.xlu0 %190
    %192 = vrot.lane.b32.xlu0 %v185, 4
    %v193 = vpop.permute.xlu0 %192
    %194 = vrot.lane.b32.xlu0 %v186, 4
    %v195 = vpop.permute.xlu0 %194
    %196 = vrot.lane.b32.xlu0 %v187, 4
    %v197 = vpop.permute.xlu0 %196
    %v207 = vunpack.c.l.b16 %v124
    %v208 = vunpack.c.l.b16 %v125
    %v209 = vunpack.c.l.b16 %v126
    %v210 = vunpack.c.l.b16 %v127
    %v211 = vunpack.c.l.b16 %v128
    %v212 = vunpack.c.l.b16 %v129
    %v213 = vunpack.c.l.b16 %v130
    %v214 = vunpack.c.l.b16 %v131
    %v215 = vunpack.c.l.b16 %v132
    %v216 = vpack.c.b16 %v208, %v207
    %v217 = vpack.c.b16 %v210, %v209
    %v218 = vpack.c.b16 %v212, %v211
    %v219 = vpack.c.b16 %v214, %v213
    %v220 = vpack.c.b16 %v215, %v215
    %221 = vrot.lane.b32.xlu0 %v216, 8
    %v222 = vpop.permute.xlu0 %221
    %223 = vrot.lane.b32.xlu0 %v217, 8
    %v224 = vpop.permute.xlu0 %223
    %225 = vrot.lane.b32.xlu0 %v218, 8
    %v226 = vpop.permute.xlu0 %225
    %227 = vrot.lane.b32.xlu0 %v219, 8
    %v228 = vpop.permute.xlu0 %227
    %229 = vrot.lane.b32.xlu0 %v220, 8
    %v230 = vpop.permute.xlu0 %229
    %v240 = vunpack.c.l.b16 %v133
    %v241 = vunpack.c.l.b16 %v134
    %v242 = vunpack.c.l.b16 %v135
    %v243 = vunpack.c.l.b16 %v136
    %v244 = vunpack.c.l.b16 %v137
    %v245 = vunpack.c.l.b16 %v138
    %v246 = vunpack.c.l.b16 %v139
    %v247 = vunpack.c.l.b16 %v140
    %v248 = vunpack.c.l.b16 %v141
    %v249 = vpack.c.b16 %v241, %v240
    %v250 = vpack.c.b16 %v243, %v242
    %v251 = vpack.c.b16 %v245, %v244
    %v252 = vpack.c.b16 %v247, %v246
    %v253 = vpack.c.b16 %v248, %v248
    %254 = vrot.lane.b32.xlu0 %v249, 12
    %v255 = vpop.permute.xlu0 %254
    %256 = vrot.lane.b32.xlu0 %v250, 12
    %v257 = vpop.permute.xlu0 %256
    %258 = vrot.lane.b32.xlu0 %v251, 12
    %v259 = vpop.permute.xlu0 %258
    %260 = vrot.lane.b32.xlu0 %v252, 12
    %v261 = vpop.permute.xlu0 %260
    %262 = vrot.lane.b32.xlu0 %v253, 12
    %v263 = vpop.permute.xlu0 %262
    %vm264 = vcmask 31744
    %v267 = vsel %vm264, %v160, %v189
    %v270 = vsel %vm264, %v161, %v191
    %v273 = vsel %vm264, %v162, %v193
    %v276 = vsel %vm264, %v163, %v195
    %v279 = vsel %vm264, %v164, %v197
    %vm280 = vcmask 64512
    %v282 = vsel %vm280, %v267, %v222
    %v284 = vsel %vm280, %v270, %v224
    %v286 = vsel %vm280, %v273, %v226
    %v288 = vsel %vm280, %v276, %v228
    %v290 = vsel %vm280, %v279, %v230
    %vm291 = vcmask 97280
    %v293 = vsel %vm291, %v282, %v255
    %v295 = vsel %vm291, %v284, %v257
    %v297 = vsel %vm291, %v286, %v259
    %v299 = vsel %vm291, %v288, %v261
    %v301 = vsel %vm291, %v290, %v263
    %302 = vrot.lane.b32.xlu0 %v249, 4
    %v303 = vpop.permute.xlu0 %302
    %304 = vrot.lane.b32.xlu0 %v250, 4
    %v305 = vpop.permute.xlu0 %304
    %306 = vrot.lane.b32.xlu0 %v251, 4
    %v307 = vpop.permute.xlu0 %306
    %308 = vrot.lane.b32.xlu0 %v252, 4
    %v309 = vpop.permute.xlu0 %308
    %310 = vrot.lane.b32.xlu0 %v253, 4
    %v311 = vpop.permute.xlu0 %310
    %vm312 = vcmask 1046528
    %v313 = vrot.slane %v160, 1
    %v314 = vrot.slane %v161, 1
    %v315 = vsel %vm312, %v313, %v314
    %v316 = vrot.slane %v162, 1
    %v317 = vsel %vm312, %v314, %v316
    %v318 = vrot.slane %v163, 1
    %v319 = vsel %vm312, %v316, %v318
    %v320 = vrot.slane %v164, 1
    %v321 = vsel %vm312, %v318, %v320
    %322 = vrot.lane.b32.xlu0 %v315, 8
    %v323 = vpop.permute.xlu0 %322
    %324 = vrot.lane.b32.xlu0 %v317, 8
    %v325 = vpop.permute.xlu0 %324
    %326 = vrot.lane.b32.xlu0 %v319, 8
    %v327 = vpop.permute.xlu0 %326
    %328 = vrot.lane.b32.xlu0 %v321, 8
    %v329 = vpop.permute.xlu0 %328
    %330 = vrot.lane.b32.xlu0 %v320, 8
    %v331 = vpop.permute.xlu0 %330
    %v332 = vrot.slane %v183, 1
    %v333 = vrot.slane %v184, 1
    %v334 = vsel %vm312, %v332, %v333
    %v335 = vrot.slane %v185, 1
    %v336 = vsel %vm312, %v333, %v335
    %v337 = vrot.slane %v186, 1
    %v338 = vsel %vm312, %v335, %v337
    %v339 = vrot.slane %v187, 1
    %v340 = vsel %vm312, %v337, %v339
    %341 = vrot.lane.b32.xlu0 %v334, 12
    %v342 = vpop.permute.xlu0 %341
    %343 = vrot.lane.b32.xlu0 %v336, 12
    %v344 = vpop.permute.xlu0 %343
    %345 = vrot.lane.b32.xlu0 %v338, 12
    %v346 = vpop.permute.xlu0 %345
    %347 = vrot.lane.b32.xlu0 %v340, 12
    %v348 = vpop.permute.xlu0 %347
    %349 = vrot.lane.b32.xlu0 %v339, 12
    %v350 = vpop.permute.xlu0 %349
    %v353 = vsel %vm264, %v216, %v303
    %v356 = vsel %vm264, %v217, %v305
    %v359 = vsel %vm264, %v218, %v307
    %v362 = vsel %vm264, %v219, %v309
    %v365 = vsel %vm264, %v220, %v311
    %v367 = vsel %vm280, %v353, %v323
    %v369 = vsel %vm280, %v356, %v325
    %v371 = vsel %vm280, %v359, %v327
    %v373 = vsel %vm280, %v362, %v329
    %v375 = vsel %vm280, %v365, %v331
    %v377 = vsel %vm291, %v367, %v342
    %v379 = vsel %vm291, %v369, %v344
    %v381 = vsel %vm291, %v371, %v346
    %v383 = vsel %vm291, %v373, %v348
    %v385 = vsel %vm291, %v375, %v350
    %vm391 = vcmask 1042432
    %v392 = vrot.slane %v377, 5
    %v393 = vrot.slane %v379, 5
    %v394 = vsel %vm391, %v392, %v393
    %v395 = vrot.slane %v381, 5
    %v396 = vsel %vm391, %v393, %v395
    %v397 = vrot.slane %v383, 5
    %v398 = vsel %vm391, %v395, %v397
    %v399 = vrot.slane %v385, 5
    %v400 = vsel %vm391, %v397, %v399
    %vm401 = vcmask 1042432
    %v403 = vsel %vm401, %v301, %v392
    %v404 = vld [vmem:[%s2] sm:$0xf]
    %v405 = vld [vmem:[%s2 + $0x4] sm:$0xf]
    %v406 = vld [vmem:[%s3] sm:$0x1]
    %v408 = vperm.slane %v406, 0
    %v412 = vunpack.c.l.b16 %v404
    %v413 = vunpack.c.l.b16 %v405
    %v414 = vpack.c.b16 %v413, %v412
    %vm416 = vcmask 130048
    %v417 = vsel %vm416, %v293, 0
    %v419 = vsel %vm416, %v295, 0
    %v421 = vsel %vm416, %v297, 0
    %v423 = vsel %vm416, %v299, 0
    %v425 = vsel %vm416, %v403, 0
    %v428 = vsel %vm416, %v394, 0
    %v431 = vsel %vm416, %v396, 0
    %v434 = vsel %vm416, %v398, 0
    %v437 = vsel %vm416, %v400, 0
    %439 = vmatpush.bf16.msra.mxu0 0
    %440 = vmatpush.bf16.msra.mxu0 0
    %441 = vmatpush.bf16.msra.mxu0 0
    %442 = vmatpush.bf16.msra.mxu0 0
    %443 = vmatpush.bf16.msra.mxu0 0
    %444 = vmatpush.bf16.msra.mxu0 0
    %445 = vmatpush.bf16.msra.mxu0 0
    %446 = vmatpush.bf16.msra.mxu0 %v414
    %447 = vmatmul.bf16.gmra.mxu0 %v417
    %v448 = vpop.f32.mrf.mxu0
    %v449 = vadd.f32 %v408, %v448
    %v450 = vpop.f32.mrf.mxu0
    %v451 = vadd.f32 %v408, %v450
    %452 = vmatmul.bf16.gmra.mxu0 %v419
    %v453 = vpop.f32.mrf.mxu0
    %v454 = vadd.f32 %v408, %v453
    %v455 = vpop.f32.mrf.mxu0
    %v456 = vadd.f32 %v408, %v455
    %457 = vmatmul.bf16.gmra.mxu0 %v421
    %v458 = vpop.f32.mrf.mxu0
    %v459 = vadd.f32 %v408, %v458
    %v460 = vpop.f32.mrf.mxu0
    %v461 = vadd.f32 %v408, %v460
    %462 = vmatmul.bf16.gmra.mxu0 %v423
    %v463 = vpop.f32.mrf.mxu0
    %v464 = vadd.f32 %v408, %v463
    %v465 = vpop.f32.mrf.mxu0
    %v466 = vadd.f32 %v408, %v465
    %467 = vmatmul.bf16.gmra.mxu0 %v425
    %v468 = vpop.f32.mrf.mxu0
    %v469 = vadd.f32 %v408, %v468
    %v470 = vpop.f32.mrf.mxu0
    %v471 = vadd.f32 %v408, %v470
    %472 = vmatmul.bf16.gmra.mxu0 %v428
    %v473 = vpop.f32.mrf.mxu0
    %v474 = vadd.f32 %v408, %v473
    %v475 = vpop.f32.mrf.mxu0
    %v476 = vadd.f32 %v408, %v475
    %477 = vmatmul.bf16.gmra.mxu0 %v431
    %v478 = vpop.f32.mrf.mxu0
    %v479 = vadd.f32 %v408, %v478
    %v480 = vpop.f32.mrf.mxu0
    %v481 = vadd.f32 %v408, %v480
    %482 = vmatmul.bf16.gmra.mxu0 %v434
    %v483 = vpop.f32.mrf.mxu0
    %v484 = vadd.f32 %v408, %v483
    %v485 = vpop.f32.mrf.mxu0
    %v486 = vadd.f32 %v408, %v485
    %487 = vmatmul.bf16.gmra.mxu0 %v437
    %v488 = vpop.f32.mrf.mxu0
    %v489 = vadd.f32 %v408, %v488
    %v490 = vpop.f32.mrf.mxu0
    %v491 = vadd.f32 %v408, %v490
    %492 = vdwg.mxu0
    %v493 = vmax.f32 %v449, 0.0
    %v494 = vmax.f32 %v451, 0.0
    %v495 = vmax.f32 %v454, 0.0
    %v496 = vmax.f32 %v456, 0.0
    %v497 = vmax.f32 %v459, 0.0
    %v498 = vmax.f32 %v461, 0.0
    %v499 = vmax.f32 %v464, 0.0
    %v500 = vmax.f32 %v466, 0.0
    %v501 = vmax.f32 %v469, 0.0
    %v502 = vmax.f32 %v471, 0.0
    %v503 = vmax.f32 %v474, 0.0
    %v504 = vmax.f32 %v476, 0.0
    %v505 = vmax.f32 %v479, 0.0
    %v506 = vmax.f32 %v481, 0.0
    %v507 = vmax.f32 %v484, 0.0
    %v508 = vmax.f32 %v486, 0.0
    %v509 = vmax.f32 %v489, 0.0
    %v510 = vmax.f32 %v491, 0.0
    %vm511 = vcmask 261120
    %v512 = vsel %vm511, %v493, 0.0
    %v513 = vsel %vm511, %v494, 0.0
    %v514 = vadd.f32 %v512, %v513
    %v515 = vsel %vm511, %v495, 0.0
    %v516 = vadd.f32 %v514, %v515
    %v517 = vsel %vm511, %v496, 0.0
    %v518 = vadd.f32 %v516, %v517
    %v519 = vsel %vm511, %v497, 0.0
    %v520 = vadd.f32 %v518, %v519
    %v521 = vsel %vm511, %v498, 0.0
    %v522 = vadd.f32 %v520, %v521
    %v523 = vsel %vm511, %v499, 0.0
    %v524 = vadd.f32 %v522, %v523
    %v525 = vsel %vm511, %v500, 0.0
    %v526 = vadd.f32 %v524, %v525
    %v527 = vsel %vm511, %v501, 0.0
    %v528 = vadd.f32 %v526, %v527
    %v529 = vsel %vm511, %v502, 0.0
    %v530 = vadd.f32 %v528, %v529
    %v531 = vsel %vm511, %v503, 0.0
    %v532 = vadd.f32 %v530, %v531
    %v533 = vsel %vm511, %v504, 0.0
    %v534 = vadd.f32 %v532, %v533
    %v535 = vsel %vm511, %v505, 0.0
    %v536 = vadd.f32 %v534, %v535
    %v537 = vsel %vm511, %v506, 0.0
    %v538 = vadd.f32 %v536, %v537
    %v539 = vsel %vm511, %v507, 0.0
    %v540 = vadd.f32 %v538, %v539
    %v541 = vsel %vm511, %v508, 0.0
    %v542 = vadd.f32 %v540, %v541
    %v543 = vsel %vm511, %v509, 0.0
    %v544 = vadd.f32 %v542, %v543
    %vm545 = vcmask 257024
    %v546 = vsel %vm545, %v510, 0.0
    %v547 = vadd.f32 %v544, %v546
    %v548 = vrot.slane %v547, 4
    %v549 = vadd.f32 %v547, %v548
    %v550 = vrot.slane %v549, 2
    %v551 = vadd.f32 %v549, %v550
    %v552 = vrot.slane %v551, 1
    %v553 = vadd.f32 %v551, %v552
    %v554 = vmul.f32 %v553, 0.007142857
    %v555 = vsub.f32 %v493, %v554
    %v556 = vsub.f32 %v494, %v554
    %v557 = vsub.f32 %v495, %v554
    %v558 = vsub.f32 %v496, %v554
    %v559 = vsub.f32 %v497, %v554
    %v560 = vsub.f32 %v498, %v554
    %v561 = vsub.f32 %v499, %v554
    %v562 = vsub.f32 %v500, %v554
    %v563 = vsub.f32 %v501, %v554
    %v564 = vsub.f32 %v502, %v554
    %v565 = vsub.f32 %v503, %v554
    %v566 = vsub.f32 %v504, %v554
    %v567 = vsub.f32 %v505, %v554
    %v568 = vsub.f32 %v506, %v554
    %v569 = vsub.f32 %v507, %v554
    %v570 = vsub.f32 %v508, %v554
    %v571 = vsub.f32 %v509, %v554
    %v572 = vsub.f32 %v510, %v554
    %v573 = vmul.f32 %v555, %v555
    %v574 = vmul.f32 %v556, %v556
    %v575 = vmul.f32 %v557, %v557
    %v576 = vmul.f32 %v558, %v558
    %v577 = vmul.f32 %v559, %v559
    %v578 = vmul.f32 %v560, %v560
    %v579 = vmul.f32 %v561, %v561
    %v580 = vmul.f32 %v562, %v562
    %v581 = vmul.f32 %v563, %v563
    %v582 = vmul.f32 %v564, %v564
    %v583 = vmul.f32 %v565, %v565
    %v584 = vmul.f32 %v566, %v566
    %v585 = vmul.f32 %v567, %v567
    %v586 = vmul.f32 %v568, %v568
    %v587 = vmul.f32 %v569, %v569
    %v588 = vmul.f32 %v570, %v570
    %v589 = vmul.f32 %v571, %v571
    %v590 = vmul.f32 %v572, %v572
    %v591 = vsel %vm511, %v573, 0.0
    %v592 = vsel %vm511, %v574, 0.0
    %v593 = vadd.f32 %v591, %v592
    %v594 = vsel %vm511, %v575, 0.0
    %v595 = vadd.f32 %v593, %v594
    %v596 = vsel %vm511, %v576, 0.0
    %v597 = vadd.f32 %v595, %v596
    %v598 = vsel %vm511, %v577, 0.0
    %v599 = vadd.f32 %v597, %v598
    %v600 = vsel %vm511, %v578, 0.0
    %v601 = vadd.f32 %v599, %v600
    %v602 = vsel %vm511, %v579, 0.0
    %v603 = vadd.f32 %v601, %v602
    %v604 = vsel %vm511, %v580, 0.0
    %v605 = vadd.f32 %v603, %v604
    %v606 = vsel %vm511, %v581, 0.0
    %v607 = vadd.f32 %v605, %v606
    %v608 = vsel %vm511, %v582, 0.0
    %v609 = vadd.f32 %v607, %v608
    %v610 = vsel %vm511, %v583, 0.0
    %v611 = vadd.f32 %v609, %v610
    %v612 = vsel %vm511, %v584, 0.0
    %v613 = vadd.f32 %v611, %v612
    %v614 = vsel %vm511, %v585, 0.0
    %v615 = vadd.f32 %v613, %v614
    %v616 = vsel %vm511, %v586, 0.0
    %v617 = vadd.f32 %v615, %v616
    %v618 = vsel %vm511, %v587, 0.0
    %v619 = vadd.f32 %v617, %v618
    %v620 = vsel %vm511, %v588, 0.0
    %v621 = vadd.f32 %v619, %v620
    %v622 = vsel %vm511, %v589, 0.0
    %v623 = vadd.f32 %v621, %v622
    %v624 = vsel %vm545, %v590, 0.0
    %v625 = vadd.f32 %v623, %v624
    %v626 = vrot.slane %v625, 4
    %v627 = vadd.f32 %v625, %v626
    %v628 = vrot.slane %v627, 2
    %v629 = vadd.f32 %v627, %v628
    %v630 = vrot.slane %v629, 1
    %v631 = vadd.f32 %v629, %v630
    %v632 = vmul.f32 %v631, 0.007142857
    %v633 = vld [vmem:[%s4] sm:$0x1]
    %v635 = vperm.slane %v633, 0
    %v637 = vmul.f32 %v635, %v555
    %v638 = vmul.f32 %v635, %v556
    %v639 = vmul.f32 %v635, %v557
    %v640 = vmul.f32 %v635, %v558
    %v641 = vmul.f32 %v635, %v559
    %v642 = vmul.f32 %v635, %v560
    %v643 = vmul.f32 %v635, %v561
    %v644 = vmul.f32 %v635, %v562
    %v645 = vmul.f32 %v635, %v563
    %v646 = vmul.f32 %v635, %v564
    %v647 = vmul.f32 %v635, %v565
    %v648 = vmul.f32 %v635, %v566
    %v649 = vmul.f32 %v635, %v567
    %v650 = vmul.f32 %v635, %v568
    %v651 = vmul.f32 %v635, %v569
    %v652 = vmul.f32 %v635, %v570
    %v653 = vmul.f32 %v635, %v571
    %v654 = vmul.f32 %v635, %v572
    %v655 = vadd.f32 %v632, 1e-05
    %v656 = vrsqrt.pop %v655
    %v657 = vmul.f32 %v656, %v655
    %v658 = vmul.f32 %v657, %v656
    %v659 = vmul.f32 0.5, %v658
    %v660 = vsub.f32 1.5, %v659
    %v661 = vmul.f32 %v656, %v660
    %vm662 = vweird.f32 %v655
    %vm663 = vweird.f32 %v656
    %vm664 = vmor %vm662, %vm663
    %v665 = vsel %vm664, %v656, %v661
    %v666 = vmul.f32 %v637, %v665
    %v667 = vmul.f32 %v638, %v665
    %v668 = vmul.f32 %v639, %v665
    %v669 = vmul.f32 %v640, %v665
    %v670 = vmul.f32 %v641, %v665
    %v671 = vmul.f32 %v642, %v665
    %v672 = vmul.f32 %v643, %v665
    %v673 = vmul.f32 %v644, %v665
    %v674 = vmul.f32 %v645, %v665
    %v675 = vmul.f32 %v646, %v665
    %v676 = vmul.f32 %v647, %v665
    %v677 = vmul.f32 %v648, %v665
    %v678 = vmul.f32 %v649, %v665
    %v679 = vmul.f32 %v650, %v665
    %v680 = vmul.f32 %v651, %v665
    %v681 = vmul.f32 %v652, %v665
    %v682 = vmul.f32 %v653, %v665
    %v683 = vmul.f32 %v654, %v665
    %v684 = vld [vmem:[%s5] sm:$0x1]
    %v686 = vperm.slane %v684, 0
    %v688 = vadd.f32 %v666, %v686
    %v689 = vadd.f32 %v667, %v686
    %v690 = vadd.f32 %v668, %v686
    %v691 = vadd.f32 %v669, %v686
    %v692 = vadd.f32 %v670, %v686
    %v693 = vadd.f32 %v671, %v686
    %v694 = vadd.f32 %v672, %v686
    %v695 = vadd.f32 %v673, %v686
    %v696 = vadd.f32 %v674, %v686
    %v697 = vadd.f32 %v675, %v686
    %v698 = vadd.f32 %v676, %v686
    %v699 = vadd.f32 %v677, %v686
    %v700 = vadd.f32 %v678, %v686
    %v701 = vadd.f32 %v679, %v686
    %v702 = vadd.f32 %v680, %v686
    %v703 = vadd.f32 %v681, %v686
    %v704 = vadd.f32 %v682, %v686
    %v705 = vadd.f32 %v683, %v686
    %v706 = vpack.c.bf16 %v688, %v688
    %v707 = vpack.c.bf16 %v689, %v689
    %v708 = vpack.c.bf16 %v690, %v690
    %v709 = vpack.c.bf16 %v691, %v691
    %v710 = vpack.c.bf16 %v692, %v692
    %v711 = vpack.c.bf16 %v693, %v693
    %v712 = vpack.c.bf16 %v694, %v694
    %v713 = vpack.c.bf16 %v695, %v695
    %v714 = vpack.c.bf16 %v696, %v696
    %v715 = vpack.c.bf16 %v697, %v697
    %v716 = vpack.c.bf16 %v698, %v698
    %v717 = vpack.c.bf16 %v699, %v699
    %v718 = vpack.c.bf16 %v700, %v700
    %v719 = vpack.c.bf16 %v701, %v701
    %v720 = vpack.c.bf16 %v702, %v702
    %v721 = vpack.c.bf16 %v703, %v703
    %v722 = vpack.c.bf16 %v704, %v704
    %v723 = vpack.c.bf16 %v705, %v705
    %v732 = vunpack.c.l.b16 %v706
    %v733 = vunpack.c.l.b16 %v707
    %v734 = vunpack.c.l.b16 %v708
    %v735 = vunpack.c.l.b16 %v709
    %v736 = vunpack.c.l.b16 %v710
    %v737 = vunpack.c.l.b16 %v711
    %v738 = vunpack.c.l.b16 %v712
    %v739 = vunpack.c.l.b16 %v713
    %v740 = vpack.c.b16 %v733, %v732
    %v741 = vpack.c.b16 %v735, %v734
    %v742 = vpack.c.b16 %v737, %v736
    %v743 = vpack.c.b16 %v739, %v738
    %v753 = vunpack.c.l.b16 %v714
    %v754 = vunpack.c.l.b16 %v715
    %v755 = vunpack.c.l.b16 %v716
    %v756 = vunpack.c.l.b16 %v717
    %v757 = vunpack.c.l.b16 %v718
    %v758 = vunpack.c.l.b16 %v719
    %v759 = vunpack.c.l.b16 %v720
    %v760 = vunpack.c.l.b16 %v721
    %v761 = vunpack.c.l.b16 %v722
    %v762 = vpack.c.b16 %v754, %v753
    %v763 = vpack.c.b16 %v756, %v755
    %v764 = vpack.c.b16 %v758, %v757
    %v765 = vpack.c.b16 %v760, %v759
    %v766 = vpack.c.b16 %v761, %v761
    %vm767 = vcmask 1044480
    %v768 = vrot.slane %v762, 3
    %v769 = vrot.slane %v763, 3
    %v770 = vsel %vm767, %v768, %v769
    %v771 = vrot.slane %v764, 3
    %v772 = vsel %vm767, %v769, %v771
    %v773 = vrot.slane %v765, 3
    %v774 = vsel %vm767, %v771, %v773
    %v775 = vrot.slane %v766, 3
    %v776 = vsel %vm767, %v773, %v775
    %777 = vrot.lane.b32.xlu0 %v770, 32
    %v778 = vpop.permute.xlu0 %777
    %779 = vrot.lane.b32.xlu0 %v772, 32
    %v780 = vpop.permute.xlu0 %779
    %781 = vrot.lane.b32.xlu0 %v774, 32
    %v782 = vpop.permute.xlu0 %781
    %783 = vrot.lane.b32.xlu0 %v776, 32
    %v784 = vpop.permute.xlu0 %783
    %v785 = vpack.c.b16 %v753, %v753
    %v786 = vrot.slane %v740, 1
    %v787 = vrot.slane %v741, 1
    %v788 = vsel %vm312, %v786, %v787
    %v789 = vrot.slane %v742, 1
    %v790 = vsel %vm312, %v787, %v789
    %v791 = vrot.slane %v743, 1
    %v792 = vsel %vm312, %v789, %v791
    %v793 = vrot.slane %v785, 1
    %v794 = vsel %vm312, %v791, %v793
    %795 = vrot.lane.b32.xlu0 %v788, 64
    %v796 = vpop.permute.xlu0 %795
    %797 = vrot.lane.b32.xlu0 %v790, 64
    %v798 = vpop.permute.xlu0 %797
    %799 = vrot.lane.b32.xlu0 %v792, 64
    %v800 = vpop.permute.xlu0 %799
    %801 = vrot.lane.b32.xlu0 %v794, 64
    %v802 = vpop.permute.xlu0 %801
    %v803 = vpack.c.b16 %v755, %v754
    %v804 = vpack.c.b16 %v757, %v756
    %v805 = vpack.c.b16 %v759, %v758
    %v806 = vpack.c.b16 %v761, %v760
    %807 = vrot.lane.b32.xlu0 %v803, 96
    %v808 = vpop.permute.xlu0 %807
    %809 = vrot.lane.b32.xlu0 %v804, 96
    %v810 = vpop.permute.xlu0 %809
    %811 = vrot.lane.b32.xlu0 %v805, 96
    %v812 = vpop.permute.xlu0 %811
    %813 = vrot.lane.b32.xlu0 %v806, 96
    %v814 = vpop.permute.xlu0 %813
    %vm815 = vcmask 1045504
    %v816 = vrot.slane %v740, 2
    %v817 = vrot.slane %v741, 2
    %v818 = vsel %vm815, %v816, %v817
    %v819 = vrot.slane %v742, 2
    %v820 = vsel %vm815, %v817, %v819
    %v821 = vrot.slane %v743, 2
    %v822 = vsel %vm815, %v819, %v821
    %v823 = vrot.slane %v785, 2
    %v824 = vsel %vm815, %v821, %v823
    %v826 = vunpack.c.l.b16 %v723
    %v827 = vpack.c.b16 %v826, %v826
    %v828 = vrot.slane %v803, 1
    %v829 = vrot.slane %v804, 1
    %v830 = vsel %vm312, %v828, %v829
    %v831 = vrot.slane %v805, 1
    %v832 = vsel %vm312, %v829, %v831
    %v833 = vrot.slane %v806, 1
    %v834 = vsel %vm312, %v831, %v833
    %v835 = vrot.slane %v827, 1
    %v836 = vsel %vm312, %v833, %v835
    %837 = vrot.lane.b32.xlu0 %v830, 32
    %v838 = vpop.permute.xlu0 %837
    %839 = vrot.lane.b32.xlu0 %v832, 32
    %v840 = vpop.permute.xlu0 %839
    %841 = vrot.lane.b32.xlu0 %v834, 32
    %v842 = vpop.permute.xlu0 %841
    %843 = vrot.lane.b32.xlu0 %v836, 32
    %v844 = vpop.permute.xlu0 %843
    %v845 = vrot.slane %v740, 3
    %v846 = vrot.slane %v741, 3
    %v847 = vsel %vm767, %v845, %v846
    %v848 = vrot.slane %v742, 3
    %v849 = vsel %vm767, %v846, %v848
    %v850 = vrot.slane %v743, 3
    %v851 = vsel %vm767, %v848, %v850
    %v852 = vrot.slane %v785, 3
    %v853 = vsel %vm767, %v850, %v852
    %854 = vrot.lane.b32.xlu0 %v847, 64
    %v855 = vpop.permute.xlu0 %854
    %856 = vrot.lane.b32.xlu0 %v849, 64
    %v857 = vpop.permute.xlu0 %856
    %858 = vrot.lane.b32.xlu0 %v851, 64
    %v859 = vpop.permute.xlu0 %858
    %860 = vrot.lane.b32.xlu0 %v853, 64
    %v861 = vpop.permute.xlu0 %860
    %v862 = vrot.slane %v803, 2
    %v863 = vrot.slane %v804, 2
    %v864 = vsel %vm815, %v862, %v863
    %v865 = vrot.slane %v805, 2
    %v866 = vsel %vm815, %v863, %v865
    %v867 = vrot.slane %v806, 2
    %v868 = vsel %vm815, %v865, %v867
    %v869 = vrot.slane %v827, 2
    %v870 = vsel %vm815, %v867, %v869
    %871 = vrot.lane.b32.xlu0 %v864, 96
    %v872 = vpop.permute.xlu0 %871
    %873 = vrot.lane.b32.xlu0 %v866, 96
    %v874 = vpop.permute.xlu0 %873
    %875 = vrot.lane.b32.xlu0 %v868, 96
    %v876 = vpop.permute.xlu0 %875
    %877 = vrot.lane.b32.xlu0 %v870, 96
    %v878 = vpop.permute.xlu0 %877
    %v881 = vsel %vm511, %v740, %v778
    %v884 = vsel %vm511, %v741, %v780
    %v887 = vsel %vm511, %v742, %v782
    %v890 = vsel %vm511, %v743, %v784
    %vm891 = vcmask 523264
    %v893 = vsel %vm891, %v881, %v796
    %v895 = vsel %vm891, %v884, %v798
    %v897 = vsel %vm891, %v887, %v800
    %v899 = vsel %vm891, %v890, %v802
    %vm900 = vcmask 785408
    %v902 = vsel %vm900, %v893, %v808
    %v905 = vsel %vm900, %v895, %v810
    %v908 = vsel %vm900, %v897, %v812
    %v911 = vsel %vm900, %v899, %v814
    %v915 = vsel %vm511, %v818, %v838
    %v918 = vsel %vm511, %v820, %v840
    %v921 = vsel %vm511, %v822, %v842
    %v924 = vsel %vm511, %v824, %v844
    %v926 = vsel %vm891, %v915, %v855
    %v928 = vsel %vm891, %v918, %v857
    %v930 = vsel %vm891, %v921, %v859
    %v932 = vsel %vm891, %v924, %v861
    %v934 = vsel %vm900, %v926, %v872
    %v937 = vsel %vm900, %v928, %v874
    %v940 = vsel %vm900, %v930, %v876
    %v943 = vsel %vm900, %v932, %v878
    %v945 = vld [vmem:[%s6] sm:$0xf]
    %v946 = vld [vmem:[%s6 + $0x4] sm:$0xf]
    %v947 = vld [vmem:[%s6 + $0x8] sm:$0xf]
    %v948 = vld [vmem:[%s6 + $0xc] sm:$0xf]
    %v949 = vld [vmem:[%s6 + $0x10] sm:$0xf]
    %v950 = vld [vmem:[%s6 + $0x14] sm:$0xf]
    %v951 = vld [vmem:[%s6 + $0x18] sm:$0xf]
    %v952 = vld [vmem:[%s6 + $0x1c] sm:$0xf]
    %v953 = vld [vmem:[%s6 + $0x20] sm:$0xf]
    %v954 = vld [vmem:[%s6 + $0x24] sm:$0xf]
    %v955 = vld [vmem:[%s6 + $0x28] sm:$0xf]
    %v956 = vld [vmem:[%s6 + $0x2c] sm:$0xf]
    %v957 = vld [vmem:[%s6 + $0x30] sm:$0xf]
    %v958 = vld [vmem:[%s6 + $0x34] sm:$0xf]
    %v959 = vld [vmem:[%s6 + $0x38] sm:$0xf]
    %v960 = vld [vmem:[%s6 + $0x3c] sm:$0xf]
    %v961 = vld [vmem:[%s6 + $0x40] sm:$0xf]
    %v962 = vld [vmem:[%s6 + $0x44] sm:$0xf]
    %v963 = vld [vmem:[%s6 + $0x48] sm:$0xf]
    %v964 = vld [vmem:[%s6 + $0x4c] sm:$0xf]
    %v965 = vld [vmem:[%s6 + $0x50] sm:$0xf]
    %v966 = vld [vmem:[%s6 + $0x54] sm:$0xf]
    %v967 = vld [vmem:[%s6 + $0x58] sm:$0xf]
    %v968 = vld [vmem:[%s6 + $0x5c] sm:$0xf]
    %v969 = vld [vmem:[%s6 + $0x60] sm:$0xf]
    %v970 = vld [vmem:[%s6 + $0x64] sm:$0xf]
    %v971 = vld [vmem:[%s6 + $0x68] sm:$0xf]
    %v972 = vld [vmem:[%s6 + $0x6c] sm:$0xf]
    %v973 = vld [vmem:[%s6 + $0x70] sm:$0xf]
    %v974 = vld [vmem:[%s6 + $0x74] sm:$0xf]
    %v975 = vld [vmem:[%s6 + $0x78] sm:$0xf]
    %v976 = vld [vmem:[%s6 + $0x7c] sm:$0xf]
    %v977 = vld [vmem:[%s7] sm:$0x1]
    %v979 = vperm.slane %v977, 0
    %v1013 = vunpack.c.l.b16 %v945
    %v1014 = vunpack.c.l.b16 %v946
    %v1015 = vunpack.c.l.b16 %v947
    %v1016 = vunpack.c.l.b16 %v948
    %v1017 = vunpack.c.l.b16 %v949
    %v1018 = vunpack.c.l.b16 %v950
    %v1019 = vunpack.c.l.b16 %v951
    %v1020 = vunpack.c.l.b16 %v952
    %v1021 = vunpack.c.l.b16 %v953
    %v1022 = vunpack.c.l.b16 %v954
    %v1023 = vunpack.c.l.b16 %v955
    %v1024 = vunpack.c.l.b16 %v956
    %v1025 = vunpack.c.l.b16 %v957
    %v1026 = vunpack.c.l.b16 %v958
    %v1027 = vunpack.c.l.b16 %v959
    %v1028 = vunpack.c.l.b16 %v960
    %v1029 = vunpack.c.l.b16 %v961
    %v1030 = vunpack.c.l.b16 %v962
    %v1031 = vunpack.c.l.b16 %v963
    %v1032 = vunpack.c.l.b16 %v964
    %v1033 = vunpack.c.l.b16 %v965
    %v1034 = vunpack.c.l.b16 %v966
    %v1035 = vunpack.c.l.b16 %v967
    %v1036 = vunpack.c.l.b16 %v968
    %v1037 = vunpack.c.l.b16 %v969
    %v1038 = vunpack.c.l.b16 %v970
    %v1039 = vunpack.c.l.b16 %v971
    %v1040 = vunpack.c.l.b16 %v972
    %v1041 = vunpack.c.l.b16 %v973
    %v1042 = vunpack.c.l.b16 %v974
    %v1043 = vunpack.c.l.b16 %v975
    %v1044 = vunpack.c.l.b16 %v976
    %v1045 = vpack.c.b16 %v1014, %v1013
    %v1046 = vpack.c.b16 %v1016, %v1015
    %v1047 = vpack.c.b16 %v1018, %v1017
    %v1048 = vpack.c.b16 %v1020, %v1019
    %v1049 = vpack.c.b16 %v1022, %v1021
    %v1050 = vpack.c.b16 %v1024, %v1023
    %v1051 = vpack.c.b16 %v1026, %v1025
    %v1052 = vpack.c.b16 %v1028, %v1027
    %v1053 = vpack.c.b16 %v1030, %v1029
    %v1054 = vpack.c.b16 %v1032, %v1031
    %v1055 = vpack.c.b16 %v1034, %v1033
    %v1056 = vpack.c.b16 %v1036, %v1035
    %v1057 = vpack.c.b16 %v1038, %v1037
    %v1058 = vpack.c.b16 %v1040, %v1039
    %v1059 = vpack.c.b16 %v1042, %v1041
    %v1060 = vpack.c.b16 %v1044, %v1043
    %1077 = vmatpush.bf16.msra.mxu0 %v1052
    %1078 = vmatpush.bf16.msra.mxu0 %v1051
    %1079 = vmatpush.bf16.msra.mxu0 %v1050
    %1080 = vmatpush.bf16.msra.mxu0 %v1049
    %1081 = vmatpush.bf16.msra.mxu0 %v1048
    %1082 = vmatpush.bf16.msra.mxu0 %v1047
    %1083 = vmatpush.bf16.msra.mxu0 %v1046
    %1084 = vmatpush.bf16.msra.mxu0 %v1045
    %1085 = vmatmul.bf16.gmra.mxu0 %v902
    %v1086 = vpop.f32.mrf.mxu0
    %v1087 = vadd.f32 %v979, %v1086
    %v1088 = vpop.f32.mrf.mxu0
    %v1089 = vadd.f32 %v979, %v1088
    %1090 = vmatmul.bf16.gmra.mxu0 %v905
    %v1091 = vpop.f32.mrf.mxu0
    %v1092 = vadd.f32 %v979, %v1091
    %v1093 = vpop.f32.mrf.mxu0
    %v1094 = vadd.f32 %v979, %v1093
    %1095 = vmatmul.bf16.gmra.mxu0 %v908
    %v1096 = vpop.f32.mrf.mxu0
    %v1097 = vadd.f32 %v979, %v1096
    %v1098 = vpop.f32.mrf.mxu0
    %v1099 = vadd.f32 %v979, %v1098
    %1100 = vmatmul.bf16.gmra.mxu0 %v911
    %v1101 = vpop.f32.mrf.mxu0
    %v1102 = vadd.f32 %v979, %v1101
    %v1103 = vpop.f32.mrf.mxu0
    %v1104 = vadd.f32 %v979, %v1103
    %1105 = vdwg.mxu0
    %1106 = vmatpush.bf16.msra.mxu0 %v1060
    %1107 = vmatpush.bf16.msra.mxu0 %v1059
    %1108 = vmatpush.bf16.msra.mxu0 %v1058
    %1109 = vmatpush.bf16.msra.mxu0 %v1057
    %1110 = vmatpush.bf16.msra.mxu0 %v1056
    %1111 = vmatpush.bf16.msra.mxu0 %v1055
    %1112 = vmatpush.bf16.msra.mxu0 %v1054
    %1113 = vmatpush.bf16.msra.mxu0 %v1053
    %1114 = vmatmul.bf16.gmra.mxu0 %v934
    %v1115 = vpop.f32.mrf.mxu0
    %v1116 = vadd.f32 %v1087, %v1115
    %v1117 = vpop.f32.mrf.mxu0
    %v1118 = vadd.f32 %v1089, %v1117
    %1119 = vmatmul.bf16.gmra.mxu0 %v937
    %v1120 = vpop.f32.mrf.mxu0
    %v1121 = vadd.f32 %v1092, %v1120
    %v1122 = vpop.f32.mrf.mxu0
    %v1123 = vadd.f32 %v1094, %v1122
    %1124 = vmatmul.bf16.gmra.mxu0 %v940
    %v1125 = vpop.f32.mrf.mxu0
    %v1126 = vadd.f32 %v1097, %v1125
    %v1127 = vpop.f32.mrf.mxu0
    %v1128 = vadd.f32 %v1099, %v1127
    %1129 = vmatmul.bf16.gmra.mxu0 %v943
    %v1130 = vpop.f32.mrf.mxu0
    %v1131 = vadd.f32 %v1102, %v1130
    %v1132 = vpop.f32.mrf.mxu0
    %v1133 = vadd.f32 %v1104, %v1132
    %1134 = vdwg.mxu0
    %v1135 = vmax.f32 %v1116, 0.0
    %v1136 = vmax.f32 %v1118, 0.0
    %v1137 = vmax.f32 %v1121, 0.0
    %v1138 = vmax.f32 %v1123, 0.0
    %v1139 = vmax.f32 %v1126, 0.0
    %v1140 = vmax.f32 %v1128, 0.0
    %v1141 = vmax.f32 %v1131, 0.0
    %v1142 = vmax.f32 %v1133, 0.0
    %v1143 = vpack.c.bf16 %v1135, %v1135
    %v1144 = vpack.c.bf16 %v1136, %v1136
    %v1145 = vpack.c.bf16 %v1137, %v1137
    %v1146 = vpack.c.bf16 %v1138, %v1138
    %v1147 = vpack.c.bf16 %v1139, %v1139
    %v1148 = vpack.c.bf16 %v1140, %v1140
    %v1149 = vpack.c.bf16 %v1141, %v1141
    %v1150 = vpack.c.bf16 %v1142, %v1142
    %v1152 = vunpack.c.l.b16 %v1143
    %v1153 = vpack.c.b16 %v1152, %v1152
    %v1154 = vrot.slane %v1153, 1
    %1155 = vrot.lane.b32.xlu0 %v1154, 64
    %v1156 = vpop.permute.xlu0 %1155
    %v1157 = vrot.slane %v1153, 2
    %v1158 = vrot.slane %v1153, 3
    %1159 = vrot.lane.b32.xlu0 %v1158, 64
    %v1160 = vpop.permute.xlu0 %1159
    %v1162 = vunpack.c.l.b16 %v1144
    %v1163 = vpack.c.b16 %v1162, %v1162
    %v1164 = vrot.slane %v1163, 1
    %1165 = vrot.lane.b32.xlu0 %v1164, 64
    %v1166 = vpop.permute.xlu0 %1165
    %v1167 = vrot.slane %v1163, 2
    %v1168 = vrot.slane %v1163, 3
    %1169 = vrot.lane.b32.xlu0 %v1168, 64
    %v1170 = vpop.permute.xlu0 %1169
    %v1172 = vunpack.c.l.b16 %v1145
    %v1173 = vpack.c.b16 %v1172, %v1172
    %v1174 = vrot.slane %v1173, 1
    %1175 = vrot.lane.b32.xlu0 %v1174, 64
    %v1176 = vpop.permute.xlu0 %1175
    %v1177 = vrot.slane %v1173, 2
    %v1178 = vrot.slane %v1173, 3
    %1179 = vrot.lane.b32.xlu0 %v1178, 64
    %v1180 = vpop.permute.xlu0 %1179
    %v1182 = vunpack.c.l.b16 %v1146
    %v1183 = vpack.c.b16 %v1182, %v1182
    %v1184 = vrot.slane %v1183, 1
    %1185 = vrot.lane.b32.xlu0 %v1184, 64
    %v1186 = vpop.permute.xlu0 %1185
    %v1187 = vrot.slane %v1183, 2
    %v1188 = vrot.slane %v1183, 3
    %1189 = vrot.lane.b32.xlu0 %v1188, 64
    %v1190 = vpop.permute.xlu0 %1189
    %v1193 = vsel %vm891, %v1143, %v1156
    %v1197 = vsel %vm891, %v1157, %v1160
    %v1201 = vsel %vm891, %v1144, %v1166
    %v1205 = vsel %vm891, %v1167, %v1170
    %v1209 = vsel %vm891, %v1145, %v1176
    %v1213 = vsel %vm891, %v1177, %v1180
    %v1217 = vsel %vm891, %v1146, %v1186
    %v1221 = vsel %vm891, %v1187, %v1190
    %v1224 = vunpack.c.l.b16 %v1147
    %v1225 = vpack.c.b16 %v1224, %v1224
    %v1226 = vrot.slane %v1225, 1
    %1227 = vrot.lane.b32.xlu0 %v1226, 64
    %v1228 = vpop.permute.xlu0 %1227
    %v1229 = vrot.slane %v1225, 2
    %v1230 = vrot.slane %v1225, 3
    %1231 = vrot.lane.b32.xlu0 %v1230, 64
    %v1232 = vpop.permute.xlu0 %1231
    %v1234 = vunpack.c.l.b16 %v1148
    %v1235 = vpack.c.b16 %v1234, %v1234
    %v1236 = vrot.slane %v1235, 1
    %1237 = vrot.lane.b32.xlu0 %v1236, 64
    %v1238 = vpop.permute.xlu0 %1237
    %v1239 = vrot.slane %v1235, 2
    %v1240 = vrot.slane %v1235, 3
    %1241 = vrot.lane.b32.xlu0 %v1240, 64
    %v1242 = vpop.permute.xlu0 %1241
    %v1244 = vunpack.c.l.b16 %v1149
    %v1245 = vpack.c.b16 %v1244, %v1244
    %v1246 = vrot.slane %v1245, 1
    %1247 = vrot.lane.b32.xlu0 %v1246, 64
    %v1248 = vpop.permute.xlu0 %1247
    %v1249 = vrot.slane %v1245, 2
    %v1250 = vrot.slane %v1245, 3
    %1251 = vrot.lane.b32.xlu0 %v1250, 64
    %v1252 = vpop.permute.xlu0 %1251
    %v1254 = vunpack.c.l.b16 %v1150
    %v1255 = vpack.c.b16 %v1254, %v1254
    %v1256 = vrot.slane %v1255, 1
    %1257 = vrot.lane.b32.xlu0 %v1256, 64
    %v1258 = vpop.permute.xlu0 %1257
    %v1259 = vrot.slane %v1255, 2
    %v1260 = vrot.slane %v1255, 3
    %1261 = vrot.lane.b32.xlu0 %v1260, 64
    %v1262 = vpop.permute.xlu0 %1261
    %v1265 = vsel %vm891, %v1147, %v1228
    %v1269 = vsel %vm891, %v1229, %v1232
    %v1273 = vsel %vm891, %v1148, %v1238
    %v1277 = vsel %vm891, %v1239, %v1242
    %v1281 = vsel %vm891, %v1149, %v1248
    %v1285 = vsel %vm891, %v1249, %v1252
    %v1289 = vsel %vm891, %v1150, %v1258
    %v1293 = vsel %vm891, %v1259, %v1262
    %v1295 = vld [vmem:[#allocation2] sm:$0xf]
    %v1296 = vld [vmem:[#allocation2 + $0x4] sm:$0xf]
    %v1297 = vld [vmem:[#allocation2 + $0x8] sm:$0xf]
    %v1298 = vld [vmem:[#allocation2 + $0xc] sm:$0xf]
    %v1299 = vld [vmem:[#allocation2 + $0x10] sm:$0xf]
    %v1300 = vld [vmem:[#allocation2 + $0x14] sm:$0xf]
    %v1301 = vld [vmem:[#allocation2 + $0x18] sm:$0xf]
    %v1302 = vld [vmem:[#allocation2 + $0x1c] sm:$0xf]
    %v1303 = vld [vmem:[#allocation2 + $0x20] sm:$0xf]
    %v1304 = vld [vmem:[#allocation2 + $0x24] sm:$0xf]
    %v1305 = vld [vmem:[#allocation2 + $0x28] sm:$0xf]
    %v1306 = vld [vmem:[#allocation2 + $0x2c] sm:$0xf]
    %v1307 = vld [vmem:[#allocation2 + $0x30] sm:$0xf]
    %v1308 = vld [vmem:[#allocation2 + $0x34] sm:$0xf]
    %v1309 = vld [vmem:[#allocation2 + $0x38] sm:$0xf]
    %v1310 = vld [vmem:[#allocation2 + $0x3c] sm:$0xf]
    %v1311 = vld [vmem:[#allocation2 + $0x40] sm:$0xf]
    %v1312 = vld [vmem:[#allocation2 + $0x44] sm:$0xf]
    %v1313 = vld [vmem:[#allocation2 + $0x48] sm:$0xf]
    %v1314 = vld [vmem:[#allocation2 + $0x4c] sm:$0xf]
    %v1315 = vld [vmem:[#allocation2 + $0x50] sm:$0xf]
    %v1316 = vld [vmem:[#allocation2 + $0x54] sm:$0xf]
    %v1317 = vld [vmem:[#allocation2 + $0x58] sm:$0xf]
    %v1318 = vld [vmem:[#allocation2 + $0x5c] sm:$0xf]
    %v1319 = vld [vmem:[#allocation2 + $0x60] sm:$0xf]
    %v1320 = vld [vmem:[#allocation2 + $0x64] sm:$0xf]
    %v1321 = vld [vmem:[#allocation2 + $0x68] sm:$0xf]
    %v1322 = vld [vmem:[#allocation2 + $0x6c] sm:$0xf]
    %v1323 = vld [vmem:[#allocation2 + $0x70] sm:$0xf]
    %v1324 = vld [vmem:[#allocation2 + $0x74] sm:$0xf]
    %v1325 = vld [vmem:[#allocation2 + $0x78] sm:$0xf]
    %v1326 = vld [vmem:[#allocation2 + $0x7c] sm:$0xf]
    %v1327 = vld [vmem:[#allocation2 + $0x80] sm:$0xf]
    %v1328 = vld [vmem:[#allocation2 + $0x84] sm:$0xf]
    %v1329 = vld [vmem:[#allocation2 + $0x88] sm:$0xf]
    %v1330 = vld [vmem:[#allocation2 + $0x8c] sm:$0xf]
    %v1331 = vld [vmem:[#allocation2 + $0x90] sm:$0xf]
    %v1332 = vld [vmem:[#allocation2 + $0x94] sm:$0xf]
    %v1333 = vld [vmem:[#allocation2 + $0x98] sm:$0xf]
    %v1334 = vld [vmem:[#allocation2 + $0x9c] sm:$0xf]
    %v1335 = vld [vmem:[#allocation2 + $0xa0] sm:$0xf]
    %v1336 = vld [vmem:[#allocation2 + $0xa4] sm:$0xf]
    %v1337 = vld [vmem:[#allocation2 + $0xa8] sm:$0xf]
    %v1338 = vld [vmem:[#allocation2 + $0xac] sm:$0xf]
    %v1339 = vld [vmem:[#allocation2 + $0xb0] sm:$0xf]
    %v1340 = vld [vmem:[#allocation2 + $0xb4] sm:$0xf]
    %v1341 = vld [vmem:[#allocation2 + $0xb8] sm:$0xf]
    %v1342 = vld [vmem:[#allocation2 + $0xbc] sm:$0xf]
    %v1343 = vld [vmem:[#allocation2 + $0xc0] sm:$0xf]
    %v1344 = vld [vmem:[#allocation2 + $0xc4] sm:$0xf]
    %v1345 = vld [vmem:[#allocation2 + $0xc8] sm:$0xf]
    %v1346 = vld [vmem:[#allocation2 + $0xcc] sm:$0xf]
    %v1347 = vld [vmem:[#allocation2 + $0xd0] sm:$0xf]
    %v1348 = vld [vmem:[#allocation2 + $0xd4] sm:$0xf]
    %v1349 = vld [vmem:[#allocation2 + $0xd8] sm:$0xf]
    %v1350 = vld [vmem:[#allocation2 + $0xdc] sm:$0xf]
    %v1351 = vld [vmem:[#allocation2 + $0xe0] sm:$0xf]
    %v1352 = vld [vmem:[#allocation2 + $0xe4] sm:$0xf]
    %v1353 = vld [vmem:[#allocation2 + $0xe8] sm:$0xf]
    %v1354 = vld [vmem:[#allocation2 + $0xec] sm:$0xf]
    %v1355 = vld [vmem:[#allocation2 + $0xf0] sm:$0xf]
    %v1356 = vld [vmem:[#allocation2 + $0xf4] sm:$0xf]
    %v1357 = vld [vmem:[#allocation2 + $0xf8] sm:$0xf]
    %v1358 = vld [vmem:[#allocation2 + $0xfc] sm:$0xf]
    %v1359 = vld [vmem:[#allocation2 + $0x100] sm:$0xf]
    %v1360 = vld [vmem:[#allocation2 + $0x104] sm:$0xf]
    %v1361 = vld [vmem:[#allocation2 + $0x108] sm:$0xf]
    %v1362 = vld [vmem:[#allocation2 + $0x10c] sm:$0xf]
    %v1363 = vld [vmem:[#allocation2 + $0x110] sm:$0xf]
    %v1364 = vld [vmem:[#allocation2 + $0x114] sm:$0xf]
    %v1365 = vld [vmem:[#allocation2 + $0x118] sm:$0xf]
    %v1366 = vld [vmem:[#allocation2 + $0x11c] sm:$0xf]
    %v1367 = vld [vmem:[#allocation2 + $0x120] sm:$0xf]
    %v1368 = vld [vmem:[#allocation2 + $0x124] sm:$0xf]
    %v1369 = vld [vmem:[#allocation2 + $0x128] sm:$0xf]
    %v1370 = vld [vmem:[#allocation2 + $0x12c] sm:$0xf]
    %v1371 = vld [vmem:[#allocation2 + $0x130] sm:$0xf]
    %v1372 = vld [vmem:[#allocation2 + $0x134] sm:$0xf]
    %v1373 = vld [vmem:[#allocation2 + $0x138] sm:$0xf]
    %v1374 = vld [vmem:[#allocation2 + $0x13c] sm:$0xf]
    %v1375 = vld [vmem:[#allocation2 + $0x140] sm:$0xf]
    %v1376 = vld [vmem:[#allocation2 + $0x144] sm:$0xf]
    %v1377 = vld [vmem:[#allocation2 + $0x148] sm:$0xf]
    %v1378 = vld [vmem:[#allocation2 + $0x14c] sm:$0xf]
    %v1379 = vld [vmem:[#allocation2 + $0x150] sm:$0xf]
    %v1380 = vld [vmem:[#allocation2 + $0x154] sm:$0xf]
    %v1381 = vld [vmem:[#allocation2 + $0x158] sm:$0xf]
    %v1382 = vld [vmem:[#allocation2 + $0x15c] sm:$0xf]
    %v1383 = vld [vmem:[#allocation2 + $0x160] sm:$0xf]
    %v1384 = vld [vmem:[#allocation2 + $0x164] sm:$0xf]
    %v1385 = vld [vmem:[#allocation2 + $0x168] sm:$0xf]
    %v1386 = vld [vmem:[#allocation2 + $0x16c] sm:$0xf]
    %v1387 = vld [vmem:[#allocation2 + $0x170] sm:$0xf]
    %v1388 = vld [vmem:[#allocation2 + $0x174] sm:$0xf]
    %v1389 = vld [vmem:[#allocation2 + $0x178] sm:$0xf]
    %v1390 = vld [vmem:[#allocation2 + $0x17c] sm:$0xf]
    %v1391 = vld [vmem:[#allocation2 + $0x180] sm:$0xf]
    %v1392 = vld [vmem:[#allocation2 + $0x184] sm:$0xf]
    %v1393 = vld [vmem:[#allocation2 + $0x188] sm:$0xf]
    %v1394 = vld [vmem:[#allocation2 + $0x18c] sm:$0xf]
    %v1395 = vld [vmem:[#allocation2 + $0x190] sm:$0xf]
    %v1396 = vld [vmem:[#allocation2 + $0x194] sm:$0xf]
    %v1397 = vld [vmem:[#allocation2 + $0x198] sm:$0xf]
    %v1398 = vld [vmem:[#allocation2 + $0x19c] sm:$0xf]
    %v1399 = vld [vmem:[#allocation2 + $0x1a0] sm:$0xf]
    %v1400 = vld [vmem:[#allocation2 + $0x1a4] sm:$0xf]
    %v1401 = vld [vmem:[#allocation2 + $0x1a8] sm:$0xf]
    %v1402 = vld [vmem:[#allocation2 + $0x1ac] sm:$0xf]
    %v1403 = vld [vmem:[#allocation2 + $0x1b0] sm:$0xf]
    %v1404 = vld [vmem:[#allocation2 + $0x1b4] sm:$0xf]
    %v1405 = vld [vmem:[#allocation2 + $0x1b8] sm:$0xf]
    %v1406 = vld [vmem:[#allocation2 + $0x1bc] sm:$0xf]
    %v1407 = vld [vmem:[#allocation2 + $0x1c0] sm:$0xf]
    %v1408 = vld [vmem:[#allocation2 + $0x1c4] sm:$0xf]
    %v1409 = vld [vmem:[#allocation2 + $0x1c8] sm:$0xf]
    %v1410 = vld [vmem:[#allocation2 + $0x1cc] sm:$0xf]
    %v1411 = vld [vmem:[#allocation2 + $0x1d0] sm:$0xf]
    %v1412 = vld [vmem:[#allocation2 + $0x1d4] sm:$0xf]
    %v1413 = vld [vmem:[#allocation2 + $0x1d8] sm:$0xf]
    %v1414 = vld [vmem:[#allocation2 + $0x1dc] sm:$0xf]
    %v1415 = vld [vmem:[#allocation2 + $0x1e0] sm:$0xf]
    %v1416 = vld [vmem:[#allocation2 + $0x1e4] sm:$0xf]
    %v1417 = vld [vmem:[#allocation2 + $0x1e8] sm:$0xf]
    %v1418 = vld [vmem:[#allocation2 + $0x1ec] sm:$0xf]
    %v1419 = vld [vmem:[#allocation2 + $0x1f0] sm:$0xf]
    %v1420 = vld [vmem:[#allocation2 + $0x1f4] sm:$0xf]
    %v1421 = vld [vmem:[#allocation2 + $0x1f8] sm:$0xf]
    %v1422 = vld [vmem:[#allocation2 + $0x1fc] sm:$0xf]
    %v1423 = vld [vmem:[#allocation2 + $0x200] sm:$0xf]
    %v1424 = vld [vmem:[#allocation2 + $0x204] sm:$0xf]
    %v1425 = vld [vmem:[#allocation2 + $0x208] sm:$0xf]
    %v1426 = vld [vmem:[#allocation2 + $0x20c] sm:$0xf]
    %v1427 = vld [vmem:[#allocation2 + $0x210] sm:$0xf]
    %v1428 = vld [vmem:[#allocation2 + $0x214] sm:$0xf]
    %v1429 = vld [vmem:[#allocation2 + $0x218] sm:$0xf]
    %v1430 = vld [vmem:[#allocation2 + $0x21c] sm:$0xf]
    %v1431 = vld [vmem:[#allocation2 + $0x220] sm:$0xf]
    %v1432 = vld [vmem:[#allocation2 + $0x224] sm:$0xf]
    %v1433 = vld [vmem:[#allocation2 + $0x228] sm:$0xf]
    %v1434 = vld [vmem:[#allocation2 + $0x22c] sm:$0xf]
    %v1435 = vld [vmem:[#allocation2 + $0x230] sm:$0xf]
    %v1436 = vld [vmem:[#allocation2 + $0x234] sm:$0xf]
    %v1437 = vld [vmem:[#allocation2 + $0x238] sm:$0xf]
    %v1438 = vld [vmem:[#allocation2 + $0x23c] sm:$0xf]
    %v1439 = vld [vmem:[#allocation2 + $0x240] sm:$0xf]
    %v1440 = vld [vmem:[#allocation2 + $0x244] sm:$0xf]
    %v1441 = vld [vmem:[#allocation2 + $0x248] sm:$0xf]
    %v1442 = vld [vmem:[#allocation2 + $0x24c] sm:$0xf]
    %v1443 = vld [vmem:[#allocation2 + $0x250] sm:$0xf]
    %v1444 = vld [vmem:[#allocation2 + $0x254] sm:$0xf]
    %v1445 = vld [vmem:[#allocation2 + $0x258] sm:$0xf]
    %v1446 = vld [vmem:[#allocation2 + $0x25c] sm:$0xf]
    %v1447 = vld [vmem:[#allocation2 + $0x260] sm:$0xf]
    %v1448 = vld [vmem:[#allocation2 + $0x264] sm:$0xf]
    %v1449 = vld [vmem:[#allocation2 + $0x268] sm:$0xf]
    %v1450 = vld [vmem:[#allocation2 + $0x26c] sm:$0xf]
    %v1451 = vld [vmem:[#allocation2 + $0x270] sm:$0xf]
    %v1452 = vld [vmem:[#allocation2 + $0x274] sm:$0xf]
    %v1453 = vld [vmem:[#allocation2 + $0x278] sm:$0xf]
    %v1454 = vld [vmem:[#allocation2 + $0x27c] sm:$0xf]
    %v1455 = vld [vmem:[#allocation2 + $0x280] sm:$0xf]
    %v1456 = vld [vmem:[#allocation2 + $0x284] sm:$0xf]
    %v1457 = vld [vmem:[#allocation2 + $0x288] sm:$0xf]
    %v1458 = vld [vmem:[#allocation2 + $0x28c] sm:$0xf]
    %v1459 = vld [vmem:[#allocation2 + $0x290] sm:$0xf]
    %v1460 = vld [vmem:[#allocation2 + $0x294] sm:$0xf]
    %v1461 = vld [vmem:[#allocation2 + $0x298] sm:$0xf]
    %v1462 = vld [vmem:[#allocation2 + $0x29c] sm:$0xf]
    %v1463 = vld [vmem:[#allocation2 + $0x2a0] sm:$0xf]
    %v1464 = vld [vmem:[#allocation2 + $0x2a4] sm:$0xf]
    %v1465 = vld [vmem:[#allocation2 + $0x2a8] sm:$0xf]
    %v1466 = vld [vmem:[#allocation2 + $0x2ac] sm:$0xf]
    %v1467 = vld [vmem:[#allocation2 + $0x2b0] sm:$0xf]
    %v1468 = vld [vmem:[#allocation2 + $0x2b4] sm:$0xf]
    %v1469 = vld [vmem:[#allocation2 + $0x2b8] sm:$0xf]
    %v1470 = vld [vmem:[#allocation2 + $0x2bc] sm:$0xf]
    %v1471 = vld [vmem:[#allocation2 + $0x2c0] sm:$0xf]
    %v1472 = vld [vmem:[#allocation2 + $0x2c4] sm:$0xf]
    %v1473 = vld [vmem:[#allocation2 + $0x2c8] sm:$0xf]
    %v1474 = vld [vmem:[#allocation2 + $0x2cc] sm:$0xf]
    %v1475 = vld [vmem:[#allocation2 + $0x2d0] sm:$0xf]
    %v1476 = vld [vmem:[#allocation2 + $0x2d4] sm:$0xf]
    %v1477 = vld [vmem:[#allocation2 + $0x2d8] sm:$0xf]
    %v1478 = vld [vmem:[#allocation2 + $0x2dc] sm:$0xf]
    %v1479 = vld [vmem:[#allocation2 + $0x2e0] sm:$0xf]
    %v1480 = vld [vmem:[#allocation2 + $0x2e4] sm:$0xf]
    %v1481 = vld [vmem:[#allocation2 + $0x2e8] sm:$0xf]
    %v1482 = vld [vmem:[#allocation2 + $0x2ec] sm:$0xf]
    %v1483 = vld [vmem:[#allocation2 + $0x2f0] sm:$0xf]
    %v1484 = vld [vmem:[#allocation2 + $0x2f4] sm:$0xf]
    %v1485 = vld [vmem:[#allocation2 + $0x2f8] sm:$0xf]
    %v1486 = vld [vmem:[#allocation2 + $0x2fc] sm:$0xf]
    %v1487 = vld [vmem:[#allocation2 + $0x300] sm:$0xf]
    %v1488 = vld [vmem:[#allocation2 + $0x304] sm:$0xf]
    %v1489 = vld [vmem:[#allocation2 + $0x308] sm:$0xf]
    %v1490 = vld [vmem:[#allocation2 + $0x30c] sm:$0xf]
    %v1491 = vld [vmem:[#allocation2 + $0x310] sm:$0xf]
    %v1492 = vld [vmem:[#allocation2 + $0x314] sm:$0xf]
    %v1493 = vld [vmem:[#allocation2 + $0x318] sm:$0xf]
    %v1494 = vld [vmem:[#allocation2 + $0x31c] sm:$0xf]
    %v1495 = vld [vmem:[#allocation2 + $0x320] sm:$0xf]
    %v1496 = vld [vmem:[#allocation2 + $0x324] sm:$0xf]
    %v1497 = vld [vmem:[#allocation2 + $0x328] sm:$0xf]
    %v1498 = vld [vmem:[#allocation2 + $0x32c] sm:$0xf]
    %v1499 = vld [vmem:[#allocation2 + $0x330] sm:$0xf]
    %v1500 = vld [vmem:[#allocation2 + $0x334] sm:$0xf]
    %v1501 = vld [vmem:[#allocation2 + $0x338] sm:$0xf]
    %v1502 = vld [vmem:[#allocation2 + $0x33c] sm:$0xf]
    %v1503 = vld [vmem:[#allocation2 + $0x340] sm:$0xf]
    %v1504 = vld [vmem:[#allocation2 + $0x344] sm:$0xf]
    %v1505 = vld [vmem:[#allocation2 + $0x348] sm:$0xf]
    %v1506 = vld [vmem:[#allocation2 + $0x34c] sm:$0xf]
    %v1507 = vld [vmem:[#allocation2 + $0x350] sm:$0xf]
    %v1508 = vld [vmem:[#allocation2 + $0x354] sm:$0xf]
    %v1509 = vld [vmem:[#allocation2 + $0x358] sm:$0xf]
    %v1510 = vld [vmem:[#allocation2 + $0x35c] sm:$0xf]
    %v1511 = vld [vmem:[#allocation2 + $0x360] sm:$0xf]
    %v1512 = vld [vmem:[#allocation2 + $0x364] sm:$0xf]
    %v1513 = vld [vmem:[#allocation2 + $0x368] sm:$0xf]
    %v1514 = vld [vmem:[#allocation2 + $0x36c] sm:$0xf]
    %v1515 = vld [vmem:[#allocation2 + $0x370] sm:$0xf]
    %v1516 = vld [vmem:[#allocation2 + $0x374] sm:$0xf]
    %v1517 = vld [vmem:[#allocation2 + $0x378] sm:$0xf]
    %v1518 = vld [vmem:[#allocation2 + $0x37c] sm:$0xf]
    %v1519 = vld [vmem:[#allocation2 + $0x380] sm:$0xf]
    %v1520 = vld [vmem:[#allocation2 + $0x384] sm:$0xf]
    %v1521 = vld [vmem:[#allocation2 + $0x388] sm:$0xf]
    %v1522 = vld [vmem:[#allocation2 + $0x38c] sm:$0xf]
    %v1523 = vld [vmem:[#allocation2 + $0x390] sm:$0xf]
    %v1524 = vld [vmem:[#allocation2 + $0x394] sm:$0xf]
    %v1525 = vld [vmem:[#allocation2 + $0x398] sm:$0xf]
    %v1526 = vld [vmem:[#allocation2 + $0x39c] sm:$0xf]
    %v1527 = vld [vmem:[#allocation2 + $0x3a0] sm:$0xf]
    %v1528 = vld [vmem:[#allocation2 + $0x3a4] sm:$0xf]
    %v1529 = vld [vmem:[#allocation2 + $0x3a8] sm:$0xf]
    %v1530 = vld [vmem:[#allocation2 + $0x3ac] sm:$0xf]
    %v1531 = vld [vmem:[#allocation2 + $0x3b0] sm:$0xf]
    %v1532 = vld [vmem:[#allocation2 + $0x3b4] sm:$0xf]
    %v1533 = vld [vmem:[#allocation2 + $0x3b8] sm:$0xf]
    %v1534 = vld [vmem:[#allocation2 + $0x3bc] sm:$0xf]
    %v1535 = vld [vmem:[#allocation2 + $0x3c0] sm:$0xf]
    %v1536 = vld [vmem:[#allocation2 + $0x3c4] sm:$0xf]
    %v1537 = vld [vmem:[#allocation2 + $0x3c8] sm:$0xf]
    %v1538 = vld [vmem:[#allocation2 + $0x3cc] sm:$0xf]
    %v1539 = vld [vmem:[#allocation2 + $0x3d0] sm:$0xf]
    %v1540 = vld [vmem:[#allocation2 + $0x3d4] sm:$0xf]
    %v1541 = vld [vmem:[#allocation2 + $0x3d8] sm:$0xf]
    %v1542 = vld [vmem:[#allocation2 + $0x3dc] sm:$0xf]
    %v1543 = vld [vmem:[#allocation2 + $0x3e0] sm:$0xf]
    %v1544 = vld [vmem:[#allocation2 + $0x3e4] sm:$0xf]
    %v1545 = vld [vmem:[#allocation2 + $0x3e8] sm:$0xf]
    %v1546 = vld [vmem:[#allocation2 + $0x3ec] sm:$0xf]
    %v1547 = vld [vmem:[#allocation2 + $0x3f0] sm:$0xf]
    %v1548 = vld [vmem:[#allocation2 + $0x3f4] sm:$0xf]
    %v1549 = vld [vmem:[#allocation2 + $0x3f8] sm:$0xf]
    %v1550 = vld [vmem:[#allocation2 + $0x3fc] sm:$0xf]
    %v1551 = vld [vmem:[%s9] sm:$0x1]
    %v1553 = vperm.slane %v1551, 0
    %v1811 = vunpack.c.l.b16 %v1295
    %v1812 = vunpack.c.l.b16 %v1296
    %v1813 = vunpack.c.l.b16 %v1297
    %v1814 = vunpack.c.l.b16 %v1298
    %v1815 = vunpack.c.l.b16 %v1299
    %v1816 = vunpack.c.l.b16 %v1300
    %v1817 = vunpack.c.l.b16 %v1301
    %v1818 = vunpack.c.l.b16 %v1302
    %v1819 = vunpack.c.l.b16 %v1303
    %v1820 = vunpack.c.l.b16 %v1304
    %v1821 = vunpack.c.l.b16 %v1305
    %v1822 = vunpack.c.l.b16 %v1306
    %v1823 = vunpack.c.l.b16 %v1307
    %v1824 = vunpack.c.l.b16 %v1308
    %v1825 = vunpack.c.l.b16 %v1309
    %v1826 = vunpack.c.l.b16 %v1310
    %v1827 = vunpack.c.l.b16 %v1311
    %v1828 = vunpack.c.l.b16 %v1312
    %v1829 = vunpack.c.l.b16 %v1313
    %v1830 = vunpack.c.l.b16 %v1314
    %v1831 = vunpack.c.l.b16 %v1315
    %v1832 = vunpack.c.l.b16 %v1316
    %v1833 = vunpack.c.l.b16 %v1317
    %v1834 = vunpack.c.l.b16 %v1318
    %v1835 = vunpack.c.l.b16 %v1319
    %v1836 = vunpack.c.l.b16 %v1320
    %v1837 = vunpack.c.l.b16 %v1321
    %v1838 = vunpack.c.l.b16 %v1322
    %v1839 = vunpack.c.l.b16 %v1323
    %v1840 = vunpack.c.l.b16 %v1324
    %v1841 = vunpack.c.l.b16 %v1325
    %v1842 = vunpack.c.l.b16 %v1326
    %v1843 = vunpack.c.l.b16 %v1327
    %v1844 = vunpack.c.l.b16 %v1328
    %v1845 = vunpack.c.l.b16 %v1329
    %v1846 = vunpack.c.l.b16 %v1330
    %v1847 = vunpack.c.l.b16 %v1331
    %v1848 = vunpack.c.l.b16 %v1332
    %v1849 = vunpack.c.l.b16 %v1333
    %v1850 = vunpack.c.l.b16 %v1334
    %v1851 = vunpack.c.l.b16 %v1335
    %v1852 = vunpack.c.l.b16 %v1336
    %v1853 = vunpack.c.l.b16 %v1337
    %v1854 = vunpack.c.l.b16 %v1338
    %v1855 = vunpack.c.l.b16 %v1339
    %v1856 = vunpack.c.l.b16 %v1340
    %v1857 = vunpack.c.l.b16 %v1341
    %v1858 = vunpack.c.l.b16 %v1342
    %v1859 = vunpack.c.l.b16 %v1343
    %v1860 = vunpack.c.l.b16 %v1344
    %v1861 = vunpack.c.l.b16 %v1345
    %v1862 = vunpack.c.l.b16 %v1346
    %v1863 = vunpack.c.l.b16 %v1347
    %v1864 = vunpack.c.l.b16 %v1348
    %v1865 = vunpack.c.l.b16 %v1349
    %v1866 = vunpack.c.l.b16 %v1350
    %v1867 = vunpack.c.l.b16 %v1351
    %v1868 = vunpack.c.l.b16 %v1352
    %v1869 = vunpack.c.l.b16 %v1353
    %v1870 = vunpack.c.l.b16 %v1354
    %v1871 = vunpack.c.l.b16 %v1355
    %v1872 = vunpack.c.l.b16 %v1356
    %v1873 = vunpack.c.l.b16 %v1357
    %v1874 = vunpack.c.l.b16 %v1358
    %v1875 = vunpack.c.l.b16 %v1359
    %v1876 = vunpack.c.l.b16 %v1360
    %v1877 = vunpack.c.l.b16 %v1361
    %v1878 = vunpack.c.l.b16 %v1362
    %v1879 = vunpack.c.l.b16 %v1363
    %v1880 = vunpack.c.l.b16 %v1364
    %v1881 = vunpack.c.l.b16 %v1365
    %v1882 = vunpack.c.l.b16 %v1366
    %v1883 = vunpack.c.l.b16 %v1367
    %v1884 = vunpack.c.l.b16 %v1368
    %v1885 = vunpack.c.l.b16 %v1369
    %v1886 = vunpack.c.l.b16 %v1370
    %v1887 = vunpack.c.l.b16 %v1371
    %v1888 = vunpack.c.l.b16 %v1372
    %v1889 = vunpack.c.l.b16 %v1373
    %v1890 = vunpack.c.l.b16 %v1374
    %v1891 = vunpack.c.l.b16 %v1375
    %v1892 = vunpack.c.l.b16 %v1376
    %v1893 = vunpack.c.l.b16 %v1377
    %v1894 = vunpack.c.l.b16 %v1378
    %v1895 = vunpack.c.l.b16 %v1379
    %v1896 = vunpack.c.l.b16 %v1380
    %v1897 = vunpack.c.l.b16 %v1381
    %v1898 = vunpack.c.l.b16 %v1382
    %v1899 = vunpack.c.l.b16 %v1383
    %v1900 = vunpack.c.l.b16 %v1384
    %v1901 = vunpack.c.l.b16 %v1385
    %v1902 = vunpack.c.l.b16 %v1386
    %v1903 = vunpack.c.l.b16 %v1387
    %v1904 = vunpack.c.l.b16 %v1388
    %v1905 = vunpack.c.l.b16 %v1389
    %v1906 = vunpack.c.l.b16 %v1390
    %v1907 = vunpack.c.l.b16 %v1391
    %v1908 = vunpack.c.l.b16 %v1392
    %v1909 = vunpack.c.l.b16 %v1393
    %v1910 = vunpack.c.l.b16 %v1394
    %v1911 = vunpack.c.l.b16 %v1395
    %v1912 = vunpack.c.l.b16 %v1396
    %v1913 = vunpack.c.l.b16 %v1397
    %v1914 = vunpack.c.l.b16 %v1398
    %v1915 = vunpack.c.l.b16 %v1399
    %v1916 = vunpack.c.l.b16 %v1400
    %v1917 = vunpack.c.l.b16 %v1401
    %v1918 = vunpack.c.l.b16 %v1402
    %v1919 = vunpack.c.l.b16 %v1403
    %v1920 = vunpack.c.l.b16 %v1404
    %v1921 = vunpack.c.l.b16 %v1405
    %v1922 = vunpack.c.l.b16 %v1406
    %v1923 = vunpack.c.l.b16 %v1407
    %v1924 = vunpack.c.l.b16 %v1408
    %v1925 = vunpack.c.l.b16 %v1409
    %v1926 = vunpack.c.l.b16 %v1410
    %v1927 = vunpack.c.l.b16 %v1411
    %v1928 = vunpack.c.l.b16 %v1412
    %v1929 = vunpack.c.l.b16 %v1413
    %v1930 = vunpack.c.l.b16 %v1414
    %v1931 = vunpack.c.l.b16 %v1415
    %v1932 = vunpack.c.l.b16 %v1416
    %v1933 = vunpack.c.l.b16 %v1417
    %v1934 = vunpack.c.l.b16 %v1418
    %v1935 = vunpack.c.l.b16 %v1419
    %v1936 = vunpack.c.l.b16 %v1420
    %v1937 = vunpack.c.l.b16 %v1421
    %v1938 = vunpack.c.l.b16 %v1422
    %v1939 = vunpack.c.l.b16 %v1423
    %v1940 = vunpack.c.l.b16 %v1424
    %v1941 = vunpack.c.l.b16 %v1425
    %v1942 = vunpack.c.l.b16 %v1426
    %v1943 = vunpack.c.l.b16 %v1427
    %v1944 = vunpack.c.l.b16 %v1428
    %v1945 = vunpack.c.l.b16 %v1429
    %v1946 = vunpack.c.l.b16 %v1430
    %v1947 = vunpack.c.l.b16 %v1431
    %v1948 = vunpack.c.l.b16 %v1432
    %v1949 = vunpack.c.l.b16 %v1433
    %v1950 = vunpack.c.l.b16 %v1434
    %v1951 = vunpack.c.l.b16 %v1435
    %v1952 = vunpack.c.l.b16 %v1436
    %v1953 = vunpack.c.l.b16 %v1437
    %v1954 = vunpack.c.l.b16 %v1438
    %v1955 = vunpack.c.l.b16 %v1439
    %v1956 = vunpack.c.l.b16 %v1440
    %v1957 = vunpack.c.l.b16 %v1441
    %v1958 = vunpack.c.l.b16 %v1442
    %v1959 = vunpack.c.l.b16 %v1443
    %v1960 = vunpack.c.l.b16 %v1444
    %v1961 = vunpack.c.l.b16 %v1445
    %v1962 = vunpack.c.l.b16 %v1446
    %v1963 = vunpack.c.l.b16 %v1447
    %v1964 = vunpack.c.l.b16 %v1448
    %v1965 = vunpack.c.l.b16 %v1449
    %v1966 = vunpack.c.l.b16 %v1450
    %v1967 = vunpack.c.l.b16 %v1451
    %v1968 = vunpack.c.l.b16 %v1452
    %v1969 = vunpack.c.l.b16 %v1453
    %v1970 = vunpack.c.l.b16 %v1454
    %v1971 = vunpack.c.l.b16 %v1455
    %v1972 = vunpack.c.l.b16 %v1456
    %v1973 = vunpack.c.l.b16 %v1457
    %v1974 = vunpack.c.l.b16 %v1458
    %v1975 = vunpack.c.l.b16 %v1459
    %v1976 = vunpack.c.l.b16 %v1460
    %v1977 = vunpack.c.l.b16 %v1461
    %v1978 = vunpack.c.l.b16 %v1462
    %v1979 = vunpack.c.l.b16 %v1463
    %v1980 = vunpack.c.l.b16 %v1464
    %v1981 = vunpack.c.l.b16 %v1465
    %v1982 = vunpack.c.l.b16 %v1466
    %v1983 = vunpack.c.l.b16 %v1467
    %v1984 = vunpack.c.l.b16 %v1468
    %v1985 = vunpack.c.l.b16 %v1469
    %v1986 = vunpack.c.l.b16 %v1470
    %v1987 = vunpack.c.l.b16 %v1471
    %v1988 = vunpack.c.l.b16 %v1472
    %v1989 = vunpack.c.l.b16 %v1473
    %v1990 = vunpack.c.l.b16 %v1474
    %v1991 = vunpack.c.l.b16 %v1475
    %v1992 = vunpack.c.l.b16 %v1476
    %v1993 = vunpack.c.l.b16 %v1477
    %v1994 = vunpack.c.l.b16 %v1478
    %v1995 = vunpack.c.l.b16 %v1479
    %v1996 = vunpack.c.l.b16 %v1480
    %v1997 = vunpack.c.l.b16 %v1481
    %v1998 = vunpack.c.l.b16 %v1482
    %v1999 = vunpack.c.l.b16 %v1483
    %v2000 = vunpack.c.l.b16 %v1484
    %v2001 = vunpack.c.l.b16 %v1485
    %v2002 = vunpack.c.l.b16 %v1486
    %v2003 = vunpack.c.l.b16 %v1487
    %v2004 = vunpack.c.l.b16 %v1488
    %v2005 = vunpack.c.l.b16 %v1489
    %v2006 = vunpack.c.l.b16 %v1490
    %v2007 = vunpack.c.l.b16 %v1491
    %v2008 = vunpack.c.l.b16 %v1492
    %v2009 = vunpack.c.l.b16 %v1493
    %v2010 = vunpack.c.l.b16 %v1494
    %v2011 = vunpack.c.l.b16 %v1495
    %v2012 = vunpack.c.l.b16 %v1496
    %v2013 = vunpack.c.l.b16 %v1497
    %v2014 = vunpack.c.l.b16 %v1498
    %v2015 = vunpack.c.l.b16 %v1499
    %v2016 = vunpack.c.l.b16 %v1500
    %v2017 = vunpack.c.l.b16 %v1501
    %v2018 = vunpack.c.l.b16 %v1502
    %v2019 = vunpack.c.l.b16 %v1503
    %v2020 = vunpack.c.l.b16 %v1504
    %v2021 = vunpack.c.l.b16 %v1505
    %v2022 = vunpack.c.l.b16 %v1506
    %v2023 = vunpack.c.l.b16 %v1507
    %v2024 = vunpack.c.l.b16 %v1508
    %v2025 = vunpack.c.l.b16 %v1509
    %v2026 = vunpack.c.l.b16 %v1510
    %v2027 = vunpack.c.l.b16 %v1511
    %v2028 = vunpack.c.l.b16 %v1512
    %v2029 = vunpack.c.l.b16 %v1513
    %v2030 = vunpack.c.l.b16 %v1514
    %v2031 = vunpack.c.l.b16 %v1515
    %v2032 = vunpack.c.l.b16 %v1516
    %v2033 = vunpack.c.l.b16 %v1517
    %v2034 = vunpack.c.l.b16 %v1518
    %v2035 = vunpack.c.l.b16 %v1519
    %v2036 = vunpack.c.l.b16 %v1520
    %v2037 = vunpack.c.l.b16 %v1521
    %v2038 = vunpack.c.l.b16 %v1522
    %v2039 = vunpack.c.l.b16 %v1523
    %v2040 = vunpack.c.l.b16 %v1524
    %v2041 = vunpack.c.l.b16 %v1525
    %v2042 = vunpack.c.l.b16 %v1526
    %v2043 = vunpack.c.l.b16 %v1527
    %v2044 = vunpack.c.l.b16 %v1528
    %v2045 = vunpack.c.l.b16 %v1529
    %v2046 = vunpack.c.l.b16 %v1530
    %v2047 = vunpack.c.l.b16 %v1531
    %v2048 = vunpack.c.l.b16 %v1532
    %v2049 = vunpack.c.l.b16 %v1533
    %v2050 = vunpack.c.l.b16 %v1534
    %v2051 = vunpack.c.l.b16 %v1535
    %v2052 = vunpack.c.l.b16 %v1536
    %v2053 = vunpack.c.l.b16 %v1537
    %v2054 = vunpack.c.l.b16 %v1538
    %v2055 = vunpack.c.l.b16 %v1539
    %v2056 = vunpack.c.l.b16 %v1540
    %v2057 = vunpack.c.l.b16 %v1541
    %v2058 = vunpack.c.l.b16 %v1542
    %v2059 = vunpack.c.l.b16 %v1543
    %v2060 = vunpack.c.l.b16 %v1544
    %v2061 = vunpack.c.l.b16 %v1545
    %v2062 = vunpack.c.l.b16 %v1546
    %v2063 = vunpack.c.l.b16 %v1547
    %v2064 = vunpack.c.l.b16 %v1548
    %v2065 = vunpack.c.l.b16 %v1549
    %v2066 = vunpack.c.l.b16 %v1550
    %v2067 = vpack.c.b16 %v1812, %v1811
    %v2068 = vpack.c.b16 %v1814, %v1813
    %v2069 = vpack.c.b16 %v1816, %v1815
    %v2070 = vpack.c.b16 %v1818, %v1817
    %v2071 = vpack.c.b16 %v1820, %v1819
    %v2072 = vpack.c.b16 %v1822, %v1821
    %v2073 = vpack.c.b16 %v1824, %v1823
    %v2074 = vpack.c.b16 %v1826, %v1825
    %v2075 = vpack.c.b16 %v1828, %v1827
    %v2076 = vpack.c.b16 %v1830, %v1829
    %v2077 = vpack.c.b16 %v1832, %v1831
    %v2078 = vpack.c.b16 %v1834, %v1833
    %v2079 = vpack.c.b16 %v1836, %v1835
    %v2080 = vpack.c.b16 %v1838, %v1837
    %v2081 = vpack.c.b16 %v1840, %v1839
    %v2082 = vpack.c.b16 %v1842, %v1841
    %v2083 = vpack.c.b16 %v1844, %v1843
    %v2084 = vpack.c.b16 %v1846, %v1845
    %v2085 = vpack.c.b16 %v1848, %v1847
    %v2086 = vpack.c.b16 %v1850, %v1849
    %v2087 = vpack.c.b16 %v1852, %v1851
    %v2088 = vpack.c.b16 %v1854, %v1853
    %v2089 = vpack.c.b16 %v1856, %v1855
    %v2090 = vpack.c.b16 %v1858, %v1857
    %v2091 = vpack.c.b16 %v1860, %v1859
    %v2092 = vpack.c.b16 %v1862, %v1861
    %v2093 = vpack.c.b16 %v1864, %v1863
    %v2094 = vpack.c.b16 %v1866, %v1865
    %v2095 = vpack.c.b16 %v1868, %v1867
    %v2096 = vpack.c.b16 %v1870, %v1869
    %v2097 = vpack.c.b16 %v1872, %v1871
    %v2098 = vpack.c.b16 %v1874, %v1873
    %v2099 = vpack.c.b16 %v1876, %v1875
    %v2100 = vpack.c.b16 %v1878, %v1877
    %v2101 = vpack.c.b16 %v1880, %v1879
    %v2102 = vpack.c.b16 %v1882, %v1881
    %v2103 = vpack.c.b16 %v1884, %v1883
    %v2104 = vpack.c.b16 %v1886, %v1885
    %v2105 = vpack.c.b16 %v1888, %v1887
    %v2106 = vpack.c.b16 %v1890, %v1889
    %v2107 = vpack.c.b16 %v1892, %v1891
    %v2108 = vpack.c.b16 %v1894, %v1893
    %v2109 = vpack.c.b16 %v1896, %v1895
    %v2110 = vpack.c.b16 %v1898, %v1897
    %v2111 = vpack.c.b16 %v1900, %v1899
    %v2112 = vpack.c.b16 %v1902, %v1901
    %v2113 = vpack.c.b16 %v1904, %v1903
    %v2114 = vpack.c.b16 %v1906, %v1905
    %v2115 = vpack.c.b16 %v1908, %v1907
    %v2116 = vpack.c.b16 %v1910, %v1909
    %v2117 = vpack.c.b16 %v1912, %v1911
    %v2118 = vpack.c.b16 %v1914, %v1913
    %v2119 = vpack.c.b16 %v1916, %v1915
    %v2120 = vpack.c.b16 %v1918, %v1917
    %v2121 = vpack.c.b16 %v1920, %v1919
    %v2122 = vpack.c.b16 %v1922, %v1921
    %v2123 = vpack.c.b16 %v1924, %v1923
    %v2124 = vpack.c.b16 %v1926, %v1925
    %v2125 = vpack.c.b16 %v1928, %v1927
    %v2126 = vpack.c.b16 %v1930, %v1929
    %v2127 = vpack.c.b16 %v1932, %v1931
    %v2128 = vpack.c.b16 %v1934, %v1933
    %v2129 = vpack.c.b16 %v1936, %v1935
    %v2130 = vpack.c.b16 %v1938, %v1937
    %v2131 = vpack.c.b16 %v1940, %v1939
    %v2132 = vpack.c.b16 %v1942, %v1941
    %v2133 = vpack.c.b16 %v1944, %v1943
    %v2134 = vpack.c.b16 %v1946, %v1945
    %v2135 = vpack.c.b16 %v1948, %v1947
    %v2136 = vpack.c.b16 %v1950, %v1949
    %v2137 = vpack.c.b16 %v1952, %v1951
    %v2138 = vpack.c.b16 %v1954, %v1953
    %v2139 = vpack.c.b16 %v1956, %v1955
    %v2140 = vpack.c.b16 %v1958, %v1957
    %v2141 = vpack.c.b16 %v1960, %v1959
    %v2142 = vpack.c.b16 %v1962, %v1961
    %v2143 = vpack.c.b16 %v1964, %v1963
    %v2144 = vpack.c.b16 %v1966, %v1965
    %v2145 = vpack.c.b16 %v1968, %v1967
    %v2146 = vpack.c.b16 %v1970, %v1969
    %v2147 = vpack.c.b16 %v1972, %v1971
    %v2148 = vpack.c.b16 %v1974, %v1973
    %v2149 = vpack.c.b16 %v1976, %v1975
    %v2150 = vpack.c.b16 %v1978, %v1977
    %v2151 = vpack.c.b16 %v1980, %v1979
    %v2152 = vpack.c.b16 %v1982, %v1981
    %v2153 = vpack.c.b16 %v1984, %v1983
    %v2154 = vpack.c.b16 %v1986, %v1985
    %v2155 = vpack.c.b16 %v1988, %v1987
    %v2156 = vpack.c.b16 %v1990, %v1989
    %v2157 = vpack.c.b16 %v1992, %v1991
    %v2158 = vpack.c.b16 %v1994, %v1993
    %v2159 = vpack.c.b16 %v1996, %v1995
    %v2160 = vpack.c.b16 %v1998, %v1997
    %v2161 = vpack.c.b16 %v2000, %v1999
    %v2162 = vpack.c.b16 %v2002, %v2001
    %v2163 = vpack.c.b16 %v2004, %v2003
    %v2164 = vpack.c.b16 %v2006, %v2005
    %v2165 = vpack.c.b16 %v2008, %v2007
    %v2166 = vpack.c.b16 %v2010, %v2009
    %v2167 = vpack.c.b16 %v2012, %v2011
    %v2168 = vpack.c.b16 %v2014, %v2013
    %v2169 = vpack.c.b16 %v2016, %v2015
    %v2170 = vpack.c.b16 %v2018, %v2017
    %v2171 = vpack.c.b16 %v2020, %v2019
    %v2172 = vpack.c.b16 %v2022, %v2021
    %v2173 = vpack.c.b16 %v2024, %v2023
    %v2174 = vpack.c.b16 %v2026, %v2025
    %v2175 = vpack.c.b16 %v2028, %v2027
    %v2176 = vpack.c.b16 %v2030, %v2029
    %v2177 = vpack.c.b16 %v2032, %v2031
    %v2178 = vpack.c.b16 %v2034, %v2033
    %v2179 = vpack.c.b16 %v2036, %v2035
    %v2180 = vpack.c.b16 %v2038, %v2037
    %v2181 = vpack.c.b16 %v2040, %v2039
    %v2182 = vpack.c.b16 %v2042, %v2041
    %v2183 = vpack.c.b16 %v2044, %v2043
    %v2184 = vpack.c.b16 %v2046, %v2045
    %v2185 = vpack.c.b16 %v2048, %v2047
    %v2186 = vpack.c.b16 %v2050, %v2049
    %v2187 = vpack.c.b16 %v2052, %v2051
    %v2188 = vpack.c.b16 %v2054, %v2053
    %v2189 = vpack.c.b16 %v2056, %v2055
    %v2190 = vpack.c.b16 %v2058, %v2057
    %v2191 = vpack.c.b16 %v2060, %v2059
    %v2192 = vpack.c.b16 %v2062, %v2061
    %v2193 = vpack.c.b16 %v2064, %v2063
    %v2194 = vpack.c.b16 %v2066, %v2065
    %2323 = vmatpush.bf16.msra.mxu0 %v2074
    %2324 = vmatpush.bf16.msra.mxu0 %v2073
    %2325 = vmatpush.bf16.msra.mxu0 %v2072
    %2326 = vmatpush.bf16.msra.mxu0 %v2071
    %2327 = vmatpush.bf16.msra.mxu0 %v2070
    %2328 = vmatpush.bf16.msra.mxu0 %v2069
    %2329 = vmatpush.bf16.msra.mxu0 %v2068
    %2330 = vmatpush.bf16.msra.mxu0 %v2067
    %2331 = vmatmul.bf16.gmra.mxu0 %v1193
    %v2332 = vpop.f32.mrf.mxu0
    %v2333 = vadd.f32 %v1553, %v2332
    %v2334 = vpop.f32.mrf.mxu0
    %2335 = vdwg.mxu0
    %2336 = vmatpush.bf16.msra.mxu0 %v2082
    %2337 = vmatpush.bf16.msra.mxu0 %v2081
    %2338 = vmatpush.bf16.msra.mxu0 %v2080
    %2339 = vmatpush.bf16.msra.mxu0 %v2079
    %2340 = vmatpush.bf16.msra.mxu0 %v2078
    %2341 = vmatpush.bf16.msra.mxu0 %v2077
    %2342 = vmatpush.bf16.msra.mxu0 %v2076
    %2343 = vmatpush.bf16.msra.mxu0 %v2075
    %2344 = vmatmul.bf16.gmra.mxu0 %v1197
    %v2345 = vpop.f32.mrf.mxu0
    %v2346 = vadd.f32 %v2333, %v2345
    %v2347 = vpop.f32.mrf.mxu0
    %2348 = vdwg.mxu0
    %2349 = vmatpush.bf16.msra.mxu0 %v2090
    %2350 = vmatpush.bf16.msra.mxu0 %v2089
    %2351 = vmatpush.bf16.msra.mxu0 %v2088
    %2352 = vmatpush.bf16.msra.mxu0 %v2087
    %2353 = vmatpush.bf16.msra.mxu0 %v2086
    %2354 = vmatpush.bf16.msra.mxu0 %v2085
    %2355 = vmatpush.bf16.msra.mxu0 %v2084
    %2356 = vmatpush.bf16.msra.mxu0 %v2083
    %2357 = vmatmul.bf16.gmra.mxu0 %v1201
    %v2358 = vpop.f32.mrf.mxu0
    %v2359 = vadd.f32 %v2346, %v2358
    %v2360 = vpop.f32.mrf.mxu0
    %2361 = vdwg.mxu0
    %2362 = vmatpush.bf16.msra.mxu0 %v2098
    %2363 = vmatpush.bf16.msra.mxu0 %v2097
    %2364 = vmatpush.bf16.msra.mxu0 %v2096
    %2365 = vmatpush.bf16.msra.mxu0 %v2095
    %2366 = vmatpush.bf16.msra.mxu0 %v2094
    %2367 = vmatpush.bf16.msra.mxu0 %v2093
    %2368 = vmatpush.bf16.msra.mxu0 %v2092
    %2369 = vmatpush.bf16.msra.mxu0 %v2091
    %2370 = vmatmul.bf16.gmra.mxu0 %v1205
    %v2371 = vpop.f32.mrf.mxu0
    %v2372 = vadd.f32 %v2359, %v2371
    %v2373 = vpop.f32.mrf.mxu0
    %2374 = vdwg.mxu0
    %2375 = vmatpush.bf16.msra.mxu0 %v2106
    %2376 = vmatpush.bf16.msra.mxu0 %v2105
    %2377 = vmatpush.bf16.msra.mxu0 %v2104
    %2378 = vmatpush.bf16.msra.mxu0 %v2103
    %2379 = vmatpush.bf16.msra.mxu0 %v2102
    %2380 = vmatpush.bf16.msra.mxu0 %v2101
    %2381 = vmatpush.bf16.msra.mxu0 %v2100
    %2382 = vmatpush.bf16.msra.mxu0 %v2099
    %2383 = vmatmul.bf16.gmra.mxu0 %v1209
    %v2384 = vpop.f32.mrf.mxu0
    %v2385 = vadd.f32 %v2372, %v2384
    %v2386 = vpop.f32.mrf.mxu0
    %2387 = vdwg.mxu0
    %2388 = vmatpush.bf16.msra.mxu0 %v2114
    %2389 = vmatpush.bf16.msra.mxu0 %v2113
    %2390 = vmatpush.bf16.msra.mxu0 %v2112
    %2391 = vmatpush.bf16.msra.mxu0 %v2111
    %2392 = vmatpush.bf16.msra.mxu0 %v2110
    %2393 = vmatpush.bf16.msra.mxu0 %v2109
    %2394 = vmatpush.bf16.msra.mxu0 %v2108
    %2395 = vmatpush.bf16.msra.mxu0 %v2107
    %2396 = vmatmul.bf16.gmra.mxu0 %v1213
    %v2397 = vpop.f32.mrf.mxu0
    %v2398 = vadd.f32 %v2385, %v2397
    %v2399 = vpop.f32.mrf.mxu0
    %2400 = vdwg.mxu0
    %2401 = vmatpush.bf16.msra.mxu0 %v2122
    %2402 = vmatpush.bf16.msra.mxu0 %v2121
    %2403 = vmatpush.bf16.msra.mxu0 %v2120
    %2404 = vmatpush.bf16.msra.mxu0 %v2119
    %2405 = vmatpush.bf16.msra.mxu0 %v2118
    %2406 = vmatpush.bf16.msra.mxu0 %v2117
    %2407 = vmatpush.bf16.msra.mxu0 %v2116
    %2408 = vmatpush.bf16.msra.mxu0 %v2115
    %2409 = vmatmul.bf16.gmra.mxu0 %v1217
    %v2410 = vpop.f32.mrf.mxu0
    %v2411 = vadd.f32 %v2398, %v2410
    %v2412 = vpop.f32.mrf.mxu0
    %2413 = vdwg.mxu0
    %2414 = vmatpush.bf16.msra.mxu0 %v2130
    %2415 = vmatpush.bf16.msra.mxu0 %v2129
    %2416 = vmatpush.bf16.msra.mxu0 %v2128
    %2417 = vmatpush.bf16.msra.mxu0 %v2127
    %2418 = vmatpush.bf16.msra.mxu0 %v2126
    %2419 = vmatpush.bf16.msra.mxu0 %v2125
    %2420 = vmatpush.bf16.msra.mxu0 %v2124
    %2421 = vmatpush.bf16.msra.mxu0 %v2123
    %2422 = vmatmul.bf16.gmra.mxu0 %v1221
    %v2423 = vpop.f32.mrf.mxu0
    %v2424 = vadd.f32 %v2411, %v2423
    %v2425 = vpop.f32.mrf.mxu0
    %2426 = vdwg.mxu0
    %2427 = vmatpush.bf16.msra.mxu0 %v2138
    %2428 = vmatpush.bf16.msra.mxu0 %v2137
    %2429 = vmatpush.bf16.msra.mxu0 %v2136
    %2430 = vmatpush.bf16.msra.mxu0 %v2135
    %2431 = vmatpush.bf16.msra.mxu0 %v2134
    %2432 = vmatpush.bf16.msra.mxu0 %v2133
    %2433 = vmatpush.bf16.msra.mxu0 %v2132
    %2434 = vmatpush.bf16.msra.mxu0 %v2131
    %2435 = vmatmul.bf16.gmra.mxu0 %v1265
    %v2436 = vpop.f32.mrf.mxu0
    %v2437 = vadd.f32 %v2424, %v2436
    %v2438 = vpop.f32.mrf.mxu0
    %2439 = vdwg.mxu0
    %2440 = vmatpush.bf16.msra.mxu0 %v2146
    %2441 = vmatpush.bf16.msra.mxu0 %v2145
    %2442 = vmatpush.bf16.msra.mxu0 %v2144
    %2443 = vmatpush.bf16.msra.mxu0 %v2143
    %2444 = vmatpush.bf16.msra.mxu0 %v2142
    %2445 = vmatpush.bf16.msra.mxu0 %v2141
    %2446 = vmatpush.bf16.msra.mxu0 %v2140
    %2447 = vmatpush.bf16.msra.mxu0 %v2139
    %2448 = vmatmul.bf16.gmra.mxu0 %v1269
    %v2449 = vpop.f32.mrf.mxu0
    %v2450 = vadd.f32 %v2437, %v2449
    %v2451 = vpop.f32.mrf.mxu0
    %2452 = vdwg.mxu0
    %2453 = vmatpush.bf16.msra.mxu0 %v2154
    %2454 = vmatpush.bf16.msra.mxu0 %v2153
    %2455 = vmatpush.bf16.msra.mxu0 %v2152
    %2456 = vmatpush.bf16.msra.mxu0 %v2151
    %2457 = vmatpush.bf16.msra.mxu0 %v2150
    %2458 = vmatpush.bf16.msra.mxu0 %v2149
    %2459 = vmatpush.bf16.msra.mxu0 %v2148
    %2460 = vmatpush.bf16.msra.mxu0 %v2147
    %2461 = vmatmul.bf16.gmra.mxu0 %v1273
    %v2462 = vpop.f32.mrf.mxu0
    %v2463 = vadd.f32 %v2450, %v2462
    %v2464 = vpop.f32.mrf.mxu0
    %2465 = vdwg.mxu0
    %2466 = vmatpush.bf16.msra.mxu0 %v2162
    %2467 = vmatpush.bf16.msra.mxu0 %v2161
    %2468 = vmatpush.bf16.msra.mxu0 %v2160
    %2469 = vmatpush.bf16.msra.mxu0 %v2159
    %2470 = vmatpush.bf16.msra.mxu0 %v2158
    %2471 = vmatpush.bf16.msra.mxu0 %v2157
    %2472 = vmatpush.bf16.msra.mxu0 %v2156
    %2473 = vmatpush.bf16.msra.mxu0 %v2155
    %2474 = vmatmul.bf16.gmra.mxu0 %v1277
    %v2475 = vpop.f32.mrf.mxu0
    %v2476 = vadd.f32 %v2463, %v2475
    %v2477 = vpop.f32.mrf.mxu0
    %2478 = vdwg.mxu0
    %2479 = vmatpush.bf16.msra.mxu0 %v2170
    %2480 = vmatpush.bf16.msra.mxu0 %v2169
    %2481 = vmatpush.bf16.msra.mxu0 %v2168
    %2482 = vmatpush.bf16.msra.mxu0 %v2167
    %2483 = vmatpush.bf16.msra.mxu0 %v2166
    %2484 = vmatpush.bf16.msra.mxu0 %v2165
    %2485 = vmatpush.bf16.msra.mxu0 %v2164
    %2486 = vmatpush.bf16.msra.mxu0 %v2163
    %2487 = vmatmul.bf16.gmra.mxu0 %v1281
    %v2488 = vpop.f32.mrf.mxu0
    %v2489 = vadd.f32 %v2476, %v2488
    %v2490 = vpop.f32.mrf.mxu0
    %2491 = vdwg.mxu0
    %2492 = vmatpush.bf16.msra.mxu0 %v2178
    %2493 = vmatpush.bf16.msra.mxu0 %v2177
    %2494 = vmatpush.bf16.msra.mxu0 %v2176
    %2495 = vmatpush.bf16.msra.mxu0 %v2175
    %2496 = vmatpush.bf16.msra.mxu0 %v2174
    %2497 = vmatpush.bf16.msra.mxu0 %v2173
    %2498 = vmatpush.bf16.msra.mxu0 %v2172
    %2499 = vmatpush.bf16.msra.mxu0 %v2171
    %2500 = vmatmul.bf16.gmra.mxu0 %v1285
    %v2501 = vpop.f32.mrf.mxu0
    %v2502 = vadd.f32 %v2489, %v2501
    %v2503 = vpop.f32.mrf.mxu0
    %2504 = vdwg.mxu0
    %2505 = vmatpush.bf16.msra.mxu0 %v2186
    %2506 = vmatpush.bf16.msra.mxu0 %v2185
    %2507 = vmatpush.bf16.msra.mxu0 %v2184
    %2508 = vmatpush.bf16.msra.mxu0 %v2183
    %2509 = vmatpush.bf16.msra.mxu0 %v2182
    %2510 = vmatpush.bf16.msra.mxu0 %v2181
    %2511 = vmatpush.bf16.msra.mxu0 %v2180
    %2512 = vmatpush.bf16.msra.mxu0 %v2179
    %2513 = vmatmul.bf16.gmra.mxu0 %v1289
    %v2514 = vpop.f32.mrf.mxu0
    %v2515 = vadd.f32 %v2502, %v2514
    %v2516 = vpop.f32.mrf.mxu0
    %2517 = vdwg.mxu0
    %2518 = vmatpush.bf16.msra.mxu0 %v2194
    %2519 = vmatpush.bf16.msra.mxu0 %v2193
    %2520 = vmatpush.bf16.msra.mxu0 %v2192
    %2521 = vmatpush.bf16.msra.mxu0 %v2191
    %2522 = vmatpush.bf16.msra.mxu0 %v2190
    %2523 = vmatpush.bf16.msra.mxu0 %v2189
    %2524 = vmatpush.bf16.msra.mxu0 %v2188
    %2525 = vmatpush.bf16.msra.mxu0 %v2187
    %2526 = vmatmul.bf16.gmra.mxu0 %v1293
    %v2527 = vpop.f32.mrf.mxu0
    %v2528 = vadd.f32 %v2515, %v2527
    %v2529 = vpop.f32.mrf.mxu0
    %2530 = vdwg.mxu0
    %v2531 = vmax.f32 %v2528, 0.0
    %v2532 = vpack.c.bf16 %v2531, %v2531
    %v2533 = vld [vmem:[%s10] sm:$0xf]
    %v2534 = vld [vmem:[%s10 + $0x4] sm:$0xf]
    %v2535 = vld [vmem:[%s10 + $0x8] sm:$0xf]
    %v2536 = vld [vmem:[%s10 + $0xc] sm:$0xf]
    %v2537 = vld [vmem:[%s10 + $0x10] sm:$0xf]
    %v2538 = vld [vmem:[%s10 + $0x14] sm:$0xf]
    %v2539 = vld [vmem:[%s10 + $0x18] sm:$0xf]
    %v2540 = vld [vmem:[%s10 + $0x1c] sm:$0xf]
    %v2541 = vld [vmem:[%s10 + $0x20] sm:$0xf]
    %v2542 = vld [vmem:[%s10 + $0x24] sm:$0xf]
    %v2543 = vld [vmem:[%s10 + $0x28] sm:$0xf]
    %v2544 = vld [vmem:[%s10 + $0x2c] sm:$0xf]
    %v2545 = vld [vmem:[%s10 + $0x30] sm:$0xf]
    %v2546 = vld [vmem:[%s10 + $0x34] sm:$0xf]
    %v2547 = vld [vmem:[%s10 + $0x38] sm:$0xf]
    %v2548 = vld [vmem:[%s10 + $0x3c] sm:$0xf]
    %v2549 = vld [vmem:[%s11] sm:$0x1]
    %v2551 = vperm.slane %v2549, 0
    %v2569 = vunpack.c.l.b16 %v2533
    %v2570 = vunpack.c.l.b16 %v2534
    %v2571 = vunpack.c.l.b16 %v2535
    %v2572 = vunpack.c.l.b16 %v2536
    %v2573 = vunpack.c.l.b16 %v2537
    %v2574 = vunpack.c.l.b16 %v2538
    %v2575 = vunpack.c.l.b16 %v2539
    %v2576 = vunpack.c.l.b16 %v2540
    %v2577 = vunpack.c.l.b16 %v2541
    %v2578 = vunpack.c.l.b16 %v2542
    %v2579 = vunpack.c.l.b16 %v2543
    %v2580 = vunpack.c.l.b16 %v2544
    %v2581 = vunpack.c.l.b16 %v2545
    %v2582 = vunpack.c.l.b16 %v2546
    %v2583 = vunpack.c.l.b16 %v2547
    %v2584 = vunpack.c.l.b16 %v2548
    %v2585 = vpack.c.b16 %v2570, %v2569
    %v2586 = vpack.c.b16 %v2572, %v2571
    %v2587 = vpack.c.b16 %v2574, %v2573
    %v2588 = vpack.c.b16 %v2576, %v2575
    %v2589 = vpack.c.b16 %v2578, %v2577
    %v2590 = vpack.c.b16 %v2580, %v2579
    %v2591 = vpack.c.b16 %v2582, %v2581
    %v2592 = vpack.c.b16 %v2584, %v2583
    %2601 = vmatpush.bf16.msra.mxu0 %v2592
    %2602 = vmatpush.bf16.msra.mxu0 %v2591
    %2603 = vmatpush.bf16.msra.mxu0 %v2590
    %2604 = vmatpush.bf16.msra.mxu0 %v2589
    %2605 = vmatpush.bf16.msra.mxu0 %v2588
    %2606 = vmatpush.bf16.msra.mxu0 %v2587
    %2607 = vmatpush.bf16.msra.mxu0 %v2586
    %2608 = vmatpush.bf16.msra.mxu0 %v2585
    %2609 = vmatmul.bf16.gmra.mxu0 %v2532
    %v2610 = vpop.f32.mrf.mxu0
    %v2611 = vadd.f32 %v2551, %v2610
    %v2612 = vpop.f32.mrf.mxu0
    %2613 = vdwg.mxu0
    %vm2614 = vcmask 123904
    %2615 = vst.msk [vmem:[%s22] sm:$0x3] %vm2614, %v2611
    %v2616 = vmul.f32 %v2611, 0.5
    %v2617 = vmul.f32 %v2616, 1.442695
    %v2618 = vpow.pop %v2617
    %v2619 = vld [vmem:[%s1] sm:$0x3]
    %2621 = vrot.lane.b32.xlu0 %v2619, 8
    %v2622 = vpop.permute.xlu0 %2621
    %v2624 = vmul.f32 %v2618, %v2622
    %2626 = vrot.lane.b32.xlu0 %v2624, 120
    %v2627 = vpop.permute.xlu0 %2626
    %v2629 = vadd.f32 %v2611, %v2627
    %v2630 = vpack.c.bf16 %v2629, %v2629
    %v2631 = vld [vmem:[%s12] sm:$0xf]
    %v2632 = vld [vmem:[%s13] sm:$0x1]
    %v2634 = vperm.slane %v2632, 0
    %v2637 = vsel %vm280, %v2630, 0
    %vm2639 = vcmask 1043456
    %v2641 = vsel %vm2639, %v2631, 0
    %2643 = vmatpush.bf16.msra.mxu0 0
    %2644 = vmatpush.bf16.msra.mxu0 0
    %2645 = vmatpush.bf16.msra.mxu0 0
    %2646 = vmatpush.bf16.msra.mxu0 0
    %2647 = vmatpush.bf16.msra.mxu0 0
    %2648 = vmatpush.bf16.msra.mxu0 0
    %2649 = vmatpush.bf16.msra.mxu0 0
    %2650 = vmatpush.bf16.msra.mxu0 %v2641
    %2651 = vmatmul.bf16.gmra.mxu0 %v2637
    %v2652 = vpop.f32.mrf.mxu0
    %v2653 = vadd.f32 %v2634, %v2652
    %v2654 = vpop.f32.mrf.mxu0
    %2655 = vdwg.mxu0
    %v2656 = vmax.f32 %v2653, 0.0
    %v2657 = vpack.c.bf16 %v2656, %v2656
    %v2658 = vld [vmem:[#allocation4] sm:$0xff]
    %v2659 = vld [vmem:[#allocation4 + $0x8] sm:$0xff]
    %v2660 = vld [vmem:[#allocation4 + $0x10] sm:$0xff]
    %v2661 = vld [vmem:[#allocation4 + $0x18] sm:$0xff]
    %v2662 = vld [vmem:[#allocation4 + $0x20] sm:$0xff]
    %v2663 = vld [vmem:[#allocation4 + $0x28] sm:$0xff]
    %v2664 = vld [vmem:[#allocation4 + $0x30] sm:$0xff]
    %v2665 = vld [vmem:[#allocation4 + $0x38] sm:$0xff]
    %v2666 = vld [vmem:[#allocation4 + $0x40] sm:$0xff]
    %v2667 = vld [vmem:[#allocation4 + $0x48] sm:$0xff]
    %v2668 = vld [vmem:[#allocation4 + $0x50] sm:$0xff]
    %v2669 = vld [vmem:[#allocation4 + $0x58] sm:$0xff]
    %v2670 = vld [vmem:[#allocation4 + $0x60] sm:$0xff]
    %v2671 = vld [vmem:[#allocation4 + $0x68] sm:$0xff]
    %v2672 = vld [vmem:[#allocation4 + $0x70] sm:$0xff]
    %v2673 = vld [vmem:[#allocation4 + $0x78] sm:$0xff]
    %v2674 = vld [vmem:[#allocation4 + $0x80] sm:$0xff]
    %v2675 = vld [vmem:[#allocation4 + $0x88] sm:$0xff]
    %v2676 = vld [vmem:[#allocation4 + $0x90] sm:$0xff]
    %v2677 = vld [vmem:[#allocation4 + $0x98] sm:$0xff]
    %v2678 = vld [vmem:[#allocation4 + $0xa0] sm:$0xff]
    %v2679 = vld [vmem:[#allocation4 + $0xa8] sm:$0xff]
    %v2680 = vld [vmem:[#allocation4 + $0xb0] sm:$0xff]
    %v2681 = vld [vmem:[#allocation4 + $0xb8] sm:$0xff]
    %v2682 = vld [vmem:[#allocation4 + $0xc0] sm:$0xff]
    %v2683 = vld [vmem:[#allocation4 + $0xc8] sm:$0xff]
    %v2684 = vld [vmem:[#allocation4 + $0xd0] sm:$0xff]
    %v2685 = vld [vmem:[#allocation4 + $0xd8] sm:$0xff]
    %v2686 = vld [vmem:[#allocation4 + $0xe0] sm:$0xff]
    %v2687 = vld [vmem:[#allocation4 + $0xe8] sm:$0xff]
    %v2688 = vld [vmem:[#allocation4 + $0xf0] sm:$0xff]
    %v2689 = vld [vmem:[#allocation4 + $0xf8] sm:$0xff]
    %v2690 = vld [vmem:[#allocation4 + $0x100] sm:$0xff]
    %v2691 = vld [vmem:[#allocation4 + $0x108] sm:$0xff]
    %v2692 = vld [vmem:[#allocation4 + $0x110] sm:$0xff]
    %v2693 = vld [vmem:[#allocation4 + $0x118] sm:$0xff]
    %v2694 = vld [vmem:[#allocation4 + $0x120] sm:$0xff]
    %v2695 = vld [vmem:[#allocation4 + $0x128] sm:$0xff]
    %v2696 = vld [vmem:[#allocation4 + $0x130] sm:$0xff]
    %v2697 = vld [vmem:[#allocation4 + $0x138] sm:$0xff]
    %v2698 = vld [vmem:[#allocation4 + $0x140] sm:$0xff]
    %v2699 = vld [vmem:[#allocation4 + $0x148] sm:$0xff]
    %v2700 = vld [vmem:[#allocation4 + $0x150] sm:$0xff]
    %v2701 = vld [vmem:[#allocation4 + $0x158] sm:$0xff]
    %v2702 = vld [vmem:[#allocation4 + $0x160] sm:$0xff]
    %v2703 = vld [vmem:[#allocation4 + $0x168] sm:$0xff]
    %v2704 = vld [vmem:[#allocation4 + $0x170] sm:$0xff]
    %v2705 = vld [vmem:[#allocation4 + $0x178] sm:$0xff]
    %v2706 = vld [vmem:[#allocation4 + $0x180] sm:$0xff]
    %v2707 = vld [vmem:[#allocation4 + $0x188] sm:$0xff]
    %v2708 = vld [vmem:[#allocation4 + $0x190] sm:$0xff]
    %v2709 = vld [vmem:[#allocation4 + $0x198] sm:$0xff]
    %v2710 = vld [vmem:[#allocation4 + $0x1a0] sm:$0xff]
    %v2711 = vld [vmem:[#allocation4 + $0x1a8] sm:$0xff]
    %v2712 = vld [vmem:[#allocation4 + $0x1b0] sm:$0xff]
    %v2713 = vld [vmem:[#allocation4 + $0x1b8] sm:$0xff]
    %v2714 = vld [vmem:[#allocation4 + $0x1c0] sm:$0xff]
    %v2715 = vld [vmem:[#allocation4 + $0x1c8] sm:$0xff]
    %v2716 = vld [vmem:[#allocation4 + $0x1d0] sm:$0xff]
    %v2717 = vld [vmem:[#allocation4 + $0x1d8] sm:$0xff]
    %v2718 = vld [vmem:[#allocation4 + $0x1e0] sm:$0xff]
    %v2719 = vld [vmem:[#allocation4 + $0x1e8] sm:$0xff]
    %v2720 = vld [vmem:[#allocation4 + $0x1f0] sm:$0xff]
    %v2721 = vld [vmem:[#allocation4 + $0x1f8] sm:$0xff]
    %v2722 = vld [vmem:[#allocation4 + $0x200] sm:$0xff]
    %v2723 = vld [vmem:[#allocation4 + $0x208] sm:$0xff]
    %v2724 = vld [vmem:[#allocation4 + $0x210] sm:$0xff]
    %v2725 = vld [vmem:[#allocation4 + $0x218] sm:$0xff]
    %v2726 = vld [vmem:[#allocation4 + $0x220] sm:$0xff]
    %v2727 = vld [vmem:[#allocation4 + $0x228] sm:$0xff]
    %v2728 = vld [vmem:[#allocation4 + $0x230] sm:$0xff]
    %v2729 = vld [vmem:[#allocation4 + $0x238] sm:$0xff]
    %v2730 = vld [vmem:[#allocation4 + $0x240] sm:$0xff]
    %v2731 = vld [vmem:[#allocation4 + $0x248] sm:$0xff]
    %v2732 = vld [vmem:[#allocation4 + $0x250] sm:$0xff]
    %v2733 = vld [vmem:[#allocation4 + $0x258] sm:$0xff]
    %v2734 = vld [vmem:[#allocation4 + $0x260] sm:$0xff]
    %v2735 = vld [vmem:[#allocation4 + $0x268] sm:$0xff]
    %v2736 = vld [vmem:[#allocation4 + $0x270] sm:$0xff]
    %v2737 = vld [vmem:[#allocation4 + $0x278] sm:$0xff]
    %v2738 = vld [vmem:[#allocation4 + $0x280] sm:$0xff]
    %v2739 = vld [vmem:[#allocation4 + $0x288] sm:$0xff]
    %v2740 = vld [vmem:[#allocation4 + $0x290] sm:$0xff]
    %v2741 = vld [vmem:[#allocation4 + $0x298] sm:$0xff]
    %v2742 = vld [vmem:[#allocation4 + $0x2a0] sm:$0xff]
    %v2743 = vld [vmem:[#allocation4 + $0x2a8] sm:$0xff]
    %v2744 = vld [vmem:[#allocation4 + $0x2b0] sm:$0xff]
    %v2745 = vld [vmem:[#allocation4 + $0x2b8] sm:$0xff]
    %v2746 = vld [vmem:[#allocation4 + $0x2c0] sm:$0xff]
    %v2747 = vld [vmem:[#allocation4 + $0x2c8] sm:$0xff]
    %v2748 = vld [vmem:[#allocation4 + $0x2d0] sm:$0xff]
    %v2749 = vld [vmem:[#allocation4 + $0x2d8] sm:$0xff]
    %v2750 = vld [vmem:[#allocation4 + $0x2e0] sm:$0xff]
    %v2751 = vld [vmem:[#allocation4 + $0x2e8] sm:$0xff]
    %v2752 = vld [vmem:[#allocation4 + $0x2f0] sm:$0xff]
    %v2753 = vld [vmem:[#allocation4 + $0x2f8] sm:$0xff]
    %v2754 = vld [vmem:[#allocation4 + $0x300] sm:$0xff]
    %v2755 = vld [vmem:[#allocation4 + $0x308] sm:$0xff]
    %v2756 = vld [vmem:[#allocation4 + $0x310] sm:$0xff]
    %v2757 = vld [vmem:[#allocation4 + $0x318] sm:$0xff]
    %v2758 = vld [vmem:[#allocation4 + $0x320] sm:$0xff]
    %v2759 = vld [vmem:[#allocation4 + $0x328] sm:$0xff]
    %v2760 = vld [vmem:[#allocation4 + $0x330] sm:$0xff]
    %v2761 = vld [vmem:[#allocation4 + $0x338] sm:$0xff]
    %v2762 = vld [vmem:[#allocation4 + $0x340] sm:$0xff]
    %v2763 = vld [vmem:[#allocation4 + $0x348] sm:$0xff]
    %v2764 = vld [vmem:[#allocation4 + $0x350] sm:$0xff]
    %v2765 = vld [vmem:[#allocation4 + $0x358] sm:$0xff]
    %v2766 = vld [vmem:[#allocation4 + $0x360] sm:$0xff]
    %v2767 = vld [vmem:[#allocation4 + $0x368] sm:$0xff]
    %v2768 = vld [vmem:[#allocation4 + $0x370] sm:$0xff]
    %v2769 = vld [vmem:[#allocation4 + $0x378] sm:$0xff]
    %v2770 = vld [vmem:[#allocation4 + $0x380] sm:$0xff]
    %v2771 = vld [vmem:[#allocation4 + $0x388] sm:$0xff]
    %v2772 = vld [vmem:[#allocation4 + $0x390] sm:$0xff]
    %v2773 = vld [vmem:[#allocation4 + $0x398] sm:$0xff]
    %v2774 = vld [vmem:[#allocation4 + $0x3a0] sm:$0xff]
    %v2775 = vld [vmem:[#allocation4 + $0x3a8] sm:$0xff]
    %v2776 = vld [vmem:[#allocation4 + $0x3b0] sm:$0xff]
    %v2777 = vld [vmem:[#allocation4 + $0x3b8] sm:$0xff]
    %v2778 = vld [vmem:[#allocation4 + $0x3c0] sm:$0xff]
    %v2779 = vld [vmem:[#allocation4 + $0x3c8] sm:$0xff]
    %v2780 = vld [vmem:[#allocation4 + $0x3d0] sm:$0xff]
    %v2781 = vld [vmem:[#allocation4 + $0x3d8] sm:$0xff]
    %v2782 = vld [vmem:[#allocation4 + $0x3e0] sm:$0xff]
    %v2783 = vld [vmem:[#allocation4 + $0x3e8] sm:$0xff]
    %v2784 = vld [vmem:[#allocation4 + $0x3f0] sm:$0xff]
    %v2785 = vld [vmem:[#allocation4 + $0x3f8] sm:$0xff]
    %v2786 = vld [vmem:[%s15] sm:$0xff]
    %v2787 = vld [vmem:[%s15 + $0x8] sm:$0xff]
    %v2790 = vperm.slane %v2786, 0
    %v2791 = vperm.slane %v2786, 1
    %v2792 = vperm.slane %v2786, 2
    %v2793 = vperm.slane %v2786, 3
    %v2794 = vperm.slane %v2786, 4
    %v2795 = vperm.slane %v2786, 5
    %v2796 = vperm.slane %v2786, 6
    %v2797 = vperm.slane %v2786, 7
    %v2798 = vperm.slane %v2787, 0
    %v2799 = vperm.slane %v2787, 1
    %v2800 = vperm.slane %v2787, 2
    %v2801 = vperm.slane %v2787, 3
    %v2802 = vperm.slane %v2787, 4
    %v2803 = vperm.slane %v2787, 5
    %v2804 = vperm.slane %v2787, 6
    %v2805 = vperm.slane %v2787, 7
    %v2950 = vunpack.c.l.b16 %v2658
    %v2951 = vunpack.c.h.b16 %v2658
    %v2952 = vunpack.c.l.b16 %v2659
    %v2953 = vunpack.c.h.b16 %v2659
    %v2954 = vunpack.c.l.b16 %v2660
    %v2955 = vunpack.c.h.b16 %v2660
    %v2956 = vunpack.c.l.b16 %v2661
    %v2957 = vunpack.c.h.b16 %v2661
    %v2958 = vunpack.c.l.b16 %v2662
    %v2959 = vunpack.c.h.b16 %v2662
    %v2960 = vunpack.c.l.b16 %v2663
    %v2961 = vunpack.c.h.b16 %v2663
    %v2962 = vunpack.c.l.b16 %v2664
    %v2963 = vunpack.c.h.b16 %v2664
    %v2964 = vunpack.c.l.b16 %v2665
    %v2965 = vunpack.c.h.b16 %v2665
    %v2966 = vunpack.c.l.b16 %v2666
    %v2967 = vunpack.c.h.b16 %v2666
    %v2968 = vunpack.c.l.b16 %v2667
    %v2969 = vunpack.c.h.b16 %v2667
    %v2970 = vunpack.c.l.b16 %v2668
    %v2971 = vunpack.c.h.b16 %v2668
    %v2972 = vunpack.c.l.b16 %v2669
    %v2973 = vunpack.c.h.b16 %v2669
    %v2974 = vunpack.c.l.b16 %v2670
    %v2975 = vunpack.c.h.b16 %v2670
    %v2976 = vunpack.c.l.b16 %v2671
    %v2977 = vunpack.c.h.b16 %v2671
    %v2978 = vunpack.c.l.b16 %v2672
    %v2979 = vunpack.c.h.b16 %v2672
    %v2980 = vunpack.c.l.b16 %v2673
    %v2981 = vunpack.c.h.b16 %v2673
    %v2982 = vunpack.c.l.b16 %v2674
    %v2983 = vunpack.c.h.b16 %v2674
    %v2984 = vunpack.c.l.b16 %v2675
    %v2985 = vunpack.c.h.b16 %v2675
    %v2986 = vunpack.c.l.b16 %v2676
    %v2987 = vunpack.c.h.b16 %v2676
    %v2988 = vunpack.c.l.b16 %v2677
    %v2989 = vunpack.c.h.b16 %v2677
    %v2990 = vunpack.c.l.b16 %v2678
    %v2991 = vunpack.c.h.b16 %v2678
    %v2992 = vunpack.c.l.b16 %v2679
    %v2993 = vunpack.c.h.b16 %v2679
    %v2994 = vunpack.c.l.b16 %v2680
    %v2995 = vunpack.c.h.b16 %v2680
    %v2996 = vunpack.c.l.b16 %v2681
    %v2997 = vunpack.c.h.b16 %v2681
    %v2998 = vunpack.c.l.b16 %v2682
    %v2999 = vunpack.c.h.b16 %v2682
    %v3000 = vunpack.c.l.b16 %v2683
    %v3001 = vunpack.c.h.b16 %v2683
    %v3002 = vunpack.c.l.b16 %v2684
    %v3003 = vunpack.c.h.b16 %v2684
    %v3004 = vunpack.c.l.b16 %v2685
    %v3005 = vunpack.c.h.b16 %v2685
    %v3006 = vunpack.c.l.b16 %v2686
    %v3007 = vunpack.c.h.b16 %v2686
    %v3008 = vunpack.c.l.b16 %v2687
    %v3009 = vunpack.c.h.b16 %v2687
    %v3010 = vunpack.c.l.b16 %v2688
    %v3011 = vunpack.c.h.b16 %v2688
    %v3012 = vunpack.c.l.b16 %v2689
    %v3013 = vunpack.c.h.b16 %v2689
    %v3014 = vunpack.c.l.b16 %v2690
    %v3015 = vunpack.c.h.b16 %v2690
    %v3016 = vunpack.c.l.b16 %v2691
    %v3017 = vunpack.c.h.b16 %v2691
    %v3018 = vunpack.c.l.b16 %v2692
    %v3019 = vunpack.c.h.b16 %v2692
    %v3020 = vunpack.c.l.b16 %v2693
    %v3021 = vunpack.c.h.b16 %v2693
    %v3022 = vunpack.c.l.b16 %v2694
    %v3023 = vunpack.c.h.b16 %v2694
    %v3024 = vunpack.c.l.b16 %v2695
    %v3025 = vunpack.c.h.b16 %v2695
    %v3026 = vunpack.c.l.b16 %v2696
    %v3027 = vunpack.c.h.b16 %v2696
    %v3028 = vunpack.c.l.b16 %v2697
    %v3029 = vunpack.c.h.b16 %v2697
    %v3030 = vunpack.c.l.b16 %v2698
    %v3031 = vunpack.c.h.b16 %v2698
    %v3032 = vunpack.c.l.b16 %v2699
    %v3033 = vunpack.c.h.b16 %v2699
    %v3034 = vunpack.c.l.b16 %v2700
    %v3035 = vunpack.c.h.b16 %v2700
    %v3036 = vunpack.c.l.b16 %v2701
    %v3037 = vunpack.c.h.b16 %v2701
    %v3038 = vunpack.c.l.b16 %v2702
    %v3039 = vunpack.c.h.b16 %v2702
    %v3040 = vunpack.c.l.b16 %v2703
    %v3041 = vunpack.c.h.b16 %v2703
    %v3042 = vunpack.c.l.b16 %v2704
    %v3043 = vunpack.c.h.b16 %v2704
    %v3044 = vunpack.c.l.b16 %v2705
    %v3045 = vunpack.c.h.b16 %v2705
    %v3046 = vunpack.c.l.b16 %v2706
    %v3047 = vunpack.c.h.b16 %v2706
    %v3048 = vunpack.c.l.b16 %v2707
    %v3049 = vunpack.c.h.b16 %v2707
    %v3050 = vunpack.c.l.b16 %v2708
    %v3051 = vunpack.c.h.b16 %v2708
    %v3052 = vunpack.c.l.b16 %v2709
    %v3053 = vunpack.c.h.b16 %v2709
    %v3054 = vunpack.c.l.b16 %v2710
    %v3055 = vunpack.c.h.b16 %v2710
    %v3056 = vunpack.c.l.b16 %v2711
    %v3057 = vunpack.c.h.b16 %v2711
    %v3058 = vunpack.c.l.b16 %v2712
    %v3059 = vunpack.c.h.b16 %v2712
    %v3060 = vunpack.c.l.b16 %v2713
    %v3061 = vunpack.c.h.b16 %v2713
    %v3062 = vunpack.c.l.b16 %v2714
    %v3063 = vunpack.c.h.b16 %v2714
    %v3064 = vunpack.c.l.b16 %v2715
    %v3065 = vunpack.c.h.b16 %v2715
    %v3066 = vunpack.c.l.b16 %v2716
    %v3067 = vunpack.c.h.b16 %v2716
    %v3068 = vunpack.c.l.b16 %v2717
    %v3069 = vunpack.c.h.b16 %v2717
    %v3070 = vunpack.c.l.b16 %v2718
    %v3071 = vunpack.c.h.b16 %v2718
    %v3072 = vunpack.c.l.b16 %v2719
    %v3073 = vunpack.c.h.b16 %v2719
    %v3074 = vunpack.c.l.b16 %v2720
    %v3075 = vunpack.c.h.b16 %v2720
    %v3076 = vunpack.c.l.b16 %v2721
    %v3077 = vunpack.c.h.b16 %v2721
    %v3078 = vunpack.c.l.b16 %v2722
    %v3079 = vunpack.c.h.b16 %v2722
    %v3080 = vunpack.c.l.b16 %v2723
    %v3081 = vunpack.c.h.b16 %v2723
    %v3082 = vunpack.c.l.b16 %v2724
    %v3083 = vunpack.c.h.b16 %v2724
    %v3084 = vunpack.c.l.b16 %v2725
    %v3085 = vunpack.c.h.b16 %v2725
    %v3086 = vunpack.c.l.b16 %v2726
    %v3087 = vunpack.c.h.b16 %v2726
    %v3088 = vunpack.c.l.b16 %v2727
    %v3089 = vunpack.c.h.b16 %v2727
    %v3090 = vunpack.c.l.b16 %v2728
    %v3091 = vunpack.c.h.b16 %v2728
    %v3092 = vunpack.c.l.b16 %v2729
    %v3093 = vunpack.c.h.b16 %v2729
    %v3094 = vunpack.c.l.b16 %v2730
    %v3095 = vunpack.c.h.b16 %v2730
    %v3096 = vunpack.c.l.b16 %v2731
    %v3097 = vunpack.c.h.b16 %v2731
    %v3098 = vunpack.c.l.b16 %v2732
    %v3099 = vunpack.c.h.b16 %v2732
    %v3100 = vunpack.c.l.b16 %v2733
    %v3101 = vunpack.c.h.b16 %v2733
    %v3102 = vunpack.c.l.b16 %v2734
    %v3103 = vunpack.c.h.b16 %v2734
    %v3104 = vunpack.c.l.b16 %v2735
    %v3105 = vunpack.c.h.b16 %v2735
    %v3106 = vunpack.c.l.b16 %v2736
    %v3107 = vunpack.c.h.b16 %v2736
    %v3108 = vunpack.c.l.b16 %v2737
    %v3109 = vunpack.c.h.b16 %v2737
    %v3110 = vunpack.c.l.b16 %v2738
    %v3111 = vunpack.c.h.b16 %v2738
    %v3112 = vunpack.c.l.b16 %v2739
    %v3113 = vunpack.c.h.b16 %v2739
    %v3114 = vunpack.c.l.b16 %v2740
    %v3115 = vunpack.c.h.b16 %v2740
    %v3116 = vunpack.c.l.b16 %v2741
    %v3117 = vunpack.c.h.b16 %v2741
    %v3118 = vunpack.c.l.b16 %v2742
    %v3119 = vunpack.c.h.b16 %v2742
    %v3120 = vunpack.c.l.b16 %v2743
    %v3121 = vunpack.c.h.b16 %v2743
    %v3122 = vunpack.c.l.b16 %v2744
    %v3123 = vunpack.c.h.b16 %v2744
    %v3124 = vunpack.c.l.b16 %v2745
    %v3125 = vunpack.c.h.b16 %v2745
    %v3126 = vunpack.c.l.b16 %v2746
    %v3127 = vunpack.c.h.b16 %v2746
    %v3128 = vunpack.c.l.b16 %v2747
    %v3129 = vunpack.c.h.b16 %v2747
    %v3130 = vunpack.c.l.b16 %v2748
    %v3131 = vunpack.c.h.b16 %v2748
    %v3132 = vunpack.c.l.b16 %v2749
    %v3133 = vunpack.c.h.b16 %v2749
    %v3134 = vunpack.c.l.b16 %v2750
    %v3135 = vunpack.c.h.b16 %v2750
    %v3136 = vunpack.c.l.b16 %v2751
    %v3137 = vunpack.c.h.b16 %v2751
    %v3138 = vunpack.c.l.b16 %v2752
    %v3139 = vunpack.c.h.b16 %v2752
    %v3140 = vunpack.c.l.b16 %v2753
    %v3141 = vunpack.c.h.b16 %v2753
    %v3142 = vunpack.c.l.b16 %v2754
    %v3143 = vunpack.c.h.b16 %v2754
    %v3144 = vunpack.c.l.b16 %v2755
    %v3145 = vunpack.c.h.b16 %v2755
    %v3146 = vunpack.c.l.b16 %v2756
    %v3147 = vunpack.c.h.b16 %v2756
    %v3148 = vunpack.c.l.b16 %v2757
    %v3149 = vunpack.c.h.b16 %v2757
    %v3150 = vunpack.c.l.b16 %v2758
    %v3151 = vunpack.c.h.b16 %v2758
    %v3152 = vunpack.c.l.b16 %v2759
    %v3153 = vunpack.c.h.b16 %v2759
    %v3154 = vunpack.c.l.b16 %v2760
    %v3155 = vunpack.c.h.b16 %v2760
    %v3156 = vunpack.c.l.b16 %v2761
    %v3157 = vunpack.c.h.b16 %v2761
    %v3158 = vunpack.c.l.b16 %v2762
    %v3159 = vunpack.c.h.b16 %v2762
    %v3160 = vunpack.c.l.b16 %v2763
    %v3161 = vunpack.c.h.b16 %v2763
    %v3162 = vunpack.c.l.b16 %v2764
    %v3163 = vunpack.c.h.b16 %v2764
    %v3164 = vunpack.c.l.b16 %v2765
    %v3165 = vunpack.c.h.b16 %v2765
    %v3166 = vunpack.c.l.b16 %v2766
    %v3167 = vunpack.c.h.b16 %v2766
    %v3168 = vunpack.c.l.b16 %v2767
    %v3169 = vunpack.c.h.b16 %v2767
    %v3170 = vunpack.c.l.b16 %v2768
    %v3171 = vunpack.c.h.b16 %v2768
    %v3172 = vunpack.c.l.b16 %v2769
    %v3173 = vunpack.c.h.b16 %v2769
    %v3174 = vunpack.c.l.b16 %v2770
    %v3175 = vunpack.c.h.b16 %v2770
    %v3176 = vunpack.c.l.b16 %v2771
    %v3177 = vunpack.c.h.b16 %v2771
    %v3178 = vunpack.c.l.b16 %v2772
    %v3179 = vunpack.c.h.b16 %v2772
    %v3180 = vunpack.c.l.b16 %v2773
    %v3181 = vunpack.c.h.b16 %v2773
    %v3182 = vunpack.c.l.b16 %v2774
    %v3183 = vunpack.c.h.b16 %v2774
    %v3184 = vunpack.c.l.b16 %v2775
    %v3185 = vunpack.c.h.b16 %v2775
    %v3186 = vunpack.c.l.b16 %v2776
    %v3187 = vunpack.c.h.b16 %v2776
    %v3188 = vunpack.c.l.b16 %v2777
    %v3189 = vunpack.c.h.b16 %v2777
    %v3190 = vunpack.c.l.b16 %v2778
    %v3191 = vunpack.c.h.b16 %v2778
    %v3192 = vunpack.c.l.b16 %v2779
    %v3193 = vunpack.c.h.b16 %v2779
    %v3194 = vunpack.c.l.b16 %v2780
    %v3195 = vunpack.c.h.b16 %v2780
    %v3196 = vunpack.c.l.b16 %v2781
    %v3197 = vunpack.c.h.b16 %v2781
    %v3198 = vunpack.c.l.b16 %v2782
    %v3199 = vunpack.c.h.b16 %v2782
    %v3200 = vunpack.c.l.b16 %v2783
    %v3201 = vunpack.c.h.b16 %v2783
    %v3202 = vunpack.c.l.b16 %v2784
    %v3203 = vunpack.c.h.b16 %v2784
    %v3204 = vunpack.c.l.b16 %v2785
    %v3205 = vunpack.c.h.b16 %v2785
    %v3206 = vpack.c.b16 %v2966, %v2950
    %v3207 = vpack.c.b16 %v2967, %v2951
    %v3208 = vpack.c.b16 %v2968, %v2952
    %v3209 = vpack.c.b16 %v2969, %v2953
    %v3210 = vpack.c.b16 %v2970, %v2954
    %v3211 = vpack.c.b16 %v2971, %v2955
    %v3212 = vpack.c.b16 %v2972, %v2956
    %v3213 = vpack.c.b16 %v2973, %v2957
    %v3214 = vpack.c.b16 %v2974, %v2958
    %v3215 = vpack.c.b16 %v2975, %v2959
    %v3216 = vpack.c.b16 %v2976, %v2960
    %v3217 = vpack.c.b16 %v2977, %v2961
    %v3218 = vpack.c.b16 %v2978, %v2962
    %v3219 = vpack.c.b16 %v2979, %v2963
    %v3220 = vpack.c.b16 %v2980, %v2964
    %v3221 = vpack.c.b16 %v2981, %v2965
    %v3222 = vpack.c.b16 %v2998, %v2982
    %v3223 = vpack.c.b16 %v2999, %v2983
    %v3224 = vpack.c.b16 %v3000, %v2984
    %v3225 = vpack.c.b16 %v3001, %v2985
    %v3226 = vpack.c.b16 %v3002, %v2986
    %v3227 = vpack.c.b16 %v3003, %v2987
    %v3228 = vpack.c.b16 %v3004, %v2988
    %v3229 = vpack.c.b16 %v3005, %v2989
    %v3230 = vpack.c.b16 %v3006, %v2990
    %v3231 = vpack.c.b16 %v3007, %v2991
    %v3232 = vpack.c.b16 %v3008, %v2992
    %v3233 = vpack.c.b16 %v3009, %v2993
    %v3234 = vpack.c.b16 %v3010, %v2994
    %v3235 = vpack.c.b16 %v3011, %v2995
    %v3236 = vpack.c.b16 %v3012, %v2996
    %v3237 = vpack.c.b16 %v3013, %v2997
    %v3238 = vpack.c.b16 %v3030, %v3014
    %v3239 = vpack.c.b16 %v3031, %v3015
    %v3240 = vpack.c.b16 %v3032, %v3016
    %v3241 = vpack.c.b16 %v3033, %v3017
    %v3242 = vpack.c.b16 %v3034, %v3018
    %v3243 = vpack.c.b16 %v3035, %v3019
    %v3244 = vpack.c.b16 %v3036, %v3020
    %v3245 = vpack.c.b16 %v3037, %v3021
    %v3246 = vpack.c.b16 %v3038, %v3022
    %v3247 = vpack.c.b16 %v3039, %v3023
    %v3248 = vpack.c.b16 %v3040, %v3024
    %v3249 = vpack.c.b16 %v3041, %v3025
    %v3250 = vpack.c.b16 %v3042, %v3026
    %v3251 = vpack.c.b16 %v3043, %v3027
    %v3252 = vpack.c.b16 %v3044, %v3028
    %v3253 = vpack.c.b16 %v3045, %v3029
    %v3254 = vpack.c.b16 %v3062, %v3046
    %v3255 = vpack.c.b16 %v3063, %v3047
    %v3256 = vpack.c.b16 %v3064, %v3048
    %v3257 = vpack.c.b16 %v3065, %v3049
    %v3258 = vpack.c.b16 %v3066, %v3050
    %v3259 = vpack.c.b16 %v3067, %v3051
    %v3260 = vpack.c.b16 %v3068, %v3052
    %v3261 = vpack.c.b16 %v3069, %v3053
    %v3262 = vpack.c.b16 %v3070, %v3054
    %v3263 = vpack.c.b16 %v3071, %v3055
    %v3264 = vpack.c.b16 %v3072, %v3056
    %v3265 = vpack.c.b16 %v3073, %v3057
    %v3266 = vpack.c.b16 %v3074, %v3058
    %v3267 = vpack.c.b16 %v3075, %v3059
    %v3268 = vpack.c.b16 %v3076, %v3060
    %v3269 = vpack.c.b16 %v3077, %v3061
    %v3270 = vpack.c.b16 %v3094, %v3078
    %v3271 = vpack.c.b16 %v3095, %v3079
    %v3272 = vpack.c.b16 %v3096, %v3080
    %v3273 = vpack.c.b16 %v3097, %v3081
    %v3274 = vpack.c.b16 %v3098, %v3082
    %v3275 = vpack.c.b16 %v3099, %v3083
    %v3276 = vpack.c.b16 %v3100, %v3084
    %v3277 = vpack.c.b16 %v3101, %v3085
    %v3278 = vpack.c.b16 %v3102, %v3086
    %v3279 = vpack.c.b16 %v3103, %v3087
    %v3280 = vpack.c.b16 %v3104, %v3088
    %v3281 = vpack.c.b16 %v3105, %v3089
    %v3282 = vpack.c.b16 %v3106, %v3090
    %v3283 = vpack.c.b16 %v3107, %v3091
    %v3284 = vpack.c.b16 %v3108, %v3092
    %v3285 = vpack.c.b16 %v3109, %v3093
    %v3286 = vpack.c.b16 %v3126, %v3110
    %v3287 = vpack.c.b16 %v3127, %v3111
    %v3288 = vpack.c.b16 %v3128, %v3112
    %v3289 = vpack.c.b16 %v3129, %v3113
    %v3290 = vpack.c.b16 %v3130, %v3114
    %v3291 = vpack.c.b16 %v3131, %v3115
    %v3292 = vpack.c.b16 %v3132, %v3116
    %v3293 = vpack.c.b16 %v3133, %v3117
    %v3294 = vpack.c.b16 %v3134, %v3118
    %v3295 = vpack.c.b16 %v3135, %v3119
    %v3296 = vpack.c.b16 %v3136, %v3120
    %v3297 = vpack.c.b16 %v3137, %v3121
    %v3298 = vpack.c.b16 %v3138, %v3122
    %v3299 = vpack.c.b16 %v3139, %v3123
    %v3300 = vpack.c.b16 %v3140, %v3124
    %v3301 = vpack.c.b16 %v3141, %v3125
    %v3302 = vpack.c.b16 %v3158, %v3142
    %v3303 = vpack.c.b16 %v3159, %v3143
    %v3304 = vpack.c.b16 %v3160, %v3144
    %v3305 = vpack.c.b16 %v3161, %v3145
    %v3306 = vpack.c.b16 %v3162, %v3146
    %v3307 = vpack.c.b16 %v3163, %v3147
    %v3308 = vpack.c.b16 %v3164, %v3148
    %v3309 = vpack.c.b16 %v3165, %v3149
    %v3310 = vpack.c.b16 %v3166, %v3150
    %v3311 = vpack.c.b16 %v3167, %v3151
    %v3312 = vpack.c.b16 %v3168, %v3152
    %v3313 = vpack.c.b16 %v3169, %v3153
    %v3314 = vpack.c.b16 %v3170, %v3154
    %v3315 = vpack.c.b16 %v3171, %v3155
    %v3316 = vpack.c.b16 %v3172, %v3156
    %v3317 = vpack.c.b16 %v3173, %v3157
    %v3318 = vpack.c.b16 %v3190, %v3174
    %v3319 = vpack.c.b16 %v3191, %v3175
    %v3320 = vpack.c.b16 %v3192, %v3176
    %v3321 = vpack.c.b16 %v3193, %v3177
    %v3322 = vpack.c.b16 %v3194, %v3178
    %v3323 = vpack.c.b16 %v3195, %v3179
    %v3324 = vpack.c.b16 %v3196, %v3180
    %v3325 = vpack.c.b16 %v3197, %v3181
    %v3326 = vpack.c.b16 %v3198, %v3182
    %v3327 = vpack.c.b16 %v3199, %v3183
    %v3328 = vpack.c.b16 %v3200, %v3184
    %v3329 = vpack.c.b16 %v3201, %v3185
    %v3330 = vpack.c.b16 %v3202, %v3186
    %v3331 = vpack.c.b16 %v3203, %v3187
    %v3332 = vpack.c.b16 %v3204, %v3188
    %v3333 = vpack.c.b16 %v3205, %v3189
    %3462 = vmatpush.bf16.msra.mxu0 %v3318
    %3463 = vmatpush.bf16.msra.mxu0 %v3302
    %3464 = vmatpush.bf16.msra.mxu0 %v3286
    %3465 = vmatpush.bf16.msra.mxu0 %v3270
    %3466 = vmatpush.bf16.msra.mxu0 %v3254
    %3467 = vmatpush.bf16.msra.mxu0 %v3238
    %3468 = vmatpush.bf16.msra.mxu0 %v3222
    %3469 = vmatpush.bf16.msra.mxu0 %v3206
    %3470 = vmatmul.bf16.gmra.mxu0 %v2657
    %v3471 = vpop.f32.mrf.mxu0
    %v3472 = vadd.f32 %v2790, %v3471
    %v3473 = vpop.f32.mrf.mxu0
    %3474 = vdwg.mxu0
    %3475 = vmatpush.bf16.msra.mxu0 %v3319
    %3476 = vmatpush.bf16.msra.mxu0 %v3303
    %3477 = vmatpush.bf16.msra.mxu0 %v3287
    %3478 = vmatpush.bf16.msra.mxu0 %v3271
    %3479 = vmatpush.bf16.msra.mxu0 %v3255
    %3480 = vmatpush.bf16.msra.mxu0 %v3239
    %3481 = vmatpush.bf16.msra.mxu0 %v3223
    %3482 = vmatpush.bf16.msra.mxu0 %v3207
    %3483 = vmatmul.bf16.gmra.mxu0 %v2657
    %v3484 = vpop.f32.mrf.mxu0
    %v3485 = vadd.f32 %v2791, %v3484
    %v3486 = vpop.f32.mrf.mxu0
    %3487 = vdwg.mxu0
    %3488 = vmatpush.bf16.msra.mxu0 %v3320
    %3489 = vmatpush.bf16.msra.mxu0 %v3304
    %3490 = vmatpush.bf16.msra.mxu0 %v3288
    %3491 = vmatpush.bf16.msra.mxu0 %v3272
    %3492 = vmatpush.bf16.msra.mxu0 %v3256
    %3493 = vmatpush.bf16.msra.mxu0 %v3240
    %3494 = vmatpush.bf16.msra.mxu0 %v3224
    %3495 = vmatpush.bf16.msra.mxu0 %v3208
    %3496 = vmatmul.bf16.gmra.mxu0 %v2657
    %v3497 = vpop.f32.mrf.mxu0
    %v3498 = vadd.f32 %v2792, %v3497
    %v3499 = vpop.f32.mrf.mxu0
    %3500 = vdwg.mxu0
    %3501 = vmatpush.bf16.msra.mxu0 %v3321
    %3502 = vmatpush.bf16.msra.mxu0 %v3305
    %3503 = vmatpush.bf16.msra.mxu0 %v3289
    %3504 = vmatpush.bf16.msra.mxu0 %v3273
    %3505 = vmatpush.bf16.msra.mxu0 %v3257
    %3506 = vmatpush.bf16.msra.mxu0 %v3241
    %3507 = vmatpush.bf16.msra.mxu0 %v3225
    %3508 = vmatpush.bf16.msra.mxu0 %v3209
    %3509 = vmatmul.bf16.gmra.mxu0 %v2657
    %v3510 = vpop.f32.mrf.mxu0
    %v3511 = vadd.f32 %v2793, %v3510
    %v3512 = vpop.f32.mrf.mxu0
    %3513 = vdwg.mxu0
    %3514 = vmatpush.bf16.msra.mxu0 %v3322
    %3515 = vmatpush.bf16.msra.mxu0 %v3306
    %3516 = vmatpush.bf16.msra.mxu0 %v3290
    %3517 = vmatpush.bf16.msra.mxu0 %v3274
    %3518 = vmatpush.bf16.msra.mxu0 %v3258
    %3519 = vmatpush.bf16.msra.mxu0 %v3242
    %3520 = vmatpush.bf16.msra.mxu0 %v3226
    %3521 = vmatpush.bf16.msra.mxu0 %v3210
    %3522 = vmatmul.bf16.gmra.mxu0 %v2657
    %v3523 = vpop.f32.mrf.mxu0
    %v3524 = vadd.f32 %v2794, %v3523
    %v3525 = vpop.f32.mrf.mxu0
    %3526 = vdwg.mxu0
    %3527 = vmatpush.bf16.msra.mxu0 %v3323
    %3528 = vmatpush.bf16.msra.mxu0 %v3307
    %3529 = vmatpush.bf16.msra.mxu0 %v3291
    %3530 = vmatpush.bf16.msra.mxu0 %v3275
    %3531 = vmatpush.bf16.msra.mxu0 %v3259
    %3532 = vmatpush.bf16.msra.mxu0 %v3243
    %3533 = vmatpush.bf16.msra.mxu0 %v3227
    %3534 = vmatpush.bf16.msra.mxu0 %v3211
    %3535 = vmatmul.bf16.gmra.mxu0 %v2657
    %v3536 = vpop.f32.mrf.mxu0
    %v3537 = vadd.f32 %v2795, %v3536
    %v3538 = vpop.f32.mrf.mxu0
    %3539 = vdwg.mxu0
    %3540 = vmatpush.bf16.msra.mxu0 %v3324
    %3541 = vmatpush.bf16.msra.mxu0 %v3308
    %3542 = vmatpush.bf16.msra.mxu0 %v3292
    %3543 = vmatpush.bf16.msra.mxu0 %v3276
    %3544 = vmatpush.bf16.msra.mxu0 %v3260
    %3545 = vmatpush.bf16.msra.mxu0 %v3244
    %3546 = vmatpush.bf16.msra.mxu0 %v3228
    %3547 = vmatpush.bf16.msra.mxu0 %v3212
    %3548 = vmatmul.bf16.gmra.mxu0 %v2657
    %v3549 = vpop.f32.mrf.mxu0
    %v3550 = vadd.f32 %v2796, %v3549
    %v3551 = vpop.f32.mrf.mxu0
    %3552 = vdwg.mxu0
    %3553 = vmatpush.bf16.msra.mxu0 %v3325
    %3554 = vmatpush.bf16.msra.mxu0 %v3309
    %3555 = vmatpush.bf16.msra.mxu0 %v3293
    %3556 = vmatpush.bf16.msra.mxu0 %v3277
    %3557 = vmatpush.bf16.msra.mxu0 %v3261
    %3558 = vmatpush.bf16.msra.mxu0 %v3245
    %3559 = vmatpush.bf16.msra.mxu0 %v3229
    %3560 = vmatpush.bf16.msra.mxu0 %v3213
    %3561 = vmatmul.bf16.gmra.mxu0 %v2657
    %v3562 = vpop.f32.mrf.mxu0
    %v3563 = vadd.f32 %v2797, %v3562
    %v3564 = vpop.f32.mrf.mxu0
    %3565 = vdwg.mxu0
    %3566 = vmatpush.bf16.msra.mxu0 %v3326
    %3567 = vmatpush.bf16.msra.mxu0 %v3310
    %3568 = vmatpush.bf16.msra.mxu0 %v3294
    %3569 = vmatpush.bf16.msra.mxu0 %v3278
    %3570 = vmatpush.bf16.msra.mxu0 %v3262
    %3571 = vmatpush.bf16.msra.mxu0 %v3246
    %3572 = vmatpush.bf16.msra.mxu0 %v3230
    %3573 = vmatpush.bf16.msra.mxu0 %v3214
    %3574 = vmatmul.bf16.gmra.mxu0 %v2657
    %v3575 = vpop.f32.mrf.mxu0
    %v3576 = vadd.f32 %v2798, %v3575
    %v3577 = vpop.f32.mrf.mxu0
    %3578 = vdwg.mxu0
    %3579 = vmatpush.bf16.msra.mxu0 %v3327
    %3580 = vmatpush.bf16.msra.mxu0 %v3311
    %3581 = vmatpush.bf16.msra.mxu0 %v3295
    %3582 = vmatpush.bf16.msra.mxu0 %v3279
    %3583 = vmatpush.bf16.msra.mxu0 %v3263
    %3584 = vmatpush.bf16.msra.mxu0 %v3247
    %3585 = vmatpush.bf16.msra.mxu0 %v3231
    %3586 = vmatpush.bf16.msra.mxu0 %v3215
    %3587 = vmatmul.bf16.gmra.mxu0 %v2657
    %v3588 = vpop.f32.mrf.mxu0
    %v3589 = vadd.f32 %v2799, %v3588
    %v3590 = vpop.f32.mrf.mxu0
    %3591 = vdwg.mxu0
    %3592 = vmatpush.bf16.msra.mxu0 %v3328
    %3593 = vmatpush.bf16.msra.mxu0 %v3312
    %3594 = vmatpush.bf16.msra.mxu0 %v3296
    %3595 = vmatpush.bf16.msra.mxu0 %v3280
    %3596 = vmatpush.bf16.msra.mxu0 %v3264
    %3597 = vmatpush.bf16.msra.mxu0 %v3248
    %3598 = vmatpush.bf16.msra.mxu0 %v3232
    %3599 = vmatpush.bf16.msra.mxu0 %v3216
    %3600 = vmatmul.bf16.gmra.mxu0 %v2657
    %v3601 = vpop.f32.mrf.mxu0
    %v3602 = vadd.f32 %v2800, %v3601
    %v3603 = vpop.f32.mrf.mxu0
    %3604 = vdwg.mxu0
    %3605 = vmatpush.bf16.msra.mxu0 %v3329
    %3606 = vmatpush.bf16.msra.mxu0 %v3313
    %3607 = vmatpush.bf16.msra.mxu0 %v3297
    %3608 = vmatpush.bf16.msra.mxu0 %v3281
    %3609 = vmatpush.bf16.msra.mxu0 %v3265
    %3610 = vmatpush.bf16.msra.mxu0 %v3249
    %3611 = vmatpush.bf16.msra.mxu0 %v3233
    %3612 = vmatpush.bf16.msra.mxu0 %v3217
    %3613 = vmatmul.bf16.gmra.mxu0 %v2657
    %v3614 = vpop.f32.mrf.mxu0
    %v3615 = vadd.f32 %v2801, %v3614
    %v3616 = vpop.f32.mrf.mxu0
    %3617 = vdwg.mxu0
    %3618 = vmatpush.bf16.msra.mxu0 %v3330
    %3619 = vmatpush.bf16.msra.mxu0 %v3314
    %3620 = vmatpush.bf16.msra.mxu0 %v3298
    %3621 = vmatpush.bf16.msra.mxu0 %v3282
    %3622 = vmatpush.bf16.msra.mxu0 %v3266
    %3623 = vmatpush.bf16.msra.mxu0 %v3250
    %3624 = vmatpush.bf16.msra.mxu0 %v3234
    %3625 = vmatpush.bf16.msra.mxu0 %v3218
    %3626 = vmatmul.bf16.gmra.mxu0 %v2657
    %v3627 = vpop.f32.mrf.mxu0
    %v3628 = vadd.f32 %v2802, %v3627
    %v3629 = vpop.f32.mrf.mxu0
    %3630 = vdwg.mxu0
    %3631 = vmatpush.bf16.msra.mxu0 %v3331
    %3632 = vmatpush.bf16.msra.mxu0 %v3315
    %3633 = vmatpush.bf16.msra.mxu0 %v3299
    %3634 = vmatpush.bf16.msra.mxu0 %v3283
    %3635 = vmatpush.bf16.msra.mxu0 %v3267
    %3636 = vmatpush.bf16.msra.mxu0 %v3251
    %3637 = vmatpush.bf16.msra.mxu0 %v3235
    %3638 = vmatpush.bf16.msra.mxu0 %v3219
    %3639 = vmatmul.bf16.gmra.mxu0 %v2657
    %v3640 = vpop.f32.mrf.mxu0
    %v3641 = vadd.f32 %v2803, %v3640
    %v3642 = vpop.f32.mrf.mxu0
    %3643 = vdwg.mxu0
    %3644 = vmatpush.bf16.msra.mxu0 %v3332
    %3645 = vmatpush.bf16.msra.mxu0 %v3316
    %3646 = vmatpush.bf16.msra.mxu0 %v3300
    %3647 = vmatpush.bf16.msra.mxu0 %v3284
    %3648 = vmatpush.bf16.msra.mxu0 %v3268
    %3649 = vmatpush.bf16.msra.mxu0 %v3252
    %3650 = vmatpush.bf16.msra.mxu0 %v3236
    %3651 = vmatpush.bf16.msra.mxu0 %v3220
    %3652 = vmatmul.bf16.gmra.mxu0 %v2657
    %v3653 = vpop.f32.mrf.mxu0
    %v3654 = vadd.f32 %v2804, %v3653
    %v3655 = vpop.f32.mrf.mxu0
    %3656 = vdwg.mxu0
    %3657 = vmatpush.bf16.msra.mxu0 %v3333
    %3658 = vmatpush.bf16.msra.mxu0 %v3317
    %3659 = vmatpush.bf16.msra.mxu0 %v3301
    %3660 = vmatpush.bf16.msra.mxu0 %v3285
    %3661 = vmatpush.bf16.msra.mxu0 %v3269
    %3662 = vmatpush.bf16.msra.mxu0 %v3253
    %3663 = vmatpush.bf16.msra.mxu0 %v3237
    %3664 = vmatpush.bf16.msra.mxu0 %v3221
    %3665 = vmatmul.bf16.gmra.mxu0 %v2657
    %v3666 = vpop.f32.mrf.mxu0
    %v3667 = vadd.f32 %v2805, %v3666
    %v3668 = vpop.f32.mrf.mxu0
    %3669 = vdwg.mxu0
    %v3670 = vmax.f32 %v3472, 0.0
    %v3671 = vmax.f32 %v3485, 0.0
    %v3672 = vmax.f32 %v3498, 0.0
    %v3673 = vmax.f32 %v3511, 0.0
    %v3674 = vmax.f32 %v3524, 0.0
    %v3675 = vmax.f32 %v3537, 0.0
    %v3676 = vmax.f32 %v3550, 0.0
    %v3677 = vmax.f32 %v3563, 0.0
    %v3678 = vmax.f32 %v3576, 0.0
    %v3679 = vmax.f32 %v3589, 0.0
    %v3680 = vmax.f32 %v3602, 0.0
    %v3681 = vmax.f32 %v3615, 0.0
    %v3682 = vmax.f32 %v3628, 0.0
    %v3683 = vmax.f32 %v3641, 0.0
    %v3684 = vmax.f32 %v3654, 0.0
    %v3685 = vmax.f32 %v3667, 0.0
    %v3686 = vpack.c.bf16 %v3671, %v3670
    %v3687 = vpack.c.bf16 %v3673, %v3672
    %v3688 = vpack.c.bf16 %v3675, %v3674
    %v3689 = vpack.c.bf16 %v3677, %v3676
    %v3690 = vpack.c.bf16 %v3679, %v3678
    %v3691 = vpack.c.bf16 %v3681, %v3680
    %v3692 = vpack.c.bf16 %v3683, %v3682
    %v3693 = vpack.c.bf16 %v3685, %v3684
    %v3695 = vunpack.c.l.b16 %v3686
    %v3696 = vpack.c.b16 %v3695, %v3695
    %v3697 = vrot.slane %v3696, 5
    %3698 = vrot.lane.b32.xlu0 %v3696, 64
    %v3699 = vpop.permute.xlu0 %3698
    %v3700 = vunpack.c.h.b16 %v3686
    %v3701 = vpack.c.b16 %v3700, %v3700
    %v3702 = vrot.slane %v3701, 3
    %v3703 = vrot.slane %v3701, 2
    %3704 = vrot.lane.b32.xlu0 %v3703, 64
    %v3705 = vpop.permute.xlu0 %3704
    %v3707 = vunpack.c.l.b16 %v3687
    %v3708 = vpack.c.b16 %v3707, %v3707
    %v3709 = vrot.slane %v3708, 1
    %3710 = vrot.lane.b32.xlu0 %v3708, 64
    %v3711 = vpop.permute.xlu0 %3710
    %v3712 = vunpack.c.h.b16 %v3687
    %v3713 = vpack.c.b16 %v3712, %v3712
    %v3714 = vrot.slane %v3713, 7
    %v3715 = vrot.slane %v3713, 6
    %3716 = vrot.lane.b32.xlu0 %v3715, 64
    %v3717 = vpop.permute.xlu0 %3716
    %v3719 = vunpack.c.l.b16 %v3688
    %v3720 = vpack.c.b16 %v3719, %v3719
    %v3721 = vrot.slane %v3720, 5
    %3722 = vrot.lane.b32.xlu0 %v3720, 64
    %v3723 = vpop.permute.xlu0 %3722
    %v3724 = vunpack.c.h.b16 %v3688
    %v3725 = vpack.c.b16 %v3724, %v3724
    %v3726 = vrot.slane %v3725, 3
    %v3727 = vrot.slane %v3725, 2
    %3728 = vrot.lane.b32.xlu0 %v3727, 64
    %v3729 = vpop.permute.xlu0 %3728
    %v3731 = vunpack.c.l.b16 %v3689
    %v3732 = vpack.c.b16 %v3731, %v3731
    %v3733 = vrot.slane %v3732, 1
    %3734 = vrot.lane.b32.xlu0 %v3732, 64
    %v3735 = vpop.permute.xlu0 %3734
    %v3736 = vunpack.c.h.b16 %v3689
    %v3737 = vpack.c.b16 %v3736, %v3736
    %v3738 = vrot.slane %v3737, 7
    %v3741 = vsel %vm401, 0, %v3697
    %v3743 = vsel %vm2639, %v3741, %v3699
    %vm3744 = vcmask 1044480
    %v3746 = vsel %vm3744, %v3743, %v3702
    %vm3747 = vcmask 1045504
    %v3749 = vsel %vm3747, %v3746, %v3705
    %vm3750 = vcmask 1046528
    %v3752 = vsel %vm3750, %v3749, %v3709
    %vm3753 = vcmask 1040384
    %v3756 = vsel %vm3753, %v3711, %v3714
    %vm3757 = vcmask 1041408
    %v3759 = vsel %vm3757, %v3756, %v3717
    %v3761 = vsel %vm401, %v3759, %v3721
    %v3763 = vsel %vm2639, %v3761, %v3723
    %v3765 = vsel %vm3744, %v3763, %v3726
    %v3767 = vsel %vm3747, %v3765, %v3729
    %v3769 = vsel %vm3750, %v3767, %v3733
    %v3772 = vsel %vm3753, %v3735, %v3738
    %3773 = vrot.lane.b32.xlu0 %v3737, 64
    %v3774 = vpop.permute.xlu0 %3773
    %v3776 = vunpack.c.l.b16 %v3690
    %v3777 = vpack.c.b16 %v3776, %v3776
    %v3778 = vrot.slane %v3777, 7
    %v3779 = vrot.slane %v3777, 6
    %3780 = vrot.lane.b32.xlu0 %v3779, 64
    %v3781 = vpop.permute.xlu0 %3780
    %v3782 = vunpack.c.h.b16 %v3690
    %v3783 = vpack.c.b16 %v3782, %v3782
    %v3784 = vrot.slane %v3783, 5
    %3785 = vrot.lane.b32.xlu0 %v3783, 64
    %v3786 = vpop.permute.xlu0 %3785
    %v3788 = vunpack.c.l.b16 %v3691
    %v3789 = vpack.c.b16 %v3788, %v3788
    %v3790 = vrot.slane %v3789, 3
    %v3791 = vrot.slane %v3789, 2
    %3792 = vrot.lane.b32.xlu0 %v3791, 64
    %v3793 = vpop.permute.xlu0 %3792
    %v3794 = vunpack.c.h.b16 %v3691
    %v3795 = vpack.c.b16 %v3794, %v3794
    %v3796 = vrot.slane %v3795, 1
    %3797 = vrot.lane.b32.xlu0 %v3795, 64
    %v3798 = vpop.permute.xlu0 %3797
    %v3800 = vunpack.c.l.b16 %v3692
    %v3801 = vpack.c.b16 %v3800, %v3800
    %v3802 = vrot.slane %v3801, 7
    %v3803 = vrot.slane %v3801, 6
    %3804 = vrot.lane.b32.xlu0 %v3803, 64
    %v3805 = vpop.permute.xlu0 %3804
    %v3806 = vunpack.c.h.b16 %v3692
    %v3807 = vpack.c.b16 %v3806, %v3806
    %v3808 = vrot.slane %v3807, 5
    %3809 = vrot.lane.b32.xlu0 %v3807, 64
    %v3810 = vpop.permute.xlu0 %3809
    %v3812 = vunpack.c.l.b16 %v3693
    %v3813 = vpack.c.b16 %v3812, %v3812
    %v3814 = vrot.slane %v3813, 3
    %v3815 = vrot.slane %v3813, 2
    %3816 = vrot.lane.b32.xlu0 %v3815, 64
    %v3817 = vpop.permute.xlu0 %3816
    %v3818 = vunpack.c.h.b16 %v3693
    %v3819 = vpack.c.b16 %v3818, %v3818
    %v3820 = vrot.slane %v3819, 1
    %v3823 = vsel %vm3753, %v3774, %v3778
    %v3825 = vsel %vm3757, %v3823, %v3781
    %v3827 = vsel %vm401, %v3825, %v3784
    %v3829 = vsel %vm2639, %v3827, %v3786
    %v3831 = vsel %vm3744, %v3829, %v3790
    %v3833 = vsel %vm3747, %v3831, %v3793
    %v3835 = vsel %vm3750, %v3833, %v3796
    %v3838 = vsel %vm3753, %v3798, %v3802
    %v3840 = vsel %vm3757, %v3838, %v3805
    %v3842 = vsel %vm401, %v3840, %v3808
    %v3844 = vsel %vm2639, %v3842, %v3810
    %v3846 = vsel %vm3744, %v3844, %v3814
    %v3848 = vsel %vm3747, %v3846, %v3817
    %v3850 = vsel %vm3750, %v3848, %v3820
    %3851 = vrot.lane.b32.xlu0 %v3819, 64
    %v3852 = vpop.permute.xlu0 %3851
    %v3854 = vsel %vm3753, %v3852, 0
    %vm3857 = vcmask 1041408
    %v3858 = vrot.slane %v3835, 6
    %v3859 = vrot.slane %v3850, 6
    %v3860 = vsel %vm3857, %v3858, %v3859
    %v3862 = vrot.slane %v3854, 6
    %v3864 = vsel %vm3757, %v3772, %v3858
    %v3867 = vsel %vm3757, %v3859, %v3862
    %vm3872 = vcmask 1040384
    %v3873 = vrot.slane %v3752, 7
    %v3874 = vrot.slane %v3769, 7
    %v3875 = vsel %vm3872, %v3873, %v3874
    %v3876 = vrot.slane %v3864, 7
    %v3877 = vsel %vm3872, %v3874, %v3876
    %v3878 = vrot.slane %v3860, 7
    %v3879 = vsel %vm3872, %v3876, %v3878
    %v3880 = vrot.slane %v3867, 7
    %v3881 = vsel %vm3872, %v3878, %v3880
    %3882 = vrot.lane.b32.xlu0 %v3873, 64
    %v3883 = vpop.permute.xlu0 %3882
    %3884 = vrot.lane.b32.xlu0 %v3875, 64
    %v3885 = vpop.permute.xlu0 %3884
    %3886 = vrot.lane.b32.xlu0 %v3877, 64
    %v3887 = vpop.permute.xlu0 %3886
    %3888 = vrot.lane.b32.xlu0 %v3879, 64
    %v3889 = vpop.permute.xlu0 %3888
    %3890 = vrot.lane.b32.xlu0 %v3881, 64
    %v3891 = vpop.permute.xlu0 %3890
    %v3892 = vrot.slane %v3752, 6
    %v3893 = vrot.slane %v3769, 6
    %v3894 = vsel %vm3857, %v3892, %v3893
    %v3895 = vrot.slane %v3864, 6
    %v3896 = vsel %vm3857, %v3893, %v3895
    %v3897 = vrot.slane %v3860, 6
    %v3898 = vsel %vm3857, %v3895, %v3897
    %v3899 = vrot.slane %v3867, 6
    %v3900 = vsel %vm3857, %v3897, %v3899
    %v3901 = vrot.slane %v3752, 5
    %v3902 = vrot.slane %v3769, 5
    %v3903 = vsel %vm391, %v3901, %v3902
    %v3904 = vrot.slane %v3864, 5
    %v3905 = vsel %vm391, %v3902, %v3904
    %v3906 = vrot.slane %v3860, 5
    %v3907 = vsel %vm391, %v3904, %v3906
    %v3908 = vrot.slane %v3867, 5
    %v3909 = vsel %vm391, %v3906, %v3908
    %3910 = vrot.lane.b32.xlu0 %v3901, 64
    %v3911 = vpop.permute.xlu0 %3910
    %3912 = vrot.lane.b32.xlu0 %v3903, 64
    %v3913 = vpop.permute.xlu0 %3912
    %3914 = vrot.lane.b32.xlu0 %v3905, 64
    %v3915 = vpop.permute.xlu0 %3914
    %3916 = vrot.lane.b32.xlu0 %v3907, 64
    %v3917 = vpop.permute.xlu0 %3916
    %3918 = vrot.lane.b32.xlu0 %v3909, 64
    %v3919 = vpop.permute.xlu0 %3918
    %v3921 = vsel %vm891, %v3752, %v3883
    %v3923 = vsel %vm891, %v3769, %v3885
    %v3925 = vsel %vm891, %v3864, %v3887
    %v3928 = vsel %vm891, %v3860, %v3889
    %v3930 = vsel %vm891, %v3867, %v3891
    %v3933 = vsel %vm891, %v3892, %v3911
    %v3936 = vsel %vm891, %v3894, %v3913
    %v3939 = vsel %vm891, %v3896, %v3915
    %v3942 = vsel %vm891, %v3898, %v3917
    %v3945 = vsel %vm891, %v3900, %v3919
    %v3946 = vld [vmem:[%s16] sm:$0xf]
    %v3947 = vld [vmem:[%s16 + $0x4] sm:$0xf]
    %v3948 = vld [vmem:[%s16 + $0x8] sm:$0xf]
    %v3949 = vld [vmem:[%s16 + $0xc] sm:$0xf]
    %v3950 = vld [vmem:[%s16 + $0x10] sm:$0xf]
    %v3951 = vld [vmem:[%s16 + $0x14] sm:$0xf]
    %v3952 = vld [vmem:[%s16 + $0x18] sm:$0xf]
    %v3953 = vld [vmem:[%s16 + $0x1c] sm:$0xf]
    %v3954 = vld [vmem:[%s16 + $0x20] sm:$0xf]
    %v3955 = vld [vmem:[%s16 + $0x24] sm:$0xf]
    %v3956 = vld [vmem:[%s16 + $0x28] sm:$0xf]
    %v3957 = vld [vmem:[%s16 + $0x2c] sm:$0xf]
    %v3958 = vld [vmem:[%s16 + $0x30] sm:$0xf]
    %v3959 = vld [vmem:[%s16 + $0x34] sm:$0xf]
    %v3960 = vld [vmem:[%s16 + $0x38] sm:$0xf]
    %v3961 = vld [vmem:[%s16 + $0x3c] sm:$0xf]
    %v3962 = vld [vmem:[%s16 + $0x40] sm:$0xf]
    %v3963 = vld [vmem:[%s16 + $0x44] sm:$0xf]
    %v3964 = vld [vmem:[%s16 + $0x48] sm:$0xf]
    %v3965 = vld [vmem:[%s16 + $0x4c] sm:$0xf]
    %v3966 = vld [vmem:[%s16 + $0x50] sm:$0xf]
    %v3967 = vld [vmem:[%s16 + $0x54] sm:$0xf]
    %v3968 = vld [vmem:[%s16 + $0x58] sm:$0xf]
    %v3969 = vld [vmem:[%s16 + $0x5c] sm:$0xf]
    %v3970 = vld [vmem:[%s16 + $0x60] sm:$0xf]
    %v3971 = vld [vmem:[%s16 + $0x64] sm:$0xf]
    %v3972 = vld [vmem:[%s16 + $0x68] sm:$0xf]
    %v3973 = vld [vmem:[%s16 + $0x6c] sm:$0xf]
    %v3974 = vld [vmem:[%s16 + $0x70] sm:$0xf]
    %v3975 = vld [vmem:[%s16 + $0x74] sm:$0xf]
    %v3976 = vld [vmem:[%s16 + $0x78] sm:$0xf]
    %v3977 = vld [vmem:[%s16 + $0x7c] sm:$0xf]
    %v3978 = vld [vmem:[%s17] sm:$0x1]
    %v3980 = vperm.slane %v3978, 0
    %v3992 = vrot.slane %v3921, 3
    %v3993 = vrot.slane %v3923, 3
    %v3994 = vsel %vm767, %v3992, %v3993
    %v3995 = vrot.slane %v3933, 3
    %v3996 = vrot.slane %v3936, 3
    %v3997 = vsel %vm767, %v3995, %v3996
    %v3998 = vrot.slane %v3925, 3
    %v3999 = vsel %vm767, %v3993, %v3998
    %v4000 = vrot.slane %v3939, 3
    %v4001 = vsel %vm767, %v3996, %v4000
    %v4002 = vrot.slane %v3928, 3
    %v4003 = vsel %vm767, %v3998, %v4002
    %v4004 = vrot.slane %v3942, 3
    %v4005 = vsel %vm767, %v4000, %v4004
    %v4006 = vrot.slane %v3930, 3
    %v4007 = vsel %vm767, %v4002, %v4006
    %v4008 = vrot.slane %v3945, 3
    %v4009 = vsel %vm767, %v4004, %v4008
    %v4052 = vunpack.c.l.b16 %v3946
    %v4053 = vunpack.c.l.b16 %v3947
    %v4054 = vunpack.c.l.b16 %v3948
    %v4055 = vunpack.c.l.b16 %v3949
    %v4056 = vunpack.c.l.b16 %v3950
    %v4057 = vunpack.c.l.b16 %v3951
    %v4058 = vunpack.c.l.b16 %v3952
    %v4059 = vunpack.c.l.b16 %v3953
    %v4060 = vunpack.c.l.b16 %v3954
    %v4061 = vunpack.c.l.b16 %v3955
    %v4062 = vunpack.c.l.b16 %v3956
    %v4063 = vunpack.c.l.b16 %v3957
    %v4064 = vunpack.c.l.b16 %v3958
    %v4065 = vunpack.c.l.b16 %v3959
    %v4066 = vunpack.c.l.b16 %v3960
    %v4067 = vunpack.c.l.b16 %v3961
    %v4068 = vunpack.c.l.b16 %v3962
    %v4069 = vunpack.c.l.b16 %v3963
    %v4070 = vunpack.c.l.b16 %v3964
    %v4071 = vunpack.c.l.b16 %v3965
    %v4072 = vunpack.c.l.b16 %v3966
    %v4073 = vunpack.c.l.b16 %v3967
    %v4074 = vunpack.c.l.b16 %v3968
    %v4075 = vunpack.c.l.b16 %v3969
    %v4076 = vunpack.c.l.b16 %v3970
    %v4077 = vunpack.c.l.b16 %v3971
    %v4078 = vunpack.c.l.b16 %v3972
    %v4079 = vunpack.c.l.b16 %v3973
    %v4080 = vunpack.c.l.b16 %v3974
    %v4081 = vunpack.c.l.b16 %v3975
    %v4082 = vunpack.c.l.b16 %v3976
    %v4083 = vunpack.c.l.b16 %v3977
    %v4084 = vpack.c.b16 %v4053, %v4052
    %v4085 = vpack.c.b16 %v4055, %v4054
    %v4086 = vpack.c.b16 %v4057, %v4056
    %v4087 = vpack.c.b16 %v4059, %v4058
    %v4088 = vpack.c.b16 %v4061, %v4060
    %v4089 = vpack.c.b16 %v4063, %v4062
    %v4090 = vpack.c.b16 %v4065, %v4064
    %v4091 = vpack.c.b16 %v4067, %v4066
    %v4092 = vpack.c.b16 %v4069, %v4068
    %v4093 = vpack.c.b16 %v4071, %v4070
    %v4094 = vpack.c.b16 %v4073, %v4072
    %v4095 = vpack.c.b16 %v4075, %v4074
    %v4096 = vpack.c.b16 %v4077, %v4076
    %v4097 = vpack.c.b16 %v4079, %v4078
    %v4098 = vpack.c.b16 %v4081, %v4080
    %v4099 = vpack.c.b16 %v4083, %v4082
    %4116 = vmatpush.bf16.msra.mxu0 %v4091
    %4117 = vmatpush.bf16.msra.mxu0 %v4090
    %4118 = vmatpush.bf16.msra.mxu0 %v4089
    %4119 = vmatpush.bf16.msra.mxu0 %v4088
    %4120 = vmatpush.bf16.msra.mxu0 %v4087
    %4121 = vmatpush.bf16.msra.mxu0 %v4086
    %4122 = vmatpush.bf16.msra.mxu0 %v4085
    %4123 = vmatpush.bf16.msra.mxu0 %v4084
    %4124 = vmatmul.bf16.gmra.mxu0 %v3994
    %v4125 = vpop.f32.mrf.mxu0
    %v4126 = vadd.f32 %v3980, %v4125
    %v4127 = vpop.f32.mrf.mxu0
    %v4128 = vadd.f32 %v3980, %v4127
    %4129 = vmatmul.bf16.gmra.mxu0 %v3999
    %v4130 = vpop.f32.mrf.mxu0
    %v4131 = vadd.f32 %v3980, %v4130
    %v4132 = vpop.f32.mrf.mxu0
    %v4133 = vadd.f32 %v3980, %v4132
    %4134 = vmatmul.bf16.gmra.mxu0 %v4003
    %v4135 = vpop.f32.mrf.mxu0
    %v4136 = vadd.f32 %v3980, %v4135
    %v4137 = vpop.f32.mrf.mxu0
    %v4138 = vadd.f32 %v3980, %v4137
    %4139 = vmatmul.bf16.gmra.mxu0 %v4007
    %v4140 = vpop.f32.mrf.mxu0
    %v4141 = vadd.f32 %v3980, %v4140
    %v4142 = vpop.f32.mrf.mxu0
    %v4143 = vadd.f32 %v3980, %v4142
    %4144 = vmatmul.bf16.gmra.mxu0 %v4006
    %v4145 = vpop.f32.mrf.mxu0
    %v4146 = vadd.f32 %v3980, %v4145
    %v4147 = vpop.f32.mrf.mxu0
    %4148 = vdwg.mxu0
    %4149 = vmatpush.bf16.msra.mxu0 %v4099
    %4150 = vmatpush.bf16.msra.mxu0 %v4098
    %4151 = vmatpush.bf16.msra.mxu0 %v4097
    %4152 = vmatpush.bf16.msra.mxu0 %v4096
    %4153 = vmatpush.bf16.msra.mxu0 %v4095
    %4154 = vmatpush.bf16.msra.mxu0 %v4094
    %4155 = vmatpush.bf16.msra.mxu0 %v4093
    %4156 = vmatpush.bf16.msra.mxu0 %v4092
    %4157 = vmatmul.bf16.gmra.mxu0 %v3997
    %v4158 = vpop.f32.mrf.mxu0
    %v4159 = vadd.f32 %v4126, %v4158
    %v4160 = vpop.f32.mrf.mxu0
    %v4161 = vadd.f32 %v4128, %v4160
    %4162 = vmatmul.bf16.gmra.mxu0 %v4001
    %v4163 = vpop.f32.mrf.mxu0
    %v4164 = vadd.f32 %v4131, %v4163
    %v4165 = vpop.f32.mrf.mxu0
    %v4166 = vadd.f32 %v4133, %v4165
    %4167 = vmatmul.bf16.gmra.mxu0 %v4005
    %v4168 = vpop.f32.mrf.mxu0
    %v4169 = vadd.f32 %v4136, %v4168
    %v4170 = vpop.f32.mrf.mxu0
    %v4171 = vadd.f32 %v4138, %v4170
    %4172 = vmatmul.bf16.gmra.mxu0 %v4009
    %v4173 = vpop.f32.mrf.mxu0
    %v4174 = vadd.f32 %v4141, %v4173
    %v4175 = vpop.f32.mrf.mxu0
    %v4176 = vadd.f32 %v4143, %v4175
    %4177 = vmatmul.bf16.gmra.mxu0 %v4008
    %v4178 = vpop.f32.mrf.mxu0
    %v4179 = vadd.f32 %v4146, %v4178
    %v4180 = vpop.f32.mrf.mxu0
    %4181 = vdwg.mxu0
    %v4182 = vmax.f32 %v4159, 0.0
    %v4183 = vmax.f32 %v4161, 0.0
    %v4184 = vmax.f32 %v4164, 0.0
    %v4185 = vmax.f32 %v4166, 0.0
    %v4186 = vmax.f32 %v4169, 0.0
    %v4187 = vmax.f32 %v4171, 0.0
    %v4188 = vmax.f32 %v4174, 0.0
    %v4189 = vmax.f32 %v4176, 0.0
    %v4190 = vmax.f32 %v4179, 0.0
    %v4191 = vsel %vm891, %v4182, 0.0
    %v4192 = vsel %vm891, %v4183, 0.0
    %v4193 = vadd.f32 %v4191, %v4192
    %v4194 = vsel %vm891, %v4184, 0.0
    %v4195 = vadd.f32 %v4193, %v4194
    %v4196 = vsel %vm891, %v4185, 0.0
    %v4197 = vadd.f32 %v4195, %v4196
    %v4198 = vsel %vm891, %v4186, 0.0
    %v4199 = vadd.f32 %v4197, %v4198
    %v4200 = vsel %vm891, %v4187, 0.0
    %v4201 = vadd.f32 %v4199, %v4200
    %v4202 = vsel %vm891, %v4188, 0.0
    %v4203 = vadd.f32 %v4201, %v4202
    %v4204 = vsel %vm891, %v4189, 0.0
    %v4205 = vadd.f32 %v4203, %v4204
    %vm4206 = vcmask 521216
    %v4207 = vsel %vm4206, %v4190, 0.0
    %v4208 = vadd.f32 %v4205, %v4207
    %v4209 = vrot.slane %v4208, 4
    %v4210 = vadd.f32 %v4208, %v4209
    %v4211 = vrot.slane %v4210, 2
    %v4212 = vadd.f32 %v4210, %v4211
    %v4213 = vrot.slane %v4212, 1
    %v4214 = vadd.f32 %v4212, %v4213
    %4216 = vrot.lane.b32.xlu0 %v4214, 96
    %v4217 = vpop.permute.xlu0 %4216
    %v4219 = vadd.f32 %v4214, %v4217
    %v4220 = vmul.f32 %v4219, 0.007142857
    %v4221 = vperm.slane %v4220, 0
    %v4222 = vsub.f32 %v4182, %v4221
    %v4223 = vsub.f32 %v4183, %v4221
    %v4224 = vsub.f32 %v4184, %v4221
    %v4225 = vsub.f32 %v4185, %v4221
    %v4226 = vsub.f32 %v4186, %v4221
    %v4227 = vsub.f32 %v4187, %v4221
    %v4228 = vsub.f32 %v4188, %v4221
    %v4229 = vsub.f32 %v4189, %v4221
    %v4230 = vsub.f32 %v4190, %v4221
    %4232 = vrot.lane.b32.xlu0 %v4221, 32
    %v4233 = vpop.permute.xlu0 %4232
    %v4235 = vsub.f32 %v4182, %v4233
    %v4236 = vsub.f32 %v4183, %v4233
    %v4237 = vsub.f32 %v4184, %v4233
    %v4238 = vsub.f32 %v4185, %v4233
    %v4239 = vsub.f32 %v4186, %v4233
    %v4240 = vsub.f32 %v4187, %v4233
    %v4241 = vsub.f32 %v4188, %v4233
    %v4242 = vsub.f32 %v4189, %v4233
    %v4243 = vsub.f32 %v4190, %v4233
    %v4244 = vmul.f32 %v4222, %v4222
    %v4245 = vmul.f32 %v4223, %v4223
    %v4246 = vmul.f32 %v4224, %v4224
    %v4247 = vmul.f32 %v4225, %v4225
    %v4248 = vmul.f32 %v4226, %v4226
    %v4249 = vmul.f32 %v4227, %v4227
    %v4250 = vmul.f32 %v4228, %v4228
    %v4251 = vmul.f32 %v4229, %v4229
    %v4252 = vmul.f32 %v4230, %v4230
    %v4253 = vsel %vm511, %v4244, 0.0
    %v4254 = vsel %vm511, %v4245, 0.0
    %v4255 = vadd.f32 %v4253, %v4254
    %v4256 = vsel %vm511, %v4246, 0.0
    %v4257 = vadd.f32 %v4255, %v4256
    %v4258 = vsel %vm511, %v4247, 0.0
    %v4259 = vadd.f32 %v4257, %v4258
    %v4260 = vsel %vm511, %v4248, 0.0
    %v4261 = vadd.f32 %v4259, %v4260
    %v4262 = vsel %vm511, %v4249, 0.0
    %v4263 = vadd.f32 %v4261, %v4262
    %v4264 = vsel %vm511, %v4250, 0.0
    %v4265 = vadd.f32 %v4263, %v4264
    %v4266 = vsel %vm511, %v4251, 0.0
    %v4267 = vadd.f32 %v4265, %v4266
    %vm4268 = vcmask 259072
    %v4269 = vsel %vm4268, %v4252, 0.0
    %v4270 = vadd.f32 %v4267, %v4269
    %v4271 = vrot.slane %v4270, 4
    %v4272 = vadd.f32 %v4270, %v4271
    %v4273 = vrot.slane %v4272, 2
    %v4274 = vadd.f32 %v4272, %v4273
    %v4275 = vrot.slane %v4274, 1
    %v4276 = vadd.f32 %v4274, %v4275
    %v4277 = vmul.f32 %v4235, %v4235
    %v4278 = vmul.f32 %v4236, %v4236
    %v4279 = vmul.f32 %v4237, %v4237
    %v4280 = vmul.f32 %v4238, %v4238
    %v4281 = vmul.f32 %v4239, %v4239
    %v4282 = vmul.f32 %v4240, %v4240
    %v4283 = vmul.f32 %v4241, %v4241
    %v4284 = vmul.f32 %v4242, %v4242
    %v4285 = vmul.f32 %v4243, %v4243
    %vm4286 = vcmask 523520
    %v4287 = vsel %vm4286, %v4277, 0.0
    %v4288 = vsel %vm4286, %v4278, 0.0
    %v4289 = vadd.f32 %v4287, %v4288
    %v4290 = vsel %vm4286, %v4279, 0.0
    %v4291 = vadd.f32 %v4289, %v4290
    %v4292 = vsel %vm4286, %v4280, 0.0
    %v4293 = vadd.f32 %v4291, %v4292
    %v4294 = vsel %vm4286, %v4281, 0.0
    %v4295 = vadd.f32 %v4293, %v4294
    %v4296 = vsel %vm4286, %v4282, 0.0
    %v4297 = vadd.f32 %v4295, %v4296
    %v4298 = vsel %vm4286, %v4283, 0.0
    %v4299 = vadd.f32 %v4297, %v4298
    %v4300 = vsel %vm4286, %v4284, 0.0
    %v4301 = vadd.f32 %v4299, %v4300
    %vm4302 = vcmask 521472
    %v4303 = vsel %vm4302, %v4285, 0.0
    %v4304 = vadd.f32 %v4301, %v4303
    %v4305 = vrot.slane %v4304, 4
    %v4306 = vadd.f32 %v4304, %v4305
    %v4307 = vrot.slane %v4306, 2
    %v4308 = vadd.f32 %v4306, %v4307
    %v4309 = vrot.slane %v4308, 1
    %v4310 = vadd.f32 %v4308, %v4309
    %4312 = vrot.lane.b32.xlu0 %v4310, 96
    %v4313 = vpop.permute.xlu0 %4312
    %v4315 = vadd.f32 %v4276, %v4313
    %v4316 = vmul.f32 %v4315, 0.007142857
    %v4317 = vadd.f32 %v4316, 1e-05
    %v4318 = vrsqrt.pop %v4317
    %v4319 = vmul.f32 %v4318, %v4317
    %v4320 = vmul.f32 %v4319, %v4318
    %v4321 = vmul.f32 0.5, %v4320
    %v4322 = vsub.f32 1.5, %v4321
    %v4323 = vmul.f32 %v4318, %v4322
    %vm4324 = vweird.f32 %v4317
    %vm4325 = vweird.f32 %v4318
    %vm4326 = vmor %vm4324, %vm4325
    %v4327 = vsel %vm4326, %v4318, %v4323
    %v4328 = vld [vmem:[%s18] sm:$0x1]
    %v4330 = vperm.slane %v4328, 0
    %v4332 = vmul.f32 %v4330, %v4222
    %v4333 = vmul.f32 %v4330, %v4223
    %v4334 = vmul.f32 %v4330, %v4224
    %v4335 = vmul.f32 %v4330, %v4225
    %v4336 = vmul.f32 %v4330, %v4226
    %v4337 = vmul.f32 %v4330, %v4227
    %v4338 = vmul.f32 %v4330, %v4228
    %v4339 = vmul.f32 %v4330, %v4229
    %v4340 = vmul.f32 %v4330, %v4230
    %v4341 = vperm.slane %v4327, 0
    %v4342 = vmul.f32 %v4332, %v4341
    %v4343 = vmul.f32 %v4333, %v4341
    %v4344 = vmul.f32 %v4334, %v4341
    %v4345 = vmul.f32 %v4335, %v4341
    %v4346 = vmul.f32 %v4336, %v4341
    %v4347 = vmul.f32 %v4337, %v4341
    %v4348 = vmul.f32 %v4338, %v4341
    %v4349 = vmul.f32 %v4339, %v4341
    %v4350 = vmul.f32 %v4340, %v4341
    %v4351 = vld [vmem:[%s19] sm:$0x1]
    %v4353 = vperm.slane %v4351, 0
    %v4355 = vadd.f32 %v4342, %v4353
    %v4356 = vadd.f32 %v4343, %v4353
    %v4357 = vadd.f32 %v4344, %v4353
    %v4358 = vadd.f32 %v4345, %v4353
    %v4359 = vadd.f32 %v4346, %v4353
    %v4360 = vadd.f32 %v4347, %v4353
    %v4361 = vadd.f32 %v4348, %v4353
    %v4362 = vadd.f32 %v4349, %v4353
    %v4363 = vadd.f32 %v4350, %v4353
    %v4364 = vpack.c.bf16 %v4355, %v4355
    %v4365 = vpack.c.bf16 %v4356, %v4356
    %v4366 = vpack.c.bf16 %v4357, %v4357
    %v4367 = vpack.c.bf16 %v4358, %v4358
    %v4368 = vpack.c.bf16 %v4359, %v4359
    %v4369 = vpack.c.bf16 %v4360, %v4360
    %v4370 = vpack.c.bf16 %v4361, %v4361
    %v4371 = vpack.c.bf16 %v4362, %v4362
    %v4372 = vpack.c.bf16 %v4363, %v4363
    %4382 = vrot.lane.b32.xlu0 %v4235, 96
    %v4383 = vpop.permute.xlu0 %4382
    %4384 = vrot.lane.b32.xlu0 %v4236, 96
    %v4385 = vpop.permute.xlu0 %4384
    %4386 = vrot.lane.b32.xlu0 %v4237, 96
    %v4387 = vpop.permute.xlu0 %4386
    %4388 = vrot.lane.b32.xlu0 %v4238, 96
    %v4389 = vpop.permute.xlu0 %4388
    %4390 = vrot.lane.b32.xlu0 %v4239, 96
    %v4391 = vpop.permute.xlu0 %4390
    %4392 = vrot.lane.b32.xlu0 %v4240, 96
    %v4393 = vpop.permute.xlu0 %4392
    %4394 = vrot.lane.b32.xlu0 %v4241, 96
    %v4395 = vpop.permute.xlu0 %4394
    %4396 = vrot.lane.b32.xlu0 %v4242, 96
    %v4397 = vpop.permute.xlu0 %4396
    %4398 = vrot.lane.b32.xlu0 %v4243, 96
    %v4399 = vpop.permute.xlu0 %4398
    %v4409 = vmul.f32 %v4330, %v4383
    %v4410 = vmul.f32 %v4330, %v4385
    %v4411 = vmul.f32 %v4330, %v4387
    %v4412 = vmul.f32 %v4330, %v4389
    %v4413 = vmul.f32 %v4330, %v4391
    %v4414 = vmul.f32 %v4330, %v4393
    %v4415 = vmul.f32 %v4330, %v4395
    %v4416 = vmul.f32 %v4330, %v4397
    %v4417 = vmul.f32 %v4330, %v4399
    %v4418 = vmul.f32 %v4409, %v4341
    %v4419 = vmul.f32 %v4410, %v4341
    %v4420 = vmul.f32 %v4411, %v4341
    %v4421 = vmul.f32 %v4412, %v4341
    %v4422 = vmul.f32 %v4413, %v4341
    %v4423 = vmul.f32 %v4414, %v4341
    %v4424 = vmul.f32 %v4415, %v4341
    %v4425 = vmul.f32 %v4416, %v4341
    %v4426 = vmul.f32 %v4417, %v4341
    %v4427 = vadd.f32 %v4418, %v4353
    %v4428 = vadd.f32 %v4419, %v4353
    %v4429 = vadd.f32 %v4420, %v4353
    %v4430 = vadd.f32 %v4421, %v4353
    %v4431 = vadd.f32 %v4422, %v4353
    %v4432 = vadd.f32 %v4423, %v4353
    %v4433 = vadd.f32 %v4424, %v4353
    %v4434 = vadd.f32 %v4425, %v4353
    %v4435 = vadd.f32 %v4426, %v4353
    %v4436 = vpack.c.bf16 %v4427, %v4427
    %v4437 = vpack.c.bf16 %v4428, %v4428
    %v4438 = vpack.c.bf16 %v4429, %v4429
    %v4439 = vpack.c.bf16 %v4430, %v4430
    %v4440 = vpack.c.bf16 %v4431, %v4431
    %v4441 = vpack.c.bf16 %v4432, %v4432
    %v4442 = vpack.c.bf16 %v4433, %v4433
    %v4443 = vpack.c.bf16 %v4434, %v4434
    %v4444 = vpack.c.bf16 %v4435, %v4435
    %v4454 = vunpack.c.l.b16 %v4364
    %v4455 = vunpack.c.l.b16 %v4365
    %v4456 = vunpack.c.l.b16 %v4366
    %v4457 = vunpack.c.l.b16 %v4367
    %v4458 = vunpack.c.l.b16 %v4368
    %v4459 = vunpack.c.l.b16 %v4369
    %v4460 = vunpack.c.l.b16 %v4370
    %v4461 = vunpack.c.l.b16 %v4371
    %v4462 = vunpack.c.l.b16 %v4372
    %v4463 = vpack.c.b16 %v4455, %v4454
    %v4464 = vpack.c.b16 %v4457, %v4456
    %v4465 = vpack.c.b16 %v4459, %v4458
    %v4466 = vpack.c.b16 %v4461, %v4460
    %v4467 = vpack.c.b16 %v4462, %v4462
    %v4477 = vunpack.c.l.b16 %v4436
    %v4478 = vunpack.c.l.b16 %v4437
    %v4479 = vunpack.c.l.b16 %v4438
    %v4480 = vunpack.c.l.b16 %v4439
    %v4481 = vunpack.c.l.b16 %v4440
    %v4482 = vunpack.c.l.b16 %v4441
    %v4483 = vunpack.c.l.b16 %v4442
    %v4484 = vunpack.c.l.b16 %v4443
    %v4485 = vunpack.c.l.b16 %v4444
    %v4486 = vpack.c.b16 %v4478, %v4477
    %v4487 = vpack.c.b16 %v4480, %v4479
    %v4488 = vpack.c.b16 %v4482, %v4481
    %v4489 = vpack.c.b16 %v4484, %v4483
    %v4490 = vpack.c.b16 %v4485, %v4485
    %v4491 = vrot.slane %v4486, 5
    %v4492 = vrot.slane %v4487, 5
    %v4493 = vsel %vm391, %v4491, %v4492
    %v4494 = vrot.slane %v4488, 5
    %v4495 = vsel %vm391, %v4492, %v4494
    %v4496 = vrot.slane %v4489, 5
    %v4497 = vsel %vm391, %v4494, %v4496
    %v4498 = vrot.slane %v4490, 5
    %v4499 = vsel %vm391, %v4496, %v4498
    %v4502 = vsel %vm401, %v4467, %v4491
    %v4503 = vld [vmem:[%s20] sm:$0xf]
    %v4504 = vld [vmem:[%s20 + $0x4] sm:$0xf]
    %v4505 = vld [vmem:[%s20 + $0x8] sm:$0xf]
    %v4506 = vld [vmem:[%s20 + $0xc] sm:$0xf]
    %v4507 = vld [vmem:[%s21] sm:$0x1]
    %v4509 = vperm.slane %v4507, 0
    %v4515 = vunpack.c.l.b16 %v4503
    %v4516 = vunpack.c.l.b16 %v4504
    %v4517 = vunpack.c.l.b16 %v4505
    %v4518 = vunpack.c.l.b16 %v4506
    %v4519 = vpack.c.b16 %v4516, %v4515
    %v4520 = vpack.c.b16 %v4518, %v4517
    %v4524 = vsel %vm511, %v4463, 0
    %v4527 = vsel %vm511, %v4464, 0
    %v4530 = vsel %vm511, %v4465, 0
    %v4533 = vsel %vm511, %v4466, 0
    %v4535 = vsel %vm511, %v4502, 0
    %v4538 = vsel %vm511, %v4493, 0
    %v4541 = vsel %vm511, %v4495, 0
    %v4544 = vsel %vm511, %v4497, 0
    %v4547 = vsel %vm511, %v4499, 0
    %4549 = vmatpush.bf16.msra.mxu0 0
    %4550 = vmatpush.bf16.msra.mxu0 0
    %4551 = vmatpush.bf16.msra.mxu0 0
    %4552 = vmatpush.bf16.msra.mxu0 0
    %4553 = vmatpush.bf16.msra.mxu0 0
    %4554 = vmatpush.bf16.msra.mxu0 0
    %4555 = vmatpush.bf16.msra.mxu0 %v4520
    %4556 = vmatpush.bf16.msra.mxu0 %v4519
    %4557 = vmatmul.bf16.gmra.mxu0 %v4524
    %v4558 = vpop.f32.mrf.mxu0
    %v4559 = vadd.f32 %v4509, %v4558
    %v4560 = vpop.f32.mrf.mxu0
    %v4561 = vadd.f32 %v4509, %v4560
    %4562 = vmatmul.bf16.gmra.mxu0 %v4527
    %v4563 = vpop.f32.mrf.mxu0
    %v4564 = vadd.f32 %v4509, %v4563
    %v4565 = vpop.f32.mrf.mxu0
    %v4566 = vadd.f32 %v4509, %v4565
    %4567 = vmatmul.bf16.gmra.mxu0 %v4530
    %v4568 = vpop.f32.mrf.mxu0
    %v4569 = vadd.f32 %v4509, %v4568
    %v4570 = vpop.f32.mrf.mxu0
    %v4571 = vadd.f32 %v4509, %v4570
    %4572 = vmatmul.bf16.gmra.mxu0 %v4533
    %v4573 = vpop.f32.mrf.mxu0
    %v4574 = vadd.f32 %v4509, %v4573
    %v4575 = vpop.f32.mrf.mxu0
    %v4576 = vadd.f32 %v4509, %v4575
    %4577 = vmatmul.bf16.gmra.mxu0 %v4535
    %v4578 = vpop.f32.mrf.mxu0
    %v4579 = vadd.f32 %v4509, %v4578
    %v4580 = vpop.f32.mrf.mxu0
    %v4581 = vadd.f32 %v4509, %v4580
    %4582 = vmatmul.bf16.gmra.mxu0 %v4538
    %v4583 = vpop.f32.mrf.mxu0
    %v4584 = vadd.f32 %v4509, %v4583
    %v4585 = vpop.f32.mrf.mxu0
    %v4586 = vadd.f32 %v4509, %v4585
    %4587 = vmatmul.bf16.gmra.mxu0 %v4541
    %v4588 = vpop.f32.mrf.mxu0
    %v4589 = vadd.f32 %v4509, %v4588
    %v4590 = vpop.f32.mrf.mxu0
    %v4591 = vadd.f32 %v4509, %v4590
    %4592 = vmatmul.bf16.gmra.mxu0 %v4544
    %v4593 = vpop.f32.mrf.mxu0
    %v4594 = vadd.f32 %v4509, %v4593
    %v4595 = vpop.f32.mrf.mxu0
    %v4596 = vadd.f32 %v4509, %v4595
    %4597 = vmatmul.bf16.gmra.mxu0 %v4547
    %v4598 = vpop.f32.mrf.mxu0
    %v4599 = vadd.f32 %v4509, %v4598
    %v4600 = vpop.f32.mrf.mxu0
    %v4601 = vadd.f32 %v4509, %v4600
    %4602 = vdwg.mxu0
    %4603 = vst.msk [vmem:[%s23] sm:$0xff] %vm280, %v4559
    %4604 = vst.msk [vmem:[%s23 + $0x8] sm:$0xff] %vm280, %v4561
    %4605 = vst.msk [vmem:[%s23 + $0x10] sm:$0xff] %vm280, %v4564
    %4606 = vst.msk [vmem:[%s23 + $0x18] sm:$0xff] %vm280, %v4566
    %4607 = vst.msk [vmem:[%s23 + $0x20] sm:$0xff] %vm280, %v4569
    %4608 = vst.msk [vmem:[%s23 + $0x28] sm:$0xff] %vm280, %v4571
    %4609 = vst.msk [vmem:[%s23 + $0x30] sm:$0xff] %vm280, %v4574
    %4610 = vst.msk [vmem:[%s23 + $0x38] sm:$0xff] %vm280, %v4576
    %4611 = vst.msk [vmem:[%s23 + $0x40] sm:$0xff] %vm280, %v4579
    %4612 = vst.msk [vmem:[%s23 + $0x48] sm:$0xff] %vm280, %v4581
    %4613 = vst.msk [vmem:[%s23 + $0x50] sm:$0xff] %vm280, %v4584
    %4614 = vst.msk [vmem:[%s23 + $0x58] sm:$0xff] %vm280, %v4586
    %4615 = vst.msk [vmem:[%s23 + $0x60] sm:$0xff] %vm280, %v4589
    %4616 = vst.msk [vmem:[%s23 + $0x68] sm:$0xff] %vm280, %v4591
    %4617 = vst.msk [vmem:[%s23 + $0x70] sm:$0xff] %vm280, %v4594
    %4618 = vst.msk [vmem:[%s23 + $0x78] sm:$0xff] %vm280, %v4596
    %4619 = vst.msk [vmem:[%s23 + $0x80] sm:$0xff] %vm280, %v4599
    %vm4620 = vcmask 60416
    %4621 = vst.msk [vmem:[%s23 + $0x88] sm:$0xf] %vm4620, %v4601
    // Predicated region
    $region98: #{vae_forward.1} parent=1 // pred_check
      _
    $region99: #{vae_forward.1} parent=1 // pred_check_branch
      %4623 = sbr.rel (0) target = $region101
    $region100: #{vae_forward.1} parent=1 // pred_region
      _
    $region101: #{vae_forward.1} parent=1 // pred_fallthru
      _
    // Predicated region
    $region102: #{vae_forward.1} parent=1 // pred_check
      _
    $region103: #{vae_forward.1} parent=1 // pred_check_branch
      %4625 = sbr.rel (0) target = $region105
    $region104: #{vae_forward.1} parent=1 // pred_region
      _
    $region105: #{vae_forward.1} parent=1 // pred_fallthru
      _
    // Predicated region
    $region106: #{vae_forward.1} parent=1 // pred_check
      _
    $region107: #{vae_forward.1} parent=1 // pred_check_branch
      %4627 = sbr.rel (0) target = $region109
    $region108: #{vae_forward.1} parent=1 // pred_region
      _
    $region109: #{vae_forward.1} parent=1 // pred_fallthru
      _
    // Predicated region
    $region110: #{vae_forward.1} parent=1 // pred_check
      _
    $region111: #{vae_forward.1} parent=1 // pred_check_branch
      %4629 = sbr.rel (0) target = $region113
    $region112: #{vae_forward.1} parent=1 // pred_region
      _
    $region113: #{vae_forward.1} parent=1 // pred_fallthru
      _
    %4630 = vsyncpa [#allocation3], 1
    %4631 = vsyncpa [#allocation5], 1

</llo_original>
